<compile_context>
chip_gen: v7x
topology: tpu7x:2x2x1
jax: 0.10.0
libtpu: 0.0.40
codegen_flags: <defaults>
</compile_context>

<pallas_src>
import functools

import jax
import jax.numpy as jnp
import numpy as np
from jax import lax
from jax.experimental import pallas as pl
from jax.experimental.pallas import tpu as pltpu


# ----------------------------------------------------------------------------
# Fused kernel: streaming layer-sum + FRA2UTT_new + AttentionNew tail
# ----------------------------------------------------------------------------
def _adapter_kernel(idx_ref,                       # SMEM scalar prefetch: layer ids
                    hs_ref,                        # (1, B*S, D) bf16 — one layer / step
                    proj_w_ref, proj_b_ref, ctx_ref,
                    w1_ref, b1_ref, w2_ref, b2_ref,
                    wam1_ref, bam1_ref, wam2_ref, bam2_ref,
                    wfa_ref, bfa_ref, we_ref, be_ref, wv_ref, bv_ref,
                    wev_ref, bev_ref, wae_ref, bae_ref,
                    o_ref,                         # (B, PACKED) f32 lane-dense output
                    xsum_ref,                      # VMEM scratch (B*S, D) f32 accumulator
                    *, seq_len, scale, h2):
    f32, bf16 = jnp.float32, jnp.bfloat16
    l = pl.program_id(0)

    # ---- streaming layer sum (one layer per grid step, f32 accumulation) ----
    @pl.when(l == 0)
    def _():
        xsum_ref[...] = jnp.zeros_like(xsum_ref)

    xsum_ref[...] += hs_ref[0].astype(f32)

    # ---- last layer: fra2utt pooling + full classification tail ----
    @pl.when(l == pl.num_programs(0) - 1)
    def _():
        x = xsum_ref[...]                          # (BS, D) f32 summed embeddings
        x_b = x.astype(bf16)

        # proj = tanh(x @ W + b); B*S rows fill the MXU M-dimension.
        proj = jnp.dot(x_b, proj_w_ref[...], preferred_element_type=f32) + proj_b_ref[...]
        proj = jnp.tanh(proj)                      # (BS, A) f32

        # score[b, r] = ctx[b] . proj[r]  — lane-dense (B, BS) layout (1 vreg at B=8).
        score = lax.dot_general(ctx_ref[...], proj.astype(bf16),
                                (((1,), (1,)), ((), ())),
                                preferred_element_type=f32)          # (B, BS)
        B, BS = score.shape
        brow = lax.broadcasted_iota(jnp.int32, (B, BS), 0)
        rcol = lax.broadcasted_iota(jnp.int32, (B, BS), 1)
        # column r belongs to batch row b iff b*S <= r < (b+1)*S (batch-major flatten)
        mask = (rcol >= brow * seq_len) & (rcol < (brow + 1) * seq_len)
        score = jnp.where(mask, scale * score, jnp.float32(-1e30))

        # softmax over the sequence (lane) axis, per batch row.
        score = score - jnp.max(score, axis=-1, keepdims=True)
        e = jnp.exp(score)
        att = e * pl.reciprocal(jnp.sum(e, axis=-1, keepdims=True), approx=True)

        # pooled[b, :] = sum_r att[b, r] * x[r, :]  (single bf16 MXU pass)
        pooled = jnp.dot(att.astype(bf16), x_b, preferred_element_type=f32)   # (B, D)
        feat_b = pooled.astype(bf16)

        # ---- modality MLPs: layer-1 concatenated, layer-2 block-diagonal ----
        h1_all = jnp.dot(feat_b, w1_ref[...], preferred_element_type=f32) + b1_ref[...]
        h1_all = jnp.maximum(h1_all, 0.0)                                     # (B, 3*H1)
        h2_all = jnp.dot(h1_all.astype(bf16), w2_ref[...],
                         preferred_element_type=f32) + b2_ref[...]
        h2_all = jnp.maximum(h2_all, 0.0)                                     # (B, 3*H2)
        a_h = h2_all[:, 0 * h2:1 * h2]
        t_h = h2_all[:, 1 * h2:2 * h2]
        v_h = h2_all[:, 2 * h2:3 * h2]

        # attention MLP + fc_att (raw logits — no softmax, as in the reference);
        # note h2_all == concat([a_h, t_h, v_h], axis=1) already.
        z = jnp.dot(h2_all.astype(bf16), wam1_ref[...],
                    preferred_element_type=f32) + bam1_ref[...]
        z = jnp.maximum(z, 0.0)
        z = jnp.dot(z.astype(bf16), wam2_ref[...],
                    preferred_element_type=f32) + bam2_ref[...]
        z = jnp.maximum(z, 0.0)                                               # (B, H2)
        attw = jnp.dot(z, wfa_ref[...], preferred_element_type=f32) + bfa_ref[...]  # (B, 3)

        # fused_feat = stack([a,t,v], dim=2) @ att.unsqueeze(2)
        fused = a_h * attw[:, 0:1] + t_h * attw[:, 1:2] + v_h * attw[:, 2:3]  # (B, H2)

        # output heads (tiny matmuls; keep in f32)
        emos = jnp.dot(fused, we_ref[...], preferred_element_type=f32) + be_ref[...]
        vals_e = jnp.tanh(jnp.dot(emos, wev_ref[...], preferred_element_type=f32)
                          + bev_ref[...])
        vals_v = jnp.dot(fused, wv_ref[...], preferred_element_type=f32) + bv_ref[...]
        vt = jnp.concatenate([vals_e, vals_v], axis=1)                        # (B, 2)
        vals = jnp.dot(vt, wae_ref[...], preferred_element_type=f32) + bae_ref[...]

        # Lane-dense packed output slab: [fused | emos | vals | zero-pad] -> (B, PACKED)
        parts = [fused, emos, vals]
        pad_w = o_ref.shape[1] - (fused.shape[1] + emos.shape[1] + vals.shape[1])
        if pad_w:
            parts.append(jnp.zeros((fused.shape[0], pad_w), f32))
        o_ref[...] = jnp.concatenate(parts, axis=1)


def fused_adapter_forward(layer_idx, hs_bf16, kp, *, seq_len, softmax_scale=0.3):
    """layer_idx: (NL,) int32 selected encoder layers (scalar prefetch).
       hs_bf16  : (L, B*S, D) bf16 full encoder hidden-state stack (stays in HBM;
                  only the NL selected layers are DMA'd, one per grid step)."""
    NL = layer_idx.shape[0]
    L, BS, D = hs_bf16.shape
    B = kp["ctx"].shape[0]
    h2 = kp["wfa"].shape[0]
    e_dim = kp["we"].shape[1]
    packed_width = 128 * pl.cdiv(h2 + e_dim + 1, 128)

    weights = [kp["proj_w"], kp["proj_b"], kp["ctx"],
               kp["w1"], kp["b1"], kp["w2"], kp["b2"],
               kp["wam1"], kp["bam1"], kp["wam2"], kp["bam2"],
               kp["wfa"], kp["bfa"], kp["we"], kp["be"], kp["wv"], kp["bv"],
               kp["wev"], kp["bev"], kp["wae"], kp["bae"]]

    def resident(shape):
        nd = len(shape)
        return pl.BlockSpec(shape, lambda l, idx, _nd=nd: (0,) * _nd)

    grid_spec = pltpu.PrefetchScalarGridSpec(
        num_scalar_prefetch=1,
        grid=(NL,),
        in_specs=[pl.BlockSpec((1, BS, D), lambda l, idx: (idx[l], 0, 0))]
                + [resident(w.shape) for w in weights],
        out_specs=pl.BlockSpec((B, packed_width), lambda l, idx: (0, 0)),
        scratch_shapes=[pltpu.VMEM((BS, D), jnp.float32)],
    )
    kernel = functools.partial(_adapter_kernel, seq_len=seq_len,
                               scale=softmax_scale, h2=h2)
    return pl.pallas_call(
        kernel,
        grid_spec=grid_spec,
        out_shape=jax.ShapeDtypeStruct((B, packed_width), jnp.float32),
        compiler_params=pltpu.CompilerParams(
            dimension_semantics=("arbitrary",),
            vmem_limit_bytes=48 << 20),   # headroom for real BERT sizes (D=768, S=512)
    )(layer_idx, hs_bf16, *weights)


# ----------------------------------------------------------------------------
# Parameters (deterministic init; shapes follow the PyTorch __init__)
# ----------------------------------------------------------------------------
def init_linear(key, in_dim, out_dim):
    kw, kb = jax.random.split(key)
    bound = 1.0 / (in_dim ** 0.5)
    w = jax.random.uniform(kw, (in_dim, out_dim), jnp.float32, -bound, bound)
    b = jax.random.uniform(kb, (1, out_dim), jnp.float32, -bound, bound)
    return w, b


def init_attention_params(key, feat_dim, output_dim1=6, output_dim2=1,
                          atsize=256, layers=(256, 128)):
    keys = jax.random.split(key, 11)
    p = {}
    std = (2.0 / (8 + atsize)) ** 0.5                      # xavier_normal_ for (8, atsize)
    p["ctx"] = std * jax.random.normal(keys[0], (8, atsize), jnp.float32)
    p["proj_w"], p["proj_b"] = init_linear(keys[1], feat_dim, atsize)

    def mlp(kk, in_dim):
        ws, d = [], in_dim
        for j, h in enumerate(layers):
            ws.append(init_linear(jax.random.fold_in(kk, j), d, h))
            d = h
        return ws

    p["audio_mlp"] = mlp(keys[2], feat_dim)
    p["text_mlp"] = mlp(keys[3], feat_dim)
    p["video_mlp"] = mlp(keys[4], feat_dim)
    p["att_mlp"] = mlp(keys[5], layers[-1] * 3)
    p["fc_att"] = init_linear(keys[6], layers[-1], 3)
    p["fc_out_e"] = init_linear(keys[7], layers[-1], output_dim1)
    p["fc_out_v"] = init_linear(keys[8], layers[-1], output_dim2)
    p["fc_out_ev"] = init_linear(keys[9], output_dim1, output_dim2)
    p["fc_out_att_ev"] = init_linear(keys[10], 2, 1)
    return p


def pack_attention_params(p):
    """Pre-pack parameters into the kernel-ready layout (once, off the hot path)."""
    bf16 = jnp.bfloat16
    kp = {}
    kp["proj_w"] = p["proj_w"].astype(bf16)                 # (D, A)
    kp["proj_b"] = p["proj_b"]                              # (1, A) f32
    kp["ctx"] = p["ctx"].astype(bf16)                       # (8, A) — un-transposed

    (wa1, ba1), (wa2, ba2) = p["audio_mlp"]
    (wt1, bt1), (wt2, bt2) = p["text_mlp"]
    (wv1, bv1), (wv2, bv2) = p["video_mlp"]
    kp["w1"] = jnp.concatenate([wa1, wt1, wv1], axis=1).astype(bf16)   # (D, 3*H1)
    kp["b1"] = jnp.concatenate([ba1, bt1, bv1], axis=1)                # (1, 3*H1)
    H1, H2 = wa2.shape
    w2_bd = jnp.zeros((3 * H1, 3 * H2), jnp.float32)                   # block-diagonal layer-2
    w2_bd = (w2_bd.at[0 * H1:1 * H1, 0 * H2:1 * H2].set(wa2)
                  .at[1 * H1:2 * H1, 1 * H2:2 * H2].set(wt2)
                  .at[2 * H1:3 * H1, 2 * H2:3 * H2].set(wv2))
    kp["w2"] = w2_bd.astype(bf16)                                      # (3*H1, 3*H2)
    kp["b2"] = jnp.concatenate([ba2, bt2, bv2], axis=1)                # (1, 3*H2)

    (wm1, bm1), (wm2, bm2) = p["att_mlp"]
    kp["wam1"], kp["bam1"] = wm1.astype(bf16), bm1
    kp["wam2"], kp["bam2"] = wm2.astype(bf16), bm2

    kp["wfa"], kp["bfa"] = p["fc_att"]
    kp["we"], kp["be"] = p["fc_out_e"]
    kp["wv"], kp["bv"] = p["fc_out_v"]
    kp["wev"], kp["bev"] = p["fc_out_ev"]
    kp["wae"], kp["bae"] = p["fc_out_att_ev"]
    return kp


# ----------------------------------------------------------------------------
# Forward pass
# ----------------------------------------------------------------------------
def adapter_classification_forward(kp, hidden_states, layer_ids=(-5, -4, -3, -2),
                                   softmax_scale=0.3):
    # TODO(synk): the pretrained BertAdapterModel encoder is not implementable here;
    # `hidden_states` (L, B, S, D) stands in for encoder(...).hidden_states.
    L, B, S, D = hidden_states.shape
    assert B == 8, "FRA2UTT_new context vector is Parameter(8, atsize): batch must be 8"
    layer_idx = jnp.array([(L + i) % L for i in layer_ids], dtype=jnp.int32)
    # bf16 + batch-major flatten of (B, S) into the MXU M-dimension (free reshape);
    # the layer selection / sum happens inside the kernel via scalar-prefetch DMA.
    hs_bf16 = hidden_states.astype(jnp.bfloat16).reshape(L, B * S, D)
    packed = fused_adapter_forward(layer_idx, hs_bf16, kp,
                                   seq_len=S, softmax_scale=softmax_scale)
    h2 = kp["wfa"].shape[0]
    e_dim = kp["we"].shape[1]
    fused_feat = packed[:, :h2]
    emos_out = packed[:, h2:h2 + e_dim]
    vals_out = packed[:, h2 + e_dim:h2 + e_dim + 1]
    return fused_feat, emos_out, vals_out


# ----------------------------------------------------------------------------
# Pure-JAX reference (f32) for a tolerance check against the kernel
# ----------------------------------------------------------------------------
def reference_forward(p, hidden_states, layer_ids=(-5, -4, -3, -2), softmax_scale=0.3):
    L, B, S, D = hidden_states.shape
    idx = [(L + i) % L for i in layer_ids]
    x = sum(hidden_states[i] for i in idx)                     # (B, S, D)
    proj = jnp.tanh(x @ p["proj_w"] + p["proj_b"])             # (B, S, A)
    score = jnp.einsum("bsa,ba->bs", proj, p["ctx"])[..., None]
    att = jax.nn.softmax(softmax_scale * score, axis=1)
    pooled = jnp.sum(x * att, axis=1)                          # (B, D)

    def mlp(xx, ws):
        for (w, b) in ws:
            xx = jnp.maximum(xx @ w + b, 0.0)
        return xx

    a_h = mlp(pooled, p["audio_mlp"])
    t_h = mlp(pooled, p["text_mlp"])
    v_h = mlp(pooled, p["video_mlp"])
    mh1 = jnp.concatenate([a_h, t_h, v_h], axis=1)
    z = mlp(mh1, p["att_mlp"])
    attw = z @ p["fc_att"][0] + p["fc_att"][1]
    fused = a_h * attw[:, 0:1] + t_h * attw[:, 1:2] + v_h * attw[:, 2:3]
    emos = fused @ p["fc_out_e"][0] + p["fc_out_e"][1]
    ve = jnp.tanh(emos @ p["fc_out_ev"][0] + p["fc_out_ev"][1])
    vv = fused @ p["fc_out_v"][0] + p["fc_out_v"][1]
    vals = jnp.concatenate([ve, vv], axis=1) @ p["fc_out_att_ev"][0] + p["fc_out_att_ev"][1]
    return fused, emos, vals


# ----------------------------------------------------------------------------
if __name__ == "__main__":
    key = jax.random.PRNGKey(0)
    # B must be 8 (context-vector batch); B*S = 128 fills the MXU M-dimension.
    # Small D used in place of 768 for speed.
    B, S, D, L, V = 8, 16, 32, 7, 100
    k_tok, k_emb, k_par = jax.random.split(key, 3)

    enc_inputs = jax.random.randint(k_tok, (B, S), 0, V)
    attention_mask = jnp.ones((B, S), jnp.int32)     # unused by synthetic encoder
    token_type_ids = jnp.zeros((B, S), jnp.int32)    # unused by synthetic encoder

    # Synthetic deterministic "encoder" (plain-JAX glue): embedding lookup + per-layer transform.
    emb_table = 0.1 * jax.random.normal(k_emb, (V, D), jnp.float32)
    emb = emb_table[enc_inputs]                                                # (B, S, D)
    hidden_states = jnp.stack([jnp.tanh(emb * (0.5 + 0.1 * l)) for l in range(L)])  # (L,B,S,D)

    params = init_attention_params(k_par, D)
    kp = pack_attention_params(params)

    fwd = jax.jit(adapter_classification_forward)
    fused_feat, emos_out, vals_out = fwd(kp, hidden_states)
    jax.block_until_ready((fused_feat, emos_out, vals_out))

    assert fused_feat.shape == (B, 128)
    assert emos_out.shape == (B, 6)
    assert vals_out.shape == (B, 1)

    # Tolerance check vs. pure-JAX f32 reference (same bf16-quantized hidden states
    # fed to both to isolate in-kernel bf16 / approx-reciprocal effects).
    hs_q = hidden_states.astype(jnp.bfloat16).astype(jnp.float32)
    ref_fused, ref_emos, ref_vals = reference_forward(params, hs_q)
    np.testing.assert_allclose(np.asarray(fused_feat), np.asarray(ref_fused),
                               rtol=0.05, atol=0.02)
    np.testing.assert_allclose(np.asarray(emos_out), np.asarray(ref_emos),
                               rtol=0.05, atol=0.02)
    np.testing.assert_allclose(np.asarray(vals_out), np.asarray(ref_vals),
                               rtol=0.05, atol=0.02)

    print("KERNEL_OK")
</pallas_src>

<mosaic_0001>
module attributes {stable_mosaic.version = 11 : i64} {
  func.func @_adapter_kernel(%arg0: i32, %arg1: memref<4xi32, #tpu.memory_space<smem>>, %arg2: memref<1x128x32xbf16, #tpu.memory_space<vmem>>, %arg3: memref<32x256xbf16, #tpu.memory_space<vmem>>, %arg4: memref<1x256xf32, #tpu.memory_space<vmem>>, %arg5: memref<8x256xbf16, #tpu.memory_space<vmem>>, %arg6: memref<32x768xbf16, #tpu.memory_space<vmem>>, %arg7: memref<1x768xf32, #tpu.memory_space<vmem>>, %arg8: memref<768x384xbf16, #tpu.memory_space<vmem>>, %arg9: memref<1x384xf32, #tpu.memory_space<vmem>>, %arg10: memref<384x256xbf16, #tpu.memory_space<vmem>>, %arg11: memref<1x256xf32, #tpu.memory_space<vmem>>, %arg12: memref<256x128xbf16, #tpu.memory_space<vmem>>, %arg13: memref<1x128xf32, #tpu.memory_space<vmem>>, %arg14: memref<128x3xf32, #tpu.memory_space<vmem>>, %arg15: memref<1x3xf32, #tpu.memory_space<vmem>>, %arg16: memref<128x6xf32, #tpu.memory_space<vmem>>, %arg17: memref<1x6xf32, #tpu.memory_space<vmem>>, %arg18: memref<128x1xf32, #tpu.memory_space<vmem>>, %arg19: memref<1x1xf32, #tpu.memory_space<vmem>>, %arg20: memref<6x1xf32, #tpu.memory_space<vmem>>, %arg21: memref<1x1xf32, #tpu.memory_space<vmem>>, %arg22: memref<2x1xf32, #tpu.memory_space<vmem>>, %arg23: memref<1x1xf32, #tpu.memory_space<vmem>>, %arg24: memref<8x256xf32, #tpu.memory_space<vmem>>, %arg25: memref<128x32xf32, #tpu.memory_space<vmem>>) attributes {dimension_semantics = [#tpu.dimension_semantics<arbitrary>], iteration_bounds = array<i64: 4>, scalar_prefetch = 1 : i64, scratch_operands = 1 : i64, tpu.core_type = #tpu.core_type<tc>, window_params = [{transform_indices = @transform_0, window_bounds = array<i64: 1, 128, 32>}, {pipeline_mode = #tpu.pipeline_mode<synchronous>, transform_indices = @transform_1, window_bounds = array<i64: 32, 256>}, {pipeline_mode = #tpu.pipeline_mode<synchronous>, transform_indices = @transform_2, window_bounds = array<i64: 1, 256>}, {pipeline_mode = #tpu.pipeline_mode<synchronous>, transform_indices = @transform_3, window_bounds = array<i64: 8, 256>}, {pipeline_mode = #tpu.pipeline_mode<synchronous>, transform_indices = @transform_4, window_bounds = array<i64: 32, 768>}, {pipeline_mode = #tpu.pipeline_mode<synchronous>, transform_indices = @transform_5, window_bounds = array<i64: 1, 768>}, {pipeline_mode = #tpu.pipeline_mode<synchronous>, transform_indices = @transform_6, window_bounds = array<i64: 768, 384>}, {pipeline_mode = #tpu.pipeline_mode<synchronous>, transform_indices = @transform_7, window_bounds = array<i64: 1, 384>}, {pipeline_mode = #tpu.pipeline_mode<synchronous>, transform_indices = @transform_8, window_bounds = array<i64: 384, 256>}, {pipeline_mode = #tpu.pipeline_mode<synchronous>, transform_indices = @transform_9, window_bounds = array<i64: 1, 256>}, {pipeline_mode = #tpu.pipeline_mode<synchronous>, transform_indices = @transform_10, window_bounds = array<i64: 256, 128>}, {pipeline_mode = #tpu.pipeline_mode<synchronous>, transform_indices = @transform_11, window_bounds = array<i64: 1, 128>}, {pipeline_mode = #tpu.pipeline_mode<synchronous>, transform_indices = @transform_12, window_bounds = array<i64: 128, 3>}, {pipeline_mode = #tpu.pipeline_mode<synchronous>, transform_indices = @transform_13, window_bounds = array<i64: 1, 3>}, {pipeline_mode = #tpu.pipeline_mode<synchronous>, transform_indices = @transform_14, window_bounds = array<i64: 128, 6>}, {pipeline_mode = #tpu.pipeline_mode<synchronous>, transform_indices = @transform_15, window_bounds = array<i64: 1, 6>}, {pipeline_mode = #tpu.pipeline_mode<synchronous>, transform_indices = @transform_16, window_bounds = array<i64: 128, 1>}, {pipeline_mode = #tpu.pipeline_mode<synchronous>, transform_indices = @transform_17, window_bounds = array<i64: 1, 1>}, {pipeline_mode = #tpu.pipeline_mode<synchronous>, transform_indices = @transform_18, window_bounds = array<i64: 6, 1>}, {pipeline_mode = #tpu.pipeline_mode<synchronous>, transform_indices = @transform_19, window_bounds = array<i64: 1, 1>}, {pipeline_mode = #tpu.pipeline_mode<synchronous>, transform_indices = @transform_20, window_bounds = array<i64: 2, 1>}, {pipeline_mode = #tpu.pipeline_mode<synchronous>, transform_indices = @transform_21, window_bounds = array<i64: 1, 1>}, {pipeline_mode = #tpu.pipeline_mode<synchronous>, transform_indices = @transform_22, window_bounds = array<i64: 8, 256>}]} {
    %c0_i32 = arith.constant 0 : i32
    %0 = arith.cmpi eq, %arg0, %c0_i32 : i32
    %1 = arith.extui %0 : i1 to i32
    %c0_i32_0 = arith.constant 0 : i32
    %2 = arith.cmpi ne, %1, %c0_i32_0 : i32
    scf.if %2 {
      %cst = arith.constant 0.000000e+00 : f32
      %12 = vector.broadcast %cst : f32 to vector<128x32xf32>
      %c0_8 = arith.constant 0 : index
      %c0_9 = arith.constant 0 : index
      %13 = vector.load %arg25[%c0_8, %c0_9] : memref<128x32xf32, #tpu.memory_space<vmem>>, vector<128x32xf32>
      tpu.vector_store %arg25[%c0_8, %c0_9], %12 {strides = array<i32>} : memref<128x32xf32, #tpu.memory_space<vmem>>, vector<128x32xf32>,
    } else {
    }
    %c0 = arith.constant 0 : index
    %c0_1 = arith.constant 0 : index
    %3 = vector.load %arg25[%c0, %c0_1] : memref<128x32xf32, #tpu.memory_space<vmem>>, vector<128x32xf32>
    %c0_2 = arith.constant 0 : index
    %c0_3 = arith.constant 0 : index
    %c0_4 = arith.constant 0 : index
    %4 = vector.load %arg2[%c0_2, %c0_3, %c0_4] : memref<1x128x32xbf16, #tpu.memory_space<vmem>>, vector<1x128x32xbf16>
    %5 = vector.shape_cast %4 : vector<1x128x32xbf16> to vector<128x32xbf16>
    %6 = arith.extf %5 : vector<128x32xbf16> to vector<128x32xf32>
    %7 = arith.addf %3, %6 : vector<128x32xf32>
    %c0_5 = arith.constant 0 : index
    %c0_6 = arith.constant 0 : index
    %8 = vector.load %arg25[%c0_5, %c0_6] : memref<128x32xf32, #tpu.memory_space<vmem>>, vector<128x32xf32>
    tpu.vector_store %arg25[%c0_5, %c0_6], %7 {strides = array<i32>} : memref<128x32xf32, #tpu.memory_space<vmem>>, vector<128x32xf32>,
    %c3_i32 = arith.constant 3 : i32
    %9 = arith.cmpi eq, %arg0, %c3_i32 : i32
    %10 = arith.extui %9 : i1 to i32
    %c0_i32_7 = arith.constant 0 : i32
    %11 = arith.cmpi ne, %10, %c0_i32_7 : i32
    scf.if %11 {
      %c0_8 = arith.constant 0 : index
      %c0_9 = arith.constant 0 : index
      %12 = vector.load %arg25[%c0_8, %c0_9] : memref<128x32xf32, #tpu.memory_space<vmem>>, vector<128x32xf32>
      %13 = arith.truncf %12 : vector<128x32xf32> to vector<128x32xbf16>
      %c0_10 = arith.constant 0 : index
      %c0_11 = arith.constant 0 : index
      %14 = vector.load %arg3[%c0_10, %c0_11] : memref<32x256xbf16, #tpu.memory_space<vmem>>, vector<32x256xbf16>
      %cst = arith.constant dense<0.000000e+00> : vector<128x256xf32>
      %15 = tpu.matmul %13, %14, %cst {dimension_numbers = #tpu.dot_dimension_numbers<[1], [0], [0], [1], [0, 0, 1, 1], [], []>} : vector<128x32xbf16>, vector<32x256xbf16>, vector<128x256xf32> -> vector<128x256xf32>
      %c0_12 = arith.constant 0 : index
      %c0_13 = arith.constant 0 : index
      %16 = vector.load %arg4[%c0_12, %c0_13] : memref<1x256xf32, #tpu.memory_space<vmem>>, vector<1x256xf32>
      %17 = vector.broadcast %16 : vector<1x256xf32> to vector<128x256xf32>
      %18 = arith.addf %15, %17 : vector<128x256xf32>
      %19 = math.tanh %18 : vector<128x256xf32>
      %c0_14 = arith.constant 0 : index
      %c0_15 = arith.constant 0 : index
      %20 = vector.load %arg5[%c0_14, %c0_15] : memref<8x256xbf16, #tpu.memory_space<vmem>>, vector<8x256xbf16>
      %21 = arith.truncf %19 : vector<128x256xf32> to vector<128x256xbf16>
      %cst_16 = arith.constant dense<0.000000e+00> : vector<8x128xf32>
      %22 = tpu.matmul %20, %21, %cst_16 {dimension_numbers = #tpu.dot_dimension_numbers<[1], [1], [0], [0], [0, 0, 1, 0], [], []>} : vector<8x256xbf16>, vector<128x256xbf16>, vector<8x128xf32> -> vector<8x128xf32>
      %23 = tpu.iota {dimensions = array<i32: 0>} : vector<8x128xi32>
      %24 = tpu.iota {dimensions = array<i32: 1>} : vector<8x128xi32>
      %c16_i32 = arith.constant 16 : i32
      %25 = vector.broadcast %c16_i32 : i32 to vector<8x128xi32>
      %26 = arith.muli %23, %25 : vector<8x128xi32>
      %27 = arith.cmpi sge, %24, %26 : vector<8x128xi32>
      %c1_i32 = arith.constant 1 : i32
      %28 = vector.broadcast %c1_i32 : i32 to vector<8x128xi32>
      %29 = arith.addi %23, %28 : vector<8x128xi32>
      %c16_i32_17 = arith.constant 16 : i32
      %30 = vector.broadcast %c16_i32_17 : i32 to vector<8x128xi32>
      %31 = arith.muli %29, %30 : vector<8x128xi32>
      %32 = arith.cmpi slt, %24, %31 : vector<8x128xi32>
      %33 = arith.andi %27, %32 : vector<8x128xi1>
      %cst_18 = arith.constant 3.000000e-01 : f32
      %34 = vector.broadcast %cst_18 : f32 to vector<8x128xf32>
      %35 = arith.mulf %34, %22 : vector<8x128xf32>
      %cst_19 = arith.constant -1.000000e+30 : f32
      %36 = vector.broadcast %cst_19 : f32 to vector<8x128xf32>
      %37 = arith.select %33, %35, %36 : vector<8x128xi1>, vector<8x128xf32>
      %cst_20 = arith.constant dense<0xFF800000> : vector<8xf32>
      %38 = vector.multi_reduction <maximumf>, %37, %cst_20 [1] : vector<8x128xf32> to vector<8xf32>
      %39 = vector.shape_cast %38 : vector<8xf32> to vector<8x1xf32>
      %40 = vector.broadcast %39 : vector<8x1xf32> to vector<8x128xf32>
      %41 = arith.subf %37, %40 : vector<8x128xf32>
      %42 = math.exp %41 : vector<8x128xf32>
      %cst_21 = arith.constant dense<0.000000e+00> : vector<8xf32>
      %43 = vector.multi_reduction <add>, %42, %cst_21 [1] : vector<8x128xf32> to vector<8xf32>
      %44 = vector.shape_cast %43 : vector<8xf32> to vector<8x1xf32>
      %45 = tpu.reciprocal %44 {approx = true} : vector<8x1xf32> -> vector<8x1xf32>
      %46 = vector.broadcast %45 : vector<8x1xf32> to vector<8x128xf32>
      %47 = arith.mulf %42, %46 : vector<8x128xf32>
      %48 = arith.truncf %47 : vector<8x128xf32> to vector<8x128xbf16>
      %cst_22 = arith.constant dense<0.000000e+00> : vector<8x32xf32>
      %49 = tpu.matmul %48, %13, %cst_22 {dimension_numbers = #tpu.dot_dimension_numbers<[1], [0], [0], [1], [0, 0, 1, 1], [], []>} : vector<8x128xbf16>, vector<128x32xbf16>, vector<8x32xf32> -> vector<8x32xf32>
      %50 = arith.truncf %49 : vector<8x32xf32> to vector<8x32xbf16>
      %c0_23 = arith.constant 0 : index
      %c0_24 = arith.constant 0 : index
      %51 = vector.load %arg6[%c0_23, %c0_24] : memref<32x768xbf16, #tpu.memory_space<vmem>>, vector<32x768xbf16>
      %cst_25 = arith.constant dense<0.000000e+00> : vector<8x768xf32>
      %52 = tpu.matmul %50, %51, %cst_25 {dimension_numbers = #tpu.dot_dimension_numbers<[1], [0], [0], [1], [0, 0, 1, 1], [], []>} : vector<8x32xbf16>, vector<32x768xbf16>, vector<8x768xf32> -> vector<8x768xf32>
      %c0_26 = arith.constant 0 : index
      %c0_27 = arith.constant 0 : index
      %53 = vector.load %arg7[%c0_26, %c0_27] : memref<1x768xf32, #tpu.memory_space<vmem>>, vector<1x768xf32>
      %54 = vector.broadcast %53 : vector<1x768xf32> to vector<8x768xf32>
      %55 = arith.addf %52, %54 : vector<8x768xf32>
      %cst_28 = arith.constant 0.000000e+00 : f32
      %56 = vector.broadcast %cst_28 : f32 to vector<8x768xf32>
      %57 = arith.maximumf %55, %56 : vector<8x768xf32>
      %58 = arith.truncf %57 : vector<8x768xf32> to vector<8x768xbf16>
      %c0_29 = arith.constant 0 : index
      %c0_30 = arith.constant 0 : index
      %59 = vector.load %arg8[%c0_29, %c0_30] : memref<768x384xbf16, #tpu.memory_space<vmem>>, vector<768x384xbf16>
      %cst_31 = arith.constant dense<0.000000e+00> : vector<8x384xf32>
      %60 = tpu.matmul %58, %59, %cst_31 {dimension_numbers = #tpu.dot_dimension_numbers<[1], [0], [0], [1], [0, 0, 1, 1], [], []>} : vector<8x768xbf16>, vector<768x384xbf16>, vector<8x384xf32> -> vector<8x384xf32>
      %c0_32 = arith.constant 0 : index
      %c0_33 = arith.constant 0 : index
      %61 = vector.load %arg9[%c0_32, %c0_33] : memref<1x384xf32, #tpu.memory_space<vmem>>, vector<1x384xf32>
      %62 = vector.broadcast %61 : vector<1x384xf32> to vector<8x384xf32>
      %63 = arith.addf %60, %62 : vector<8x384xf32>
      %cst_34 = arith.constant 0.000000e+00 : f32
      %64 = vector.broadcast %cst_34 : f32 to vector<8x384xf32>
      %65 = arith.maximumf %63, %64 : vector<8x384xf32>
      %66 = vector.extract_strided_slice %65 {offsets = [0, 0], sizes = [8, 128], strides = [1, 1]} : vector<8x384xf32> to vector<8x128xf32>
      %67 = vector.extract_strided_slice %65 {offsets = [0, 128], sizes = [8, 128], strides = [1, 1]} : vector<8x384xf32> to vector<8x128xf32>
      %68 = vector.extract_strided_slice %65 {offsets = [0, 256], sizes = [8, 128], strides = [1, 1]} : vector<8x384xf32> to vector<8x128xf32>
      %69 = arith.truncf %65 : vector<8x384xf32> to vector<8x384xbf16>
      %c0_35 = arith.constant 0 : index
      %c0_36 = arith.constant 0 : index
      %70 = vector.load %arg10[%c0_35, %c0_36] : memref<384x256xbf16, #tpu.memory_space<vmem>>, vector<384x256xbf16>
      %cst_37 = arith.constant dense<0.000000e+00> : vector<8x256xf32>
      %71 = tpu.matmul %69, %70, %cst_37 {dimension_numbers = #tpu.dot_dimension_numbers<[1], [0], [0], [1], [0, 0, 1, 1], [], []>} : vector<8x384xbf16>, vector<384x256xbf16>, vector<8x256xf32> -> vector<8x256xf32>
      %c0_38 = arith.constant 0 : index
      %c0_39 = arith.constant 0 : index
      %72 = vector.load %arg11[%c0_38, %c0_39] : memref<1x256xf32, #tpu.memory_space<vmem>>, vector<1x256xf32>
      %73 = vector.broadcast %72 : vector<1x256xf32> to vector<8x256xf32>
      %74 = arith.addf %71, %73 : vector<8x256xf32>
      %cst_40 = arith.constant 0.000000e+00 : f32
      %75 = vector.broadcast %cst_40 : f32 to vector<8x256xf32>
      %76 = arith.maximumf %74, %75 : vector<8x256xf32>
      %77 = arith.truncf %76 : vector<8x256xf32> to vector<8x256xbf16>
      %c0_41 = arith.constant 0 : index
      %c0_42 = arith.constant 0 : index
      %78 = vector.load %arg12[%c0_41, %c0_42] : memref<256x128xbf16, #tpu.memory_space<vmem>>, vector<256x128xbf16>
      %cst_43 = arith.constant dense<0.000000e+00> : vector<8x128xf32>
      %79 = tpu.matmul %77, %78, %cst_43 {dimension_numbers = #tpu.dot_dimension_numbers<[1], [0], [0], [1], [0, 0, 1, 1], [], []>} : vector<8x256xbf16>, vector<256x128xbf16>, vector<8x128xf32> -> vector<8x128xf32>
      %c0_44 = arith.constant 0 : index
      %c0_45 = arith.constant 0 : index
      %80 = vector.load %arg13[%c0_44, %c0_45] : memref<1x128xf32, #tpu.memory_space<vmem>>, vector<1x128xf32>
      %81 = vector.broadcast %80 : vector<1x128xf32> to vector<8x128xf32>
      %82 = arith.addf %79, %81 : vector<8x128xf32>
      %cst_46 = arith.constant 0.000000e+00 : f32
      %83 = vector.broadcast %cst_46 : f32 to vector<8x128xf32>
      %84 = arith.maximumf %82, %83 : vector<8x128xf32>
      %c0_47 = arith.constant 0 : index
      %c0_48 = arith.constant 0 : index
      %85 = vector.load %arg14[%c0_47, %c0_48] : memref<128x3xf32, #tpu.memory_space<vmem>>, vector<128x3xf32>
      %cst_49 = arith.constant dense<0.000000e+00> : vector<8x3xf32>
      %86 = tpu.matmul %84, %85, %cst_49 {dimension_numbers = #tpu.dot_dimension_numbers<[1], [0], [0], [1], [0, 0, 1, 1], [], []>} : vector<8x128xf32>, vector<128x3xf32>, vector<8x3xf32> -> vector<8x3xf32>
      %c0_50 = arith.constant 0 : index
      %c0_51 = arith.constant 0 : index
      %87 = vector.load %arg15[%c0_50, %c0_51] : memref<1x3xf32, #tpu.memory_space<vmem>>, vector<1x3xf32>
      %88 = vector.broadcast %87 : vector<1x3xf32> to vector<8x3xf32>
      %89 = arith.addf %86, %88 : vector<8x3xf32>
      %90 = vector.extract_strided_slice %89 {offsets = [0, 0], sizes = [8, 1], strides = [1, 1]} : vector<8x3xf32> to vector<8x1xf32>
      %91 = vector.broadcast %90 : vector<8x1xf32> to vector<8x128xf32>
      %92 = arith.mulf %66, %91 : vector<8x128xf32>
      %93 = vector.extract_strided_slice %89 {offsets = [0, 1], sizes = [8, 1], strides = [1, 1]} : vector<8x3xf32> to vector<8x1xf32>
      %94 = vector.broadcast %93 : vector<8x1xf32> to vector<8x128xf32>
      %95 = arith.mulf %67, %94 : vector<8x128xf32>
      %96 = arith.addf %92, %95 : vector<8x128xf32>
      %97 = vector.extract_strided_slice %89 {offsets = [0, 2], sizes = [8, 1], strides = [1, 1]} : vector<8x3xf32> to vector<8x1xf32>
      %98 = vector.broadcast %97 : vector<8x1xf32> to vector<8x128xf32>
      %99 = arith.mulf %68, %98 : vector<8x128xf32>
      %100 = arith.addf %96, %99 : vector<8x128xf32>
      %c0_52 = arith.constant 0 : index
      %c0_53 = arith.constant 0 : index
      %101 = vector.load %arg16[%c0_52, %c0_53] : memref<128x6xf32, #tpu.memory_space<vmem>>, vector<128x6xf32>
      %cst_54 = arith.constant dense<0.000000e+00> : vector<8x6xf32>
      %102 = tpu.matmul %100, %101, %cst_54 {dimension_numbers = #tpu.dot_dimension_numbers<[1], [0], [0], [1], [0, 0, 1, 1], [], []>} : vector<8x128xf32>, vector<128x6xf32>, vector<8x6xf32> -> vector<8x6xf32>
      %c0_55 = arith.constant 0 : index
      %c0_56 = arith.constant 0 : index
      %103 = vector.load %arg17[%c0_55, %c0_56] : memref<1x6xf32, #tpu.memory_space<vmem>>, vector<1x6xf32>
      %104 = vector.broadcast %103 : vector<1x6xf32> to vector<8x6xf32>
      %105 = arith.addf %102, %104 : vector<8x6xf32>
      %c0_57 = arith.constant 0 : index
      %c0_58 = arith.constant 0 : index
      %106 = vector.load %arg20[%c0_57, %c0_58] : memref<6x1xf32, #tpu.memory_space<vmem>>, vector<6x1xf32>
      %cst_59 = arith.constant dense<0.000000e+00> : vector<8x1xf32>
      %107 = tpu.matmul %105, %106, %cst_59 {dimension_numbers = #tpu.dot_dimension_numbers<[1], [0], [0], [1], [0, 0, 1, 1], [], []>} : vector<8x6xf32>, vector<6x1xf32>, vector<8x1xf32> -> vector<8x1xf32>
      %c0_60 = arith.constant 0 : index
      %c0_61 = arith.constant 0 : index
      %108 = vector.load %arg21[%c0_60, %c0_61] : memref<1x1xf32, #tpu.memory_space<vmem>>, vector<1x1xf32>
      %109 = vector.broadcast %108 : vector<1x1xf32> to vector<8x1xf32>
      %110 = arith.addf %107, %109 : vector<8x1xf32>
      %111 = math.tanh %110 : vector<8x1xf32>
      %c0_62 = arith.constant 0 : index
      %c0_63 = arith.constant 0 : index
      %112 = vector.load %arg18[%c0_62, %c0_63] : memref<128x1xf32, #tpu.memory_space<vmem>>, vector<128x1xf32>
      %cst_64 = arith.constant dense<0.000000e+00> : vector<8x1xf32>
      %113 = tpu.matmul %100, %112, %cst_64 {dimension_numbers = #tpu.dot_dimension_numbers<[1], [0], [0], [1], [0, 0, 1, 1], [], []>} : vector<8x128xf32>, vector<128x1xf32>, vector<8x1xf32> -> vector<8x1xf32>
      %c0_65 = arith.constant 0 : index
      %c0_66 = arith.constant 0 : index
      %114 = vector.load %arg19[%c0_65, %c0_66] : memref<1x1xf32, #tpu.memory_space<vmem>>, vector<1x1xf32>
      %115 = vector.broadcast %114 : vector<1x1xf32> to vector<8x1xf32>
      %116 = arith.addf %113, %115 : vector<8x1xf32>
      %117 = tpu.concatenate %111, %116 in 1 : vector<8x1xf32>, vector<8x1xf32> -> vector<8x2xf32>
      %c0_67 = arith.constant 0 : index
      %c0_68 = arith.constant 0 : index
      %118 = vector.load %arg22[%c0_67, %c0_68] : memref<2x1xf32, #tpu.memory_space<vmem>>, vector<2x1xf32>
      %cst_69 = arith.constant dense<0.000000e+00> : vector<8x1xf32>
      %119 = tpu.matmul %117, %118, %cst_69 {dimension_numbers = #tpu.dot_dimension_numbers<[1], [0], [0], [1], [0, 0, 1, 1], [], []>} : vector<8x2xf32>, vector<2x1xf32>, vector<8x1xf32> -> vector<8x1xf32>
      %c0_70 = arith.constant 0 : index
      %c0_71 = arith.constant 0 : index
      %120 = vector.load %arg23[%c0_70, %c0_71] : memref<1x1xf32, #tpu.memory_space<vmem>>, vector<1x1xf32>
      %121 = vector.broadcast %120 : vector<1x1xf32> to vector<8x1xf32>
      %122 = arith.addf %119, %121 : vector<8x1xf32>
      %cst_72 = arith.constant 0.000000e+00 : f32
      %123 = vector.broadcast %cst_72 : f32 to vector<8x121xf32>
      %124 = tpu.concatenate %100, %105, %122, %123 in 1 : vector<8x128xf32>, vector<8x6xf32>, vector<8x1xf32>, vector<8x121xf32> -> vector<8x256xf32>
      %c0_73 = arith.constant 0 : index
      %c0_74 = arith.constant 0 : index
      %125 = vector.load %arg24[%c0_73, %c0_74] : memref<8x256xf32, #tpu.memory_space<vmem>>, vector<8x256xf32>
      tpu.vector_store %arg24[%c0_73, %c0_74], %124 {strides = array<i32>} : memref<8x256xf32, #tpu.memory_space<vmem>>, vector<8x256xf32>,
    } else {
    }
    return
  }
  func.func @transform_0(%arg0: i32, %arg1: memref<4xi32, #tpu.memory_space<smem>>) -> (i32, i32, i32) {
    %0 = arith.index_cast %arg0 : i32 to index
    %1 = memref.load %arg1[%0] : memref<4xi32, #tpu.memory_space<smem>>
    %c0_i32 = arith.constant 0 : i32
    %c0_i32_0 = arith.constant 0 : i32
    %c0_i32_1 = arith.constant 0 : i32
    return %1, %c0_i32, %c0_i32_0 : i32, i32, i32
  }
  func.func @transform_1(%arg0: i32, %arg1: memref<4xi32, #tpu.memory_space<smem>>) -> (i32, i32) {
    %c0_i32 = arith.constant 0 : i32
    %c0_i32_0 = arith.constant 0 : i32
    %c0_i32_1 = arith.constant 0 : i32
    return %c0_i32, %c0_i32_0 : i32, i32
  }
  func.func @transform_2(%arg0: i32, %arg1: memref<4xi32, #tpu.memory_space<smem>>) -> (i32, i32) {
    %c0_i32 = arith.constant 0 : i32
    %c0_i32_0 = arith.constant 0 : i32
    %c0_i32_1 = arith.constant 0 : i32
    return %c0_i32, %c0_i32_0 : i32, i32
  }
  func.func @transform_3(%arg0: i32, %arg1: memref<4xi32, #tpu.memory_space<smem>>) -> (i32, i32) {
    %c0_i32 = arith.constant 0 : i32
    %c0_i32_0 = arith.constant 0 : i32
    %c0_i32_1 = arith.constant 0 : i32
    return %c0_i32, %c0_i32_0 : i32, i32
  }
  func.func @transform_4(%arg0: i32, %arg1: memref<4xi32, #tpu.memory_space<smem>>) -> (i32, i32) {
    %c0_i32 = arith.constant 0 : i32
    %c0_i32_0 = arith.constant 0 : i32
    %c0_i32_1 = arith.constant 0 : i32
    return %c0_i32, %c0_i32_0 : i32, i32
  }
  func.func @transform_5(%arg0: i32, %arg1: memref<4xi32, #tpu.memory_space<smem>>) -> (i32, i32) {
    %c0_i32 = arith.constant 0 : i32
    %c0_i32_0 = arith.constant 0 : i32
    %c0_i32_1 = arith.constant 0 : i32
    return %c0_i32, %c0_i32_0 : i32, i32
  }
  func.func @transform_6(%arg0: i32, %arg1: memref<4xi32, #tpu.memory_space<smem>>) -> (i32, i32) {
    %c0_i32 = arith.constant 0 : i32
    %c0_i32_0 = arith.constant 0 : i32
    %c0_i32_1 = arith.constant 0 : i32
    return %c0_i32, %c0_i32_0 : i32, i32
  }
  func.func @transform_7(%arg0: i32, %arg1: memref<4xi32, #tpu.memory_space<smem>>) -> (i32, i32) {
    %c0_i32 = arith.constant 0 : i32
    %c0_i32_0 = arith.constant 0 : i32
    %c0_i32_1 = arith.constant 0 : i32
    return %c0_i32, %c0_i32_0 : i32, i32
  }
  func.func @transform_8(%arg0: i32, %arg1: memref<4xi32, #tpu.memory_space<smem>>) -> (i32, i32) {
    %c0_i32 = arith.constant 0 : i32
    %c0_i32_0 = arith.constant 0 : i32
    %c0_i32_1 = arith.constant 0 : i32
    return %c0_i32, %c0_i32_0 : i32, i32
  }
  func.func @transform_9(%arg0: i32, %arg1: memref<4xi32, #tpu.memory_space<smem>>) -> (i32, i32) {
    %c0_i32 = arith.constant 0 : i32
    %c0_i32_0 = arith.constant 0 : i32
    %c0_i32_1 = arith.constant 0 : i32
    return %c0_i32, %c0_i32_0 : i32, i32
  }
  func.func @transform_10(%arg0: i32, %arg1: memref<4xi32, #tpu.memory_space<smem>>) -> (i32, i32) {
    %c0_i32 = arith.constant 0 : i32
    %c0_i32_0 = arith.constant 0 : i32
    %c0_i32_1 = arith.constant 0 : i32
    return %c0_i32, %c0_i32_0 : i32, i32
  }
  func.func @transform_11(%arg0: i32, %arg1: memref<4xi32, #tpu.memory_space<smem>>) -> (i32, i32) {
    %c0_i32 = arith.constant 0 : i32
    %c0_i32_0 = arith.constant 0 : i32
    %c0_i32_1 = arith.constant 0 : i32
    return %c0_i32, %c0_i32_0 : i32, i32
  }
  func.func @transform_12(%arg0: i32, %arg1: memref<4xi32, #tpu.memory_space<smem>>) -> (i32, i32) {
    %c0_i32 = arith.constant 0 : i32
    %c0_i32_0 = arith.constant 0 : i32
    %c0_i32_1 = arith.constant 0 : i32
    return %c0_i32, %c0_i32_0 : i32, i32
  }
  func.func @transform_13(%arg0: i32, %arg1: memref<4xi32, #tpu.memory_space<smem>>) -> (i32, i32) {
    %c0_i32 = arith.constant 0 : i32
    %c0_i32_0 = arith.constant 0 : i32
    %c0_i32_1 = arith.constant 0 : i32
    return %c0_i32, %c0_i32_0 : i32, i32
  }
  func.func @transform_14(%arg0: i32, %arg1: memref<4xi32, #tpu.memory_space<smem>>) -> (i32, i32) {
    %c0_i32 = arith.constant 0 : i32
    %c0_i32_0 = arith.constant 0 : i32
    %c0_i32_1 = arith.constant 0 : i32
    return %c0_i32, %c0_i32_0 : i32, i32
  }
  func.func @transform_15(%arg0: i32, %arg1: memref<4xi32, #tpu.memory_space<smem>>) -> (i32, i32) {
    %c0_i32 = arith.constant 0 : i32
    %c0_i32_0 = arith.constant 0 : i32
    %c0_i32_1 = arith.constant 0 : i32
    return %c0_i32, %c0_i32_0 : i32, i32
  }
  func.func @transform_16(%arg0: i32, %arg1: memref<4xi32, #tpu.memory_space<smem>>) -> (i32, i32) {
    %c0_i32 = arith.constant 0 : i32
    %c0_i32_0 = arith.constant 0 : i32
    %c0_i32_1 = arith.constant 0 : i32
    return %c0_i32, %c0_i32_0 : i32, i32
  }
  func.func @transform_17(%arg0: i32, %arg1: memref<4xi32, #tpu.memory_space<smem>>) -> (i32, i32) {
    %c0_i32 = arith.constant 0 : i32
    %c0_i32_0 = arith.constant 0 : i32
    %c0_i32_1 = arith.constant 0 : i32
    return %c0_i32, %c0_i32_0 : i32, i32
  }
  func.func @transform_18(%arg0: i32, %arg1: memref<4xi32, #tpu.memory_space<smem>>) -> (i32, i32) {
    %c0_i32 = arith.constant 0 : i32
    %c0_i32_0 = arith.constant 0 : i32
    %c0_i32_1 = arith.constant 0 : i32
    return %c0_i32, %c0_i32_0 : i32, i32
  }
  func.func @transform_19(%arg0: i32, %arg1: memref<4xi32, #tpu.memory_space<smem>>) -> (i32, i32) {
    %c0_i32 = arith.constant 0 : i32
    %c0_i32_0 = arith.constant 0 : i32
    %c0_i32_1 = arith.constant 0 : i32
    return %c0_i32, %c0_i32_0 : i32, i32
  }
  func.func @transform_20(%arg0: i32, %arg1: memref<4xi32, #tpu.memory_space<smem>>) -> (i32, i32) {
    %c0_i32 = arith.constant 0 : i32
    %c0_i32_0 = arith.constant 0 : i32
    %c0_i32_1 = arith.constant 0 : i32
    return %c0_i32, %c0_i32_0 : i32, i32
  }
  func.func @transform_21(%arg0: i32, %arg1: memref<4xi32, #tpu.memory_space<smem>>) -> (i32, i32) {
    %c0_i32 = arith.constant 0 : i32
    %c0_i32_0 = arith.constant 0 : i32
    %c0_i32_1 = arith.constant 0 : i32
    return %c0_i32, %c0_i32_0 : i32, i32
  }
  func.func @transform_22(%arg0: i32, %arg1: memref<4xi32, #tpu.memory_space<smem>>) -> (i32, i32) {
    %c0_i32 = arith.constant 0 : i32
    %c0_i32_0 = arith.constant 0 : i32
    %c0_i32_1 = arith.constant 0 : i32
    return %c0_i32, %c0_i32_0 : i32, i32
  }
}

</mosaic_0001>

<llo_original>
// kernel: adapter_classification_forward.1
$region0: #{adapter_classification_forward.1}
  #allocation0 [shape = 'u32[]', space=smem, size = 0x4, offset = 0x4, fixed_abs, tag = 'smem constant byte address 0x4 - core index']
  #allocation1 [shape = 'u32[144,128]{1,0:T(1,128)}', space=vmem, size = 0x12000, scoped, tag = 'internal scratch']
  #allocation2 [shape = 'f32[128,32]{1,0:T(8,128)}', space=vmem, size = 0x10000, scoped, tag = 'scratch operand']
  #allocation3 [shape = 's32[1]{0}', space=sflag, size = 0x4, scoped, tag = 'scoped memory for adapter_classification_forward.1']
  #allocation4 [shape = 'u8[512]{0}', space=smem, size = 0x200, scoped, tag = 'prefetched SMEM operand 0']
  #allocation5 [shape = 'f32[1,1]{1,0:T(1,128)S(1)}', space=vmem, size = 0x200, scoped, tag = 'scoped memory for adapter_classification_forward.1']
  #allocation6 [shape = 'f32[1,1]{1,0:T(1,128)S(1)}', space=vmem, size = 0x200, scoped, tag = 'scoped memory for adapter_classification_forward.1']
  #allocation7 [shape = 'f32[1,1]{1,0:T(1,128)S(1)}', space=vmem, size = 0x200, scoped, tag = 'scoped memory for adapter_classification_forward.1']
  %s0 = inlined_call_operand.vmem [shape: s32[4], index: 0, kind: input, shape index: {}]
  %s1 = inlined_call_operand.vmem [shape: bf16[7,128,32], index: 1, kind: input, shape index: {}]
  %s2 = inlined_call_operand.vmem [shape: bf16[32,256], index: 2, kind: input, shape index: {}]
  %s3 = inlined_call_operand.vmem [shape: f32[1,256], index: 3, kind: input, shape index: {}]
  %s4 = inlined_call_operand.vmem [shape: bf16[8,256], index: 4, kind: input, shape index: {}]
  %s5 = inlined_call_operand.vmem [shape: bf16[32,768], index: 5, kind: input, shape index: {}]
  %s6 = inlined_call_operand.hbm [shape: f32[1,768], index: 6, kind: input, shape index: {}]
  %s7 = inlined_call_operand.vmem [shape: bf16[768,384], index: 7, kind: input, shape index: {}]
  %s8 = inlined_call_operand.hbm [shape: f32[1,384], index: 8, kind: input, shape index: {}]
  %s9 = inlined_call_operand.vmem [shape: bf16[384,256], index: 9, kind: input, shape index: {}]
  %s10 = inlined_call_operand.hbm [shape: f32[1,256], index: 10, kind: input, shape index: {}]
  %s11 = inlined_call_operand.vmem [shape: bf16[256,128], index: 11, kind: input, shape index: {}]
  %s12 = inlined_call_operand.hbm [shape: f32[1,128], index: 12, kind: input, shape index: {}]
  %s13 = inlined_call_operand.vmem [shape: f32[128,3], index: 13, kind: input, shape index: {}]
  %s14 = inlined_call_operand.hbm [shape: f32[1,3], index: 14, kind: input, shape index: {}]
  %s15 = inlined_call_operand.vmem [shape: f32[128,6], index: 15, kind: input, shape index: {}]
  %s16 = inlined_call_operand.hbm [shape: f32[1,6], index: 16, kind: input, shape index: {}]
  %s17 = inlined_call_operand.vmem [shape: f32[128,1], index: 17, kind: input, shape index: {}]
  %s18 = inlined_call_operand.<no memory space> [shape: f32[1,1], index: 18, kind: input, shape index: {}]
  %s19 = inlined_call_operand.vmem [shape: f32[6,1], index: 19, kind: input, shape index: {}]
  %s20 = inlined_call_operand.<no memory space> [shape: f32[1,1], index: 20, kind: input, shape index: {}]
  %s21 = inlined_call_operand.vmem [shape: f32[2,1], index: 21, kind: input, shape index: {}]
  %s22 = inlined_call_operand.<no memory space> [shape: f32[1,1], index: 22, kind: input, shape index: {}]
  %s23 = inlined_call_operand.vmem [shape: f32[8,256], index: 23, kind: output, shape index: {}]
  %s24 = sld [smem:[#allocation0]]
  $region153: #{adapter_classification_forward.1} parent=0
    _
  %s26 = ssub.s32 1, %s24
  %s27 = scalar_select 0, %s26, %s24
  %s28 = sshll.u32 %s0, 4
  %s29 = int_to_ptr.vmem [resolvable:$true] %s28
  %31 = dma.vmem_to_smem %s29, 16, [#allocation4], [#allocation3]
  %v32 = vstv %s18
  %33 = vst [vmem:[#allocation5] sm:$0x1] %v32
  %v34 = vstv %s20
  %35 = vst [vmem:[#allocation6] sm:$0x1] %v34
  %v36 = vstv %s22
  %37 = vst [vmem:[#allocation7] sm:$0x1] %v36
  %38 = dma.done [#allocation3], 16
  %39 = sfence
  $region1: #{adapter_classification_forward.1} parent=0
    #allocation8 [shape = 'u8[3072]{0}', space=vmem, size = 0xc00, scoped, tag = 'input window, operand 6, single buffered']
    #allocation9 [shape = 's32[2]{0}', space=sflag, size = 0x8, scoped, tag = 'scoped memory for adapter_classification_forward.1']
    #allocation10 [shape = 'u8[1536]{0}', space=vmem, size = 0x800, scoped, tag = 'input window, operand 8, single buffered']
    #allocation11 [shape = 's32[1]{0}', space=sflag, size = 0x4, scoped, tag = 'scoped memory for adapter_classification_forward.1']
    #allocation12 [shape = 'u8[1024]{0}', space=vmem, size = 0x400, scoped, tag = 'input window, operand 10, single buffered']
    #allocation13 [shape = 'u8[512]{0}', space=vmem, size = 0x400, scoped, tag = 'input window, operand 12, single buffered']
    #allocation14 [shape = 's32[1]{0}', space=sflag, size = 0x4, scoped, tag = 'scoped memory for adapter_classification_forward.1']
    #allocation15 [shape = 'u8[512]{0}', space=vmem, size = 0x400, scoped, tag = 'input window, operand 14, single buffered']
    #allocation16 [shape = 'u8[512]{0}', space=vmem, size = 0x400, scoped, tag = 'input window, operand 16, single buffered']
    #allocation17 [shape = 's32[1]{0}', space=sflag, size = 0x4, scoped, tag = 'scoped memory for adapter_classification_forward.1']
    %40 = vsyncpa [#allocation9], 0
    %41 = vsyncpa [#allocation11], 0
    %42 = vsyncpa [#allocation14], 0
    %43 = vsyncpa [#allocation17], 0
    loop: start=0, step=1, limit=6
    $region2: #{adapter_classification_forward.1} parent=1 // loop_pre_header
      _
    $region3: #{adapter_classification_forward.1} parent=1 // loop_header
      %s45 = sphi 0, %s49
      %p46 = scmp.ge.s32.totalorder %s45, 6
      %s57 = sphi 0, %s59
      %s60 = sphi 0, %s57
      %s61 = sphi 0, %s60
      %s77 = sphi 0, %s61
      %s81 = sphi 0, %s81
      %s83 = sphi 0, %s81
      %s84 = sphi 0, %s83
      %s98 = sphi 0, %s84
      %s102 = sphi 0, %s102
      %s104 = sphi 0, %s102
      %s105 = sphi 0, %s104
      %s119 = sphi 0, %s105
      %s123 = sphi 0, %s123
      %s125 = sphi 0, %s123
      %s126 = sphi 0, %s125
      %s140 = sphi 0, %s126
      %s144 = sphi 0, %s144
      %s146 = sphi 0, %s144
      %s147 = sphi 0, %s146
      %s161 = sphi 0, %s147
      %s165 = sphi 0, %s165
      %s167 = sphi 0, %s165
      %s168 = sphi 0, %s167
      %s182 = sphi 0, %s168
      %s186 = sphi 0, %s186
      %s188 = sphi 0, %s186
      %s189 = sphi 0, %s188
      %s203 = sphi 0, %s189
      %s207 = sphi 0, %s207
      %s209 = sphi 0, %s207
      %s210 = sphi 0, %s209
      %s224 = sphi 0, %s210
      %s228 = sphi 0, %s228
      %s230 = sphi 0, %s228
      %s231 = sphi 0, %s230
      %s245 = sphi 0, %s231
      %s249 = sphi 0, %s249
      %s251 = sphi 0, %s249
      %s252 = sphi 0, %s251
      %s266 = sphi 0, %s252
      %s270 = sphi 0, %s270
      %s272 = sphi 0, %s270
      %s273 = sphi 0, %s272
      %s287 = sphi 0, %s273
      %s291 = sphi 0, %s291
      %s293 = sphi 0, %s291
      %s294 = sphi 0, %s293
      %s308 = sphi 0, %s294
      %s312 = sphi 0, %s312
      %s314 = sphi 0, %s312
      %s315 = sphi 0, %s314
      %s329 = sphi 0, %s315
      %s333 = sphi 0, %s333
      %s335 = sphi 0, %s333
      %s336 = sphi 0, %s335
      %s350 = sphi 0, %s336
      %s354 = sphi 0, %s354
      %s356 = sphi 0, %s354
      %s357 = sphi 0, %s356
      %s371 = sphi 0, %s357
      %s375 = sphi 0, %s375
      %s377 = sphi 0, %s375
      %s378 = sphi 0, %s377
      %s392 = sphi 0, %s378
      %s396 = sphi 0, %s396
      %s398 = sphi 0, %s396
      %s399 = sphi 0, %s398
      %s413 = sphi 0, %s399
      %s417 = sphi 0, %s417
      %s419 = sphi 0, %s417
      %s420 = sphi 0, %s419
      %s434 = sphi 0, %s420
      %s438 = sphi 0, %s438
      %s440 = sphi 0, %s438
      %s441 = sphi 0, %s440
      %s455 = sphi 0, %s441
      %s459 = sphi 0, %s459
      %s461 = sphi 0, %s459
      %s462 = sphi 0, %s461
      %s476 = sphi 0, %s462
      %s480 = sphi 0, %s480
      %s482 = sphi 0, %s480
      %s483 = sphi 0, %s482
      %s497 = sphi 0, %s483
      %s501 = sphi 0, %s501
      %s503 = sphi 0, %s501
      %s504 = sphi 0, %s503
      %s518 = sphi 0, %s504
      %s522 = sphi 0, %s522
      %s524 = sphi 0, %s522
      %s525 = sphi 0, %s524
      %s539 = sphi 0, %s525
    $region4: #{adapter_classification_forward.1} parent=1 // loop_header_branch
      %48 = sbr.rel (%p46) target = $region8
    $region5: #{adapter_classification_forward.1} parent=1 // loop_body
      %s50 = ssub.s32 %s45, 1
      %s51 = ssub.s32 %s45, 2
      %s52 = sadd.s32 %s45, 1
      %s53 = sld [smem:[#allocation4 + %s45]]
      %s54 = sld [smem:[#allocation4 + %s52]]
      %s55 = ssub.s32 %s53, %s54
      %p56 = scmp.eq.s32.totalorder %s55, 0
      %s58 = sadd.s32 %s57, 1
      %s59 = scalar_select %p56, %s57, %s58
      %p62 = pneg %p56
      %p63 = scmp.eq.s32.totalorder %s45, 3
      %p64 = por %p62, %p63
      %p65 = scmp.ne.s32.totalorder %s57, %s60
      %p66 = scmp.eq.s32.totalorder %s45, 0
      %p67 = por %p65, %p66
      %p68 = scmp.ne.s32.totalorder %s57, %s60
      %p69 = scmp.eq.s32.totalorder %s50, 3
      %p70 = por %p68, %p69
      %p71 = scmp.ne.s32.totalorder %s60, %s61
      %p72 = scmp.eq.s32.totalorder %s50, 0
      %p73 = por %p71, %p72
      %p74 = scmp.ne.s32.totalorder %s60, %s61
      %p75 = scmp.eq.s32.totalorder %s51, 3
      %p76 = por %p74, %p75
      %p78 = scmp.ne.s32.totalorder %s61, %s77
      %p79 = scmp.eq.s32.totalorder %s51, 0
      %p80 = por %p78, %p79
      %s82 = sadd.s32 %s81, 1
      %p85 = scmp.eq.s32.totalorder %s45, 3
      %p86 = scmp.ne.s32.totalorder %s81, %s83
      %p87 = scmp.eq.s32.totalorder %s45, 0
      %p88 = por %p86, %p87
      %p89 = scmp.ne.s32.totalorder %s81, %s83
      %p90 = scmp.eq.s32.totalorder %s50, 3
      %p91 = por %p89, %p90
      %p92 = scmp.ne.s32.totalorder %s83, %s84
      %p93 = scmp.eq.s32.totalorder %s50, 0
      %p94 = por %p92, %p93
      %p95 = scmp.ne.s32.totalorder %s83, %s84
      %p96 = scmp.eq.s32.totalorder %s51, 3
      %p97 = por %p95, %p96
      %p99 = scmp.ne.s32.totalorder %s84, %s98
      %p100 = scmp.eq.s32.totalorder %s51, 0
      %p101 = por %p99, %p100
      %s103 = sadd.s32 %s102, 1
      %p106 = scmp.eq.s32.totalorder %s45, 3
      %p107 = scmp.ne.s32.totalorder %s102, %s104
      %p108 = scmp.eq.s32.totalorder %s45, 0
      %p109 = por %p107, %p108
      %p110 = scmp.ne.s32.totalorder %s102, %s104
      %p111 = scmp.eq.s32.totalorder %s50, 3
      %p112 = por %p110, %p111
      %p113 = scmp.ne.s32.totalorder %s104, %s105
      %p114 = scmp.eq.s32.totalorder %s50, 0
      %p115 = por %p113, %p114
      %p116 = scmp.ne.s32.totalorder %s104, %s105
      %p117 = scmp.eq.s32.totalorder %s51, 3
      %p118 = por %p116, %p117
      %p120 = scmp.ne.s32.totalorder %s105, %s119
      %p121 = scmp.eq.s32.totalorder %s51, 0
      %p122 = por %p120, %p121
      %s124 = sadd.s32 %s123, 1
      %p127 = scmp.eq.s32.totalorder %s45, 3
      %p128 = scmp.ne.s32.totalorder %s123, %s125
      %p129 = scmp.eq.s32.totalorder %s45, 0
      %p130 = por %p128, %p129
      %p131 = scmp.ne.s32.totalorder %s123, %s125
      %p132 = scmp.eq.s32.totalorder %s50, 3
      %p133 = por %p131, %p132
      %p134 = scmp.ne.s32.totalorder %s125, %s126
      %p135 = scmp.eq.s32.totalorder %s50, 0
      %p136 = por %p134, %p135
      %p137 = scmp.ne.s32.totalorder %s125, %s126
      %p138 = scmp.eq.s32.totalorder %s51, 3
      %p139 = por %p137, %p138
      %p141 = scmp.ne.s32.totalorder %s126, %s140
      %p142 = scmp.eq.s32.totalorder %s51, 0
      %p143 = por %p141, %p142
      %s145 = sadd.s32 %s144, 1
      %p148 = scmp.eq.s32.totalorder %s45, 3
      %p149 = scmp.ne.s32.totalorder %s144, %s146
      %p150 = scmp.eq.s32.totalorder %s45, 0
      %p151 = por %p149, %p150
      %p152 = scmp.ne.s32.totalorder %s144, %s146
      %p153 = scmp.eq.s32.totalorder %s50, 3
      %p154 = por %p152, %p153
      %p155 = scmp.ne.s32.totalorder %s146, %s147
      %p156 = scmp.eq.s32.totalorder %s50, 0
      %p157 = por %p155, %p156
      %p158 = scmp.ne.s32.totalorder %s146, %s147
      %p159 = scmp.eq.s32.totalorder %s51, 3
      %p160 = por %p158, %p159
      %p162 = scmp.ne.s32.totalorder %s147, %s161
      %p163 = scmp.eq.s32.totalorder %s51, 0
      %p164 = por %p162, %p163
      %s166 = sadd.s32 %s165, 1
      %p169 = scmp.eq.s32.totalorder %s45, 3
      %p170 = scmp.ne.s32.totalorder %s165, %s167
      %p171 = scmp.eq.s32.totalorder %s45, 0
      %p172 = por %p170, %p171
      %p173 = scmp.ne.s32.totalorder %s165, %s167
      %p174 = scmp.eq.s32.totalorder %s50, 3
      %p175 = por %p173, %p174
      %p176 = scmp.ne.s32.totalorder %s167, %s168
      %p177 = scmp.eq.s32.totalorder %s50, 0
      %p178 = por %p176, %p177
      %p179 = scmp.ne.s32.totalorder %s167, %s168
      %p180 = scmp.eq.s32.totalorder %s51, 3
      %p181 = por %p179, %p180
      %p183 = scmp.ne.s32.totalorder %s168, %s182
      %p184 = scmp.eq.s32.totalorder %s51, 0
      %p185 = por %p183, %p184
      %s187 = sadd.s32 %s186, 1
      %p190 = scmp.eq.s32.totalorder %s45, 3
      %p191 = scmp.ne.s32.totalorder %s186, %s188
      %p192 = scmp.eq.s32.totalorder %s45, 0
      %p193 = por %p191, %p192
      %p194 = scmp.ne.s32.totalorder %s186, %s188
      %p195 = scmp.eq.s32.totalorder %s50, 3
      %p196 = por %p194, %p195
      %p197 = scmp.ne.s32.totalorder %s188, %s189
      %p198 = scmp.eq.s32.totalorder %s50, 0
      %p199 = por %p197, %p198
      %p200 = scmp.ne.s32.totalorder %s188, %s189
      %p201 = scmp.eq.s32.totalorder %s51, 3
      %p202 = por %p200, %p201
      %p204 = scmp.ne.s32.totalorder %s189, %s203
      %p205 = scmp.eq.s32.totalorder %s51, 0
      %p206 = por %p204, %p205
      %s208 = sadd.s32 %s207, 1
      %p211 = scmp.eq.s32.totalorder %s45, 3
      %p212 = scmp.ne.s32.totalorder %s207, %s209
      %p213 = scmp.eq.s32.totalorder %s45, 0
      %p214 = por %p212, %p213
      %p215 = scmp.ne.s32.totalorder %s207, %s209
      %p216 = scmp.eq.s32.totalorder %s50, 3
      %p217 = por %p215, %p216
      %p218 = scmp.ne.s32.totalorder %s209, %s210
      %p219 = scmp.eq.s32.totalorder %s50, 0
      %p220 = por %p218, %p219
      %p221 = scmp.ne.s32.totalorder %s209, %s210
      %p222 = scmp.eq.s32.totalorder %s51, 3
      %p223 = por %p221, %p222
      %p225 = scmp.ne.s32.totalorder %s210, %s224
      %p226 = scmp.eq.s32.totalorder %s51, 0
      %p227 = por %p225, %p226
      %s229 = sadd.s32 %s228, 1
      %p232 = scmp.eq.s32.totalorder %s45, 3
      %p233 = scmp.ne.s32.totalorder %s228, %s230
      %p234 = scmp.eq.s32.totalorder %s45, 0
      %p235 = por %p233, %p234
      %p236 = scmp.ne.s32.totalorder %s228, %s230
      %p237 = scmp.eq.s32.totalorder %s50, 3
      %p238 = por %p236, %p237
      %p239 = scmp.ne.s32.totalorder %s230, %s231
      %p240 = scmp.eq.s32.totalorder %s50, 0
      %p241 = por %p239, %p240
      %p242 = scmp.ne.s32.totalorder %s230, %s231
      %p243 = scmp.eq.s32.totalorder %s51, 3
      %p244 = por %p242, %p243
      %p246 = scmp.ne.s32.totalorder %s231, %s245
      %p247 = scmp.eq.s32.totalorder %s51, 0
      %p248 = por %p246, %p247
      %s250 = sadd.s32 %s249, 1
      %p253 = scmp.eq.s32.totalorder %s45, 3
      %p254 = scmp.ne.s32.totalorder %s249, %s251
      %p255 = scmp.eq.s32.totalorder %s45, 0
      %p256 = por %p254, %p255
      %p257 = scmp.ne.s32.totalorder %s249, %s251
      %p258 = scmp.eq.s32.totalorder %s50, 3
      %p259 = por %p257, %p258
      %p260 = scmp.ne.s32.totalorder %s251, %s252
      %p261 = scmp.eq.s32.totalorder %s50, 0
      %p262 = por %p260, %p261
      %p263 = scmp.ne.s32.totalorder %s251, %s252
      %p264 = scmp.eq.s32.totalorder %s51, 3
      %p265 = por %p263, %p264
      %p267 = scmp.ne.s32.totalorder %s252, %s266
      %p268 = scmp.eq.s32.totalorder %s51, 0
      %p269 = por %p267, %p268
      %s271 = sadd.s32 %s270, 1
      %p274 = scmp.eq.s32.totalorder %s45, 3
      %p275 = scmp.ne.s32.totalorder %s270, %s272
      %p276 = scmp.eq.s32.totalorder %s45, 0
      %p277 = por %p275, %p276
      %p278 = scmp.ne.s32.totalorder %s270, %s272
      %p279 = scmp.eq.s32.totalorder %s50, 3
      %p280 = por %p278, %p279
      %p281 = scmp.ne.s32.totalorder %s272, %s273
      %p282 = scmp.eq.s32.totalorder %s50, 0
      %p283 = por %p281, %p282
      %p284 = scmp.ne.s32.totalorder %s272, %s273
      %p285 = scmp.eq.s32.totalorder %s51, 3
      %p286 = por %p284, %p285
      %p288 = scmp.ne.s32.totalorder %s273, %s287
      %p289 = scmp.eq.s32.totalorder %s51, 0
      %p290 = por %p288, %p289
      %s292 = sadd.s32 %s291, 1
      %p295 = scmp.eq.s32.totalorder %s45, 3
      %p296 = scmp.ne.s32.totalorder %s291, %s293
      %p297 = scmp.eq.s32.totalorder %s45, 0
      %p298 = por %p296, %p297
      %p299 = scmp.ne.s32.totalorder %s291, %s293
      %p300 = scmp.eq.s32.totalorder %s50, 3
      %p301 = por %p299, %p300
      %p302 = scmp.ne.s32.totalorder %s293, %s294
      %p303 = scmp.eq.s32.totalorder %s50, 0
      %p304 = por %p302, %p303
      %p305 = scmp.ne.s32.totalorder %s293, %s294
      %p306 = scmp.eq.s32.totalorder %s51, 3
      %p307 = por %p305, %p306
      %p309 = scmp.ne.s32.totalorder %s294, %s308
      %p310 = scmp.eq.s32.totalorder %s51, 0
      %p311 = por %p309, %p310
      %s313 = sadd.s32 %s312, 1
      %p316 = scmp.eq.s32.totalorder %s45, 3
      %p317 = scmp.ne.s32.totalorder %s312, %s314
      %p318 = scmp.eq.s32.totalorder %s45, 0
      %p319 = por %p317, %p318
      %p320 = scmp.ne.s32.totalorder %s312, %s314
      %p321 = scmp.eq.s32.totalorder %s50, 3
      %p322 = por %p320, %p321
      %p323 = scmp.ne.s32.totalorder %s314, %s315
      %p324 = scmp.eq.s32.totalorder %s50, 0
      %p325 = por %p323, %p324
      %p326 = scmp.ne.s32.totalorder %s314, %s315
      %p327 = scmp.eq.s32.totalorder %s51, 3
      %p328 = por %p326, %p327
      %p330 = scmp.ne.s32.totalorder %s315, %s329
      %p331 = scmp.eq.s32.totalorder %s51, 0
      %p332 = por %p330, %p331
      %s334 = sadd.s32 %s333, 1
      %p337 = scmp.eq.s32.totalorder %s45, 3
      %p338 = scmp.ne.s32.totalorder %s333, %s335
      %p339 = scmp.eq.s32.totalorder %s45, 0
      %p340 = por %p338, %p339
      %p341 = scmp.ne.s32.totalorder %s333, %s335
      %p342 = scmp.eq.s32.totalorder %s50, 3
      %p343 = por %p341, %p342
      %p344 = scmp.ne.s32.totalorder %s335, %s336
      %p345 = scmp.eq.s32.totalorder %s50, 0
      %p346 = por %p344, %p345
      %p347 = scmp.ne.s32.totalorder %s335, %s336
      %p348 = scmp.eq.s32.totalorder %s51, 3
      %p349 = por %p347, %p348
      %p351 = scmp.ne.s32.totalorder %s336, %s350
      %p352 = scmp.eq.s32.totalorder %s51, 0
      %p353 = por %p351, %p352
      %s355 = sadd.s32 %s354, 1
      %p358 = scmp.eq.s32.totalorder %s45, 3
      %p359 = scmp.ne.s32.totalorder %s354, %s356
      %p360 = scmp.eq.s32.totalorder %s45, 0
      %p361 = por %p359, %p360
      %p362 = scmp.ne.s32.totalorder %s354, %s356
      %p363 = scmp.eq.s32.totalorder %s50, 3
      %p364 = por %p362, %p363
      %p365 = scmp.ne.s32.totalorder %s356, %s357
      %p366 = scmp.eq.s32.totalorder %s50, 0
      %p367 = por %p365, %p366
      %p368 = scmp.ne.s32.totalorder %s356, %s357
      %p369 = scmp.eq.s32.totalorder %s51, 3
      %p370 = por %p368, %p369
      %p372 = scmp.ne.s32.totalorder %s357, %s371
      %p373 = scmp.eq.s32.totalorder %s51, 0
      %p374 = por %p372, %p373
      %s376 = sadd.s32 %s375, 1
      %p379 = scmp.eq.s32.totalorder %s45, 3
      %p380 = scmp.ne.s32.totalorder %s375, %s377
      %p381 = scmp.eq.s32.totalorder %s45, 0
      %p382 = por %p380, %p381
      %p383 = scmp.ne.s32.totalorder %s375, %s377
      %p384 = scmp.eq.s32.totalorder %s50, 3
      %p385 = por %p383, %p384
      %p386 = scmp.ne.s32.totalorder %s377, %s378
      %p387 = scmp.eq.s32.totalorder %s50, 0
      %p388 = por %p386, %p387
      %p389 = scmp.ne.s32.totalorder %s377, %s378
      %p390 = scmp.eq.s32.totalorder %s51, 3
      %p391 = por %p389, %p390
      %p393 = scmp.ne.s32.totalorder %s378, %s392
      %p394 = scmp.eq.s32.totalorder %s51, 0
      %p395 = por %p393, %p394
      %s397 = sadd.s32 %s396, 1
      %p400 = scmp.eq.s32.totalorder %s45, 3
      %p401 = scmp.ne.s32.totalorder %s396, %s398
      %p402 = scmp.eq.s32.totalorder %s45, 0
      %p403 = por %p401, %p402
      %p404 = scmp.ne.s32.totalorder %s396, %s398
      %p405 = scmp.eq.s32.totalorder %s50, 3
      %p406 = por %p404, %p405
      %p407 = scmp.ne.s32.totalorder %s398, %s399
      %p408 = scmp.eq.s32.totalorder %s50, 0
      %p409 = por %p407, %p408
      %p410 = scmp.ne.s32.totalorder %s398, %s399
      %p411 = scmp.eq.s32.totalorder %s51, 3
      %p412 = por %p410, %p411
      %p414 = scmp.ne.s32.totalorder %s399, %s413
      %p415 = scmp.eq.s32.totalorder %s51, 0
      %p416 = por %p414, %p415
      %s418 = sadd.s32 %s417, 1
      %p421 = scmp.eq.s32.totalorder %s45, 3
      %p422 = scmp.ne.s32.totalorder %s417, %s419
      %p423 = scmp.eq.s32.totalorder %s45, 0
      %p424 = por %p422, %p423
      %p425 = scmp.ne.s32.totalorder %s417, %s419
      %p426 = scmp.eq.s32.totalorder %s50, 3
      %p427 = por %p425, %p426
      %p428 = scmp.ne.s32.totalorder %s419, %s420
      %p429 = scmp.eq.s32.totalorder %s50, 0
      %p430 = por %p428, %p429
      %p431 = scmp.ne.s32.totalorder %s419, %s420
      %p432 = scmp.eq.s32.totalorder %s51, 3
      %p433 = por %p431, %p432
      %p435 = scmp.ne.s32.totalorder %s420, %s434
      %p436 = scmp.eq.s32.totalorder %s51, 0
      %p437 = por %p435, %p436
      %s439 = sadd.s32 %s438, 1
      %p442 = scmp.eq.s32.totalorder %s45, 3
      %p443 = scmp.ne.s32.totalorder %s438, %s440
      %p444 = scmp.eq.s32.totalorder %s45, 0
      %p445 = por %p443, %p444
      %p446 = scmp.ne.s32.totalorder %s438, %s440
      %p447 = scmp.eq.s32.totalorder %s50, 3
      %p448 = por %p446, %p447
      %p449 = scmp.ne.s32.totalorder %s440, %s441
      %p450 = scmp.eq.s32.totalorder %s50, 0
      %p451 = por %p449, %p450
      %p452 = scmp.ne.s32.totalorder %s440, %s441
      %p453 = scmp.eq.s32.totalorder %s51, 3
      %p454 = por %p452, %p453
      %p456 = scmp.ne.s32.totalorder %s441, %s455
      %p457 = scmp.eq.s32.totalorder %s51, 0
      %p458 = por %p456, %p457
      %s460 = sadd.s32 %s459, 1
      %p463 = scmp.eq.s32.totalorder %s45, 3
      %p464 = scmp.ne.s32.totalorder %s459, %s461
      %p465 = scmp.eq.s32.totalorder %s45, 0
      %p466 = por %p464, %p465
      %p467 = scmp.ne.s32.totalorder %s459, %s461
      %p468 = scmp.eq.s32.totalorder %s50, 3
      %p469 = por %p467, %p468
      %p470 = scmp.ne.s32.totalorder %s461, %s462
      %p471 = scmp.eq.s32.totalorder %s50, 0
      %p472 = por %p470, %p471
      %p473 = scmp.ne.s32.totalorder %s461, %s462
      %p474 = scmp.eq.s32.totalorder %s51, 3
      %p475 = por %p473, %p474
      %p477 = scmp.ne.s32.totalorder %s462, %s476
      %p478 = scmp.eq.s32.totalorder %s51, 0
      %p479 = por %p477, %p478
      %s481 = sadd.s32 %s480, 1
      %p484 = scmp.eq.s32.totalorder %s45, 3
      %p485 = scmp.ne.s32.totalorder %s480, %s482
      %p486 = scmp.eq.s32.totalorder %s45, 0
      %p487 = por %p485, %p486
      %p488 = scmp.ne.s32.totalorder %s480, %s482
      %p489 = scmp.eq.s32.totalorder %s50, 3
      %p490 = por %p488, %p489
      %p491 = scmp.ne.s32.totalorder %s482, %s483
      %p492 = scmp.eq.s32.totalorder %s50, 0
      %p493 = por %p491, %p492
      %p494 = scmp.ne.s32.totalorder %s482, %s483
      %p495 = scmp.eq.s32.totalorder %s51, 3
      %p496 = por %p494, %p495
      %p498 = scmp.ne.s32.totalorder %s483, %s497
      %p499 = scmp.eq.s32.totalorder %s51, 0
      %p500 = por %p498, %p499
      %s502 = sadd.s32 %s501, 1
      %p505 = scmp.eq.s32.totalorder %s45, 3
      %p506 = scmp.ne.s32.totalorder %s501, %s503
      %p507 = scmp.eq.s32.totalorder %s45, 0
      %p508 = por %p506, %p507
      %p509 = scmp.ne.s32.totalorder %s501, %s503
      %p510 = scmp.eq.s32.totalorder %s50, 3
      %p511 = por %p509, %p510
      %p512 = scmp.ne.s32.totalorder %s503, %s504
      %p513 = scmp.eq.s32.totalorder %s50, 0
      %p514 = por %p512, %p513
      %p515 = scmp.ne.s32.totalorder %s503, %s504
      %p516 = scmp.eq.s32.totalorder %s51, 3
      %p517 = por %p515, %p516
      %p519 = scmp.ne.s32.totalorder %s504, %s518
      %p520 = scmp.eq.s32.totalorder %s51, 0
      %p521 = por %p519, %p520
      %s523 = sadd.s32 %s522, 1
      %p526 = scmp.eq.s32.totalorder %s45, 3
      %p527 = scmp.ne.s32.totalorder %s522, %s524
      %p528 = scmp.eq.s32.totalorder %s45, 0
      %p529 = por %p527, %p528
      %p530 = scmp.ne.s32.totalorder %s522, %s524
      %p531 = scmp.eq.s32.totalorder %s50, 3
      %p532 = por %p530, %p531
      %p533 = scmp.ne.s32.totalorder %s524, %s525
      %p534 = scmp.eq.s32.totalorder %s50, 0
      %p535 = por %p533, %p534
      %p536 = scmp.ne.s32.totalorder %s524, %s525
      %p537 = scmp.eq.s32.totalorder %s51, 3
      %p538 = por %p536, %p537
      %p540 = scmp.ne.s32.totalorder %s525, %s539
      %p541 = scmp.eq.s32.totalorder %s51, 0
      %p542 = por %p540, %p541
      %p543 = scmp.le.s32.totalorder 1, %s45
      %p544 = scmp.lt.s32.totalorder %s45, 5
      %p545 = pnand %p543, %p544
      %p546 = pneg %p545
      // Predicated region
      $region9: #{adapter_classification_forward.1} parent=5 // pred_check
        _
      $region10: #{adapter_classification_forward.1} parent=5 // pred_check_branch
        %548 = sbr.rel (%p545) target = $region12
      $region11: #{adapter_classification_forward.1} parent=5 // pred_region
        %s549 = ssub.s32 %s45, 1
        // Predicated region
        $region13: #{adapter_classification_forward.1} parent=11 // pred_check
          %p550 = pneg %p94
        $region14: #{adapter_classification_forward.1} parent=11 // pred_check_branch
          %552 = sbr.rel (%p550) target = $region16
        $region15: #{adapter_classification_forward.1} parent=11 // pred_region
          _
        $region16: #{adapter_classification_forward.1} parent=11 // pred_fallthru
          _
        // Predicated region
        $region17: #{adapter_classification_forward.1} parent=11 // pred_check
          %p553 = pneg %p115
        $region18: #{adapter_classification_forward.1} parent=11 // pred_check_branch
          %555 = sbr.rel (%p553) target = $region20
        $region19: #{adapter_classification_forward.1} parent=11 // pred_region
          _
        $region20: #{adapter_classification_forward.1} parent=11 // pred_fallthru
          _
        // Predicated region
        $region21: #{adapter_classification_forward.1} parent=11 // pred_check
          %p556 = pneg %p136
        $region22: #{adapter_classification_forward.1} parent=11 // pred_check_branch
          %558 = sbr.rel (%p556) target = $region24
        $region23: #{adapter_classification_forward.1} parent=11 // pred_region
          _
        $region24: #{adapter_classification_forward.1} parent=11 // pred_fallthru
          _
        // Predicated region
        $region25: #{adapter_classification_forward.1} parent=11 // pred_check
          %p559 = pneg %p157
        $region26: #{adapter_classification_forward.1} parent=11 // pred_check_branch
          %561 = sbr.rel (%p559) target = $region28
        $region27: #{adapter_classification_forward.1} parent=11 // pred_region
          _
        $region28: #{adapter_classification_forward.1} parent=11 // pred_fallthru
          _
        // Predicated region
        $region29: #{adapter_classification_forward.1} parent=11 // pred_check
          %p562 = pneg %p178
        $region30: #{adapter_classification_forward.1} parent=11 // pred_check_branch
          %564 = sbr.rel (%p562) target = $region32
        $region31: #{adapter_classification_forward.1} parent=11 // pred_region
          %s566 = ssub.s32 96, 96
          %567 = vsyncadd [#allocation9], %s566
          %s569 = sshll.u32 [#allocation8], 4
          %s570 = int_to_ptr.vmem [resolvable:$true] %s569
          %572 = dma.hbm_to_vmem [thread:$0]  %s6, 96, %s570, [#allocation9]
        $region32: #{adapter_classification_forward.1} parent=11 // pred_fallthru
          _
        // Predicated region
        $region33: #{adapter_classification_forward.1} parent=11 // pred_check
          %p573 = pneg %p199
        $region34: #{adapter_classification_forward.1} parent=11 // pred_check_branch
          %575 = sbr.rel (%p573) target = $region36
        $region35: #{adapter_classification_forward.1} parent=11 // pred_region
          _
        $region36: #{adapter_classification_forward.1} parent=11 // pred_fallthru
          _
        // Predicated region
        $region37: #{adapter_classification_forward.1} parent=11 // pred_check
          %p576 = pneg %p220
        $region38: #{adapter_classification_forward.1} parent=11 // pred_check_branch
          %578 = sbr.rel (%p576) target = $region40
        $region39: #{adapter_classification_forward.1} parent=11 // pred_region
          %s580 = ssub.s32 48, 48
          %581 = vsyncadd [#allocation11], %s580
          %s583 = sshll.u32 [#allocation10], 4
          %s584 = int_to_ptr.vmem [resolvable:$true] %s583
          %586 = dma.hbm_to_vmem [thread:$0]  %s8, 48, %s584, [#allocation11]
        $region40: #{adapter_classification_forward.1} parent=11 // pred_fallthru
          _
        // Predicated region
        $region41: #{adapter_classification_forward.1} parent=11 // pred_check
          %p587 = pneg %p241
        $region42: #{adapter_classification_forward.1} parent=11 // pred_check_branch
          %589 = sbr.rel (%p587) target = $region44
        $region43: #{adapter_classification_forward.1} parent=11 // pred_region
          _
        $region44: #{adapter_classification_forward.1} parent=11 // pred_fallthru
          _
        // Predicated region
        $region45: #{adapter_classification_forward.1} parent=11 // pred_check
          %p590 = pneg %p262
        $region46: #{adapter_classification_forward.1} parent=11 // pred_check_branch
          %592 = sbr.rel (%p590) target = $region48
        $region47: #{adapter_classification_forward.1} parent=11 // pred_region
          %s594 = ssub.s32 32, 32
          %595 = vsyncadd [#allocation11], %s594
          %s597 = sshll.u32 [#allocation12], 4
          %s598 = int_to_ptr.vmem [resolvable:$true] %s597
          %600 = dma.hbm_to_vmem [thread:$0]  %s10, 32, %s598, [#allocation11]
        $region48: #{adapter_classification_forward.1} parent=11 // pred_fallthru
          _
        // Predicated region
        $region49: #{adapter_classification_forward.1} parent=11 // pred_check
          %p601 = pneg %p283
        $region50: #{adapter_classification_forward.1} parent=11 // pred_check_branch
          %603 = sbr.rel (%p601) target = $region52
        $region51: #{adapter_classification_forward.1} parent=11 // pred_region
          _
        $region52: #{adapter_classification_forward.1} parent=11 // pred_fallthru
          _
        // Predicated region
        $region53: #{adapter_classification_forward.1} parent=11 // pred_check
          %p604 = pneg %p304
        $region54: #{adapter_classification_forward.1} parent=11 // pred_check_branch
          %606 = sbr.rel (%p604) target = $region56
        $region55: #{adapter_classification_forward.1} parent=11 // pred_region
          %s608 = ssub.s32 16, 16
          %609 = vsyncadd [#allocation14], %s608
          %s611 = sshll.u32 [#allocation13], 4
          %s612 = int_to_ptr.vmem [resolvable:$true] %s611
          %614 = dma.hbm_to_vmem [thread:$0]  %s12, 16, %s612, [#allocation14]
        $region56: #{adapter_classification_forward.1} parent=11 // pred_fallthru
          _
        // Predicated region
        $region57: #{adapter_classification_forward.1} parent=11 // pred_check
          %p615 = pneg %p325
        $region58: #{adapter_classification_forward.1} parent=11 // pred_check_branch
          %617 = sbr.rel (%p615) target = $region60
        $region59: #{adapter_classification_forward.1} parent=11 // pred_region
          _
        $region60: #{adapter_classification_forward.1} parent=11 // pred_fallthru
          _
        // Predicated region
        $region61: #{adapter_classification_forward.1} parent=11 // pred_check
          %p618 = pneg %p346
        $region62: #{adapter_classification_forward.1} parent=11 // pred_check_branch
          %620 = sbr.rel (%p618) target = $region64
        $region63: #{adapter_classification_forward.1} parent=11 // pred_region
          %s622 = ssub.s32 16, 16
          %623 = vsyncadd [#allocation14], %s622
          %s625 = sshll.u32 [#allocation15], 4
          %s626 = int_to_ptr.vmem [resolvable:$true] %s625
          %628 = dma.hbm_to_vmem [thread:$0]  %s14, 16, %s626, [#allocation14]
        $region64: #{adapter_classification_forward.1} parent=11 // pred_fallthru
          _
        // Predicated region
        $region65: #{adapter_classification_forward.1} parent=11 // pred_check
          %p629 = pneg %p367
        $region66: #{adapter_classification_forward.1} parent=11 // pred_check_branch
          %631 = sbr.rel (%p629) target = $region68
        $region67: #{adapter_classification_forward.1} parent=11 // pred_region
          _
        $region68: #{adapter_classification_forward.1} parent=11 // pred_fallthru
          _
        // Predicated region
        $region69: #{adapter_classification_forward.1} parent=11 // pred_check
          %p632 = pneg %p388
        $region70: #{adapter_classification_forward.1} parent=11 // pred_check_branch
          %634 = sbr.rel (%p632) target = $region72
        $region71: #{adapter_classification_forward.1} parent=11 // pred_region
          %s636 = ssub.s32 16, 16
          %637 = vsyncadd [#allocation17], %s636
          %s639 = sshll.u32 [#allocation16], 4
          %s640 = int_to_ptr.vmem [resolvable:$true] %s639
          %642 = dma.hbm_to_vmem [thread:$0]  %s16, 16, %s640, [#allocation17]
        $region72: #{adapter_classification_forward.1} parent=11 // pred_fallthru
          _
        // Predicated region
        $region73: #{adapter_classification_forward.1} parent=11 // pred_check
          %p643 = pneg %p409
        $region74: #{adapter_classification_forward.1} parent=11 // pred_check_branch
          %645 = sbr.rel (%p643) target = $region76
        $region75: #{adapter_classification_forward.1} parent=11 // pred_region
          _
        $region76: #{adapter_classification_forward.1} parent=11 // pred_fallthru
          _
        // Predicated region
        $region77: #{adapter_classification_forward.1} parent=11 // pred_check
          %p646 = pneg %p430
        $region78: #{adapter_classification_forward.1} parent=11 // pred_check_branch
          %648 = sbr.rel (%p646) target = $region80
        $region79: #{adapter_classification_forward.1} parent=11 // pred_region
          _
        $region80: #{adapter_classification_forward.1} parent=11 // pred_fallthru
          _
        // Predicated region
        $region81: #{adapter_classification_forward.1} parent=11 // pred_check
          %p649 = pneg %p451
        $region82: #{adapter_classification_forward.1} parent=11 // pred_check_branch
          %651 = sbr.rel (%p649) target = $region84
        $region83: #{adapter_classification_forward.1} parent=11 // pred_region
          _
        $region84: #{adapter_classification_forward.1} parent=11 // pred_fallthru
          _
        // Predicated region
        $region85: #{adapter_classification_forward.1} parent=11 // pred_check
          %p652 = pneg %p472
        $region86: #{adapter_classification_forward.1} parent=11 // pred_check_branch
          %654 = sbr.rel (%p652) target = $region88
        $region87: #{adapter_classification_forward.1} parent=11 // pred_region
          _
        $region88: #{adapter_classification_forward.1} parent=11 // pred_fallthru
          _
        // Predicated region
        $region89: #{adapter_classification_forward.1} parent=11 // pred_check
          %p655 = pneg %p493
        $region90: #{adapter_classification_forward.1} parent=11 // pred_check_branch
          %657 = sbr.rel (%p655) target = $region92
        $region91: #{adapter_classification_forward.1} parent=11 // pred_region
          _
        $region92: #{adapter_classification_forward.1} parent=11 // pred_fallthru
          _
        // Predicated region
        $region93: #{adapter_classification_forward.1} parent=11 // pred_check
          %p658 = pneg %p514
        $region94: #{adapter_classification_forward.1} parent=11 // pred_check_branch
          %660 = sbr.rel (%p658) target = $region96
        $region95: #{adapter_classification_forward.1} parent=11 // pred_region
          _
        $region96: #{adapter_classification_forward.1} parent=11 // pred_fallthru
          _
      $region12: #{adapter_classification_forward.1} parent=5 // pred_fallthru
        _
      %p661 = scmp.lt.s32.totalorder %s45, 4
      // Predicated region
      $region97: #{adapter_classification_forward.1} parent=5 // pred_check
        %p662 = pneg %p661
      $region98: #{adapter_classification_forward.1} parent=5 // pred_check_branch
        %664 = sbr.rel (%p662) target = $region100
      $region99: #{adapter_classification_forward.1} parent=5 // pred_region
        // Predicated region
        $region101: #{adapter_classification_forward.1} parent=99 // pred_check
          %p665 = pneg %p67
        $region102: #{adapter_classification_forward.1} parent=99 // pred_check_branch
          %667 = sbr.rel (%p665) target = $region104
        $region103: #{adapter_classification_forward.1} parent=99 // pred_region
          %s668 = sld [smem:[#allocation4 + %s45]]
          %p669 = scmp.lt.s32.totalorder %s668, 6
          %s670 = scalar_select %p669, %s668, 6
          %s671 = smul.addr %s670, 16
          %s672 = smul.addr %s671, 4
          %s673 = scalar_lea.vmem %s1, %s672
          %s674 = sld [smem:[#allocation4 + %s45]]
        $region104: #{adapter_classification_forward.1} parent=99 // pred_fallthru
          _
      $region100: #{adapter_classification_forward.1} parent=5 // pred_fallthru
        _
      %p675 = scmp.le.s32.totalorder 1, %s45
      %p676 = scmp.lt.s32.totalorder %s45, 5
      %p677 = pnand %p675, %p676
      %p678 = pneg %p677
      // Predicated region
      $region105: #{adapter_classification_forward.1} parent=5 // pred_check
        _
      $region106: #{adapter_classification_forward.1} parent=5 // pred_check_branch
        %680 = sbr.rel (%p677) target = $region108
      $region107: #{adapter_classification_forward.1} parent=5 // pred_region
        %s681 = ssub.s32 %s45, 1
        // Predicated region
        $region109: #{adapter_classification_forward.1} parent=107 // pred_check
          %p682 = pneg %p178
        $region110: #{adapter_classification_forward.1} parent=107 // pred_check_branch
          %684 = sbr.rel (%p682) target = $region112
        $region111: #{adapter_classification_forward.1} parent=107 // pred_region
          %685 = dma.done [#allocation9], 96
        $region112: #{adapter_classification_forward.1} parent=107 // pred_fallthru
          _
        // Predicated region
        $region113: #{adapter_classification_forward.1} parent=107 // pred_check
          %p686 = pneg %p220
        $region114: #{adapter_classification_forward.1} parent=107 // pred_check_branch
          %688 = sbr.rel (%p686) target = $region116
        $region115: #{adapter_classification_forward.1} parent=107 // pred_region
          %689 = dma.done [#allocation11], 48
        $region116: #{adapter_classification_forward.1} parent=107 // pred_fallthru
          _
        // Predicated region
        $region117: #{adapter_classification_forward.1} parent=107 // pred_check
          %p690 = pneg %p262
        $region118: #{adapter_classification_forward.1} parent=107 // pred_check_branch
          %692 = sbr.rel (%p690) target = $region120
        $region119: #{adapter_classification_forward.1} parent=107 // pred_region
          %693 = dma.done [#allocation11], 32
        $region120: #{adapter_classification_forward.1} parent=107 // pred_fallthru
          _
        // Predicated region
        $region121: #{adapter_classification_forward.1} parent=107 // pred_check
          %p694 = pneg %p304
        $region122: #{adapter_classification_forward.1} parent=107 // pred_check_branch
          %696 = sbr.rel (%p694) target = $region124
        $region123: #{adapter_classification_forward.1} parent=107 // pred_region
          %697 = dma.done [#allocation14], 16
        $region124: #{adapter_classification_forward.1} parent=107 // pred_fallthru
          _
        // Predicated region
        $region125: #{adapter_classification_forward.1} parent=107 // pred_check
          %p698 = pneg %p346
        $region126: #{adapter_classification_forward.1} parent=107 // pred_check_branch
          %700 = sbr.rel (%p698) target = $region128
        $region127: #{adapter_classification_forward.1} parent=107 // pred_region
          %701 = dma.done [#allocation14], 16
        $region128: #{adapter_classification_forward.1} parent=107 // pred_fallthru
          _
        // Predicated region
        $region129: #{adapter_classification_forward.1} parent=107 // pred_check
          %p702 = pneg %p388
        $region130: #{adapter_classification_forward.1} parent=107 // pred_check_branch
          %704 = sbr.rel (%p702) target = $region132
        $region131: #{adapter_classification_forward.1} parent=107 // pred_region
          %705 = dma.done [#allocation17], 16
        $region132: #{adapter_classification_forward.1} parent=107 // pred_fallthru
          _
        %s706 = sld [smem:[#allocation4 + %s50]]
        %p707 = scmp.lt.s32.totalorder %s706, 6
        %s708 = scalar_select %p707, %s706, 6
        %s709 = smul.addr %s708, 16
        %s710 = smul.addr %s709, 4
        %s711 = scalar_lea.vmem %s1, %s710
        %p712 = pneg %p73
        %p713 = pneg %p70
        %p714 = pneg %p94
        %p715 = pneg %p91
        %p716 = pneg %p115
        %p717 = pneg %p112
        %p718 = pneg %p136
        %p719 = pneg %p133
        %p720 = pneg %p157
        %p721 = pneg %p154
        %p722 = pneg %p178
        %p723 = pneg %p175
        %p724 = pneg %p199
        %p725 = pneg %p196
        %p726 = pneg %p220
        %p727 = pneg %p217
        %p728 = pneg %p241
        %p729 = pneg %p238
        %p730 = pneg %p262
        %p731 = pneg %p259
        %p732 = pneg %p283
        %p733 = pneg %p280
        %p734 = pneg %p304
        %p735 = pneg %p301
        %p736 = pneg %p325
        %p737 = pneg %p322
        %p738 = pneg %p346
        %p739 = pneg %p343
        %p740 = pneg %p367
        %p741 = pneg %p364
        %p742 = pneg %p388
        %p743 = pneg %p385
        %p744 = pneg %p409
        %p745 = pneg %p406
        %p746 = pneg %p430
        %p747 = pneg %p427
        %p748 = pneg %p451
        %p749 = pneg %p448
        %p750 = pneg %p472
        %p751 = pneg %p469
        %p752 = pneg %p493
        %p753 = pneg %p490
        %p754 = pneg %p514
        %p755 = pneg %p511
        %p756 = pneg %p535
        %p757 = pneg %p532
        %s758 = sld [smem:[#allocation4 + %s50]]
        %p759 = scmp.lt.s32.totalorder %s758, 6
        %s760 = scalar_select %p759, %s758, 6
        %s761 = smul.addr %s760, 16
        %s762 = smul.addr %s761, 4
        %s763 = scalar_lea.vmem %s1, %s762
        %s764 = sld [smem:[#allocation4 + %s50]]
        %p766 = scmp.eq.s32.totalorder %s50, 0
        // Predicated region
        $region133: #{adapter_classification_forward.1} parent=107 // pred_check
          %p767 = pneg %p766
        $region134: #{adapter_classification_forward.1} parent=107 // pred_check_branch
          %769 = sbr.rel (%p767) target = $region136
        $region135: #{adapter_classification_forward.1} parent=107 // pred_region
          %vm770 = vcmask 261120
          %771 = vst.msk [vmem:[#allocation2] sm:$0xff] %vm770, 0.0
          %772 = vst.msk [vmem:[#allocation2 + $0x8] sm:$0xff] %vm770, 0.0
          %773 = vst.msk [vmem:[#allocation2 + $0x10] sm:$0xff] %vm770, 0.0
          %774 = vst.msk [vmem:[#allocation2 + $0x18] sm:$0xff] %vm770, 0.0
          %775 = vst.msk [vmem:[#allocation2 + $0x20] sm:$0xff] %vm770, 0.0
          %776 = vst.msk [vmem:[#allocation2 + $0x28] sm:$0xff] %vm770, 0.0
          %777 = vst.msk [vmem:[#allocation2 + $0x30] sm:$0xff] %vm770, 0.0
          %778 = vst.msk [vmem:[#allocation2 + $0x38] sm:$0xff] %vm770, 0.0
          %779 = vst.msk [vmem:[#allocation2 + $0x40] sm:$0xff] %vm770, 0.0
          %780 = vst.msk [vmem:[#allocation2 + $0x48] sm:$0xff] %vm770, 0.0
          %781 = vst.msk [vmem:[#allocation2 + $0x50] sm:$0xff] %vm770, 0.0
          %782 = vst.msk [vmem:[#allocation2 + $0x58] sm:$0xff] %vm770, 0.0
          %783 = vst.msk [vmem:[#allocation2 + $0x60] sm:$0xff] %vm770, 0.0
          %784 = vst.msk [vmem:[#allocation2 + $0x68] sm:$0xff] %vm770, 0.0
          %785 = vst.msk [vmem:[#allocation2 + $0x70] sm:$0xff] %vm770, 0.0
          %786 = vst.msk [vmem:[#allocation2 + $0x78] sm:$0xff] %vm770, 0.0
        $region136: #{adapter_classification_forward.1} parent=107 // pred_fallthru
          _
        %v787 = vld [vmem:[#allocation2] sm:$0xff]
        %v788 = vld [vmem:[#allocation2 + $0x8] sm:$0xff]
        %v789 = vld [vmem:[#allocation2 + $0x10] sm:$0xff]
        %v790 = vld [vmem:[#allocation2 + $0x18] sm:$0xff]
        %v791 = vld [vmem:[#allocation2 + $0x20] sm:$0xff]
        %v792 = vld [vmem:[#allocation2 + $0x28] sm:$0xff]
        %v793 = vld [vmem:[#allocation2 + $0x30] sm:$0xff]
        %v794 = vld [vmem:[#allocation2 + $0x38] sm:$0xff]
        %v795 = vld [vmem:[#allocation2 + $0x40] sm:$0xff]
        %v796 = vld [vmem:[#allocation2 + $0x48] sm:$0xff]
        %v797 = vld [vmem:[#allocation2 + $0x50] sm:$0xff]
        %v798 = vld [vmem:[#allocation2 + $0x58] sm:$0xff]
        %v799 = vld [vmem:[#allocation2 + $0x60] sm:$0xff]
        %v800 = vld [vmem:[#allocation2 + $0x68] sm:$0xff]
        %v801 = vld [vmem:[#allocation2 + $0x70] sm:$0xff]
        %v802 = vld [vmem:[#allocation2 + $0x78] sm:$0xff]
        %v803 = vld [vmem:[%s763] sm:$0xf]
        %v804 = vld [vmem:[%s763 + $0x4] sm:$0xf]
        %v805 = vld [vmem:[%s763 + $0x8] sm:$0xf]
        %v806 = vld [vmem:[%s763 + $0xc] sm:$0xf]
        %v807 = vld [vmem:[%s763 + $0x10] sm:$0xf]
        %v808 = vld [vmem:[%s763 + $0x14] sm:$0xf]
        %v809 = vld [vmem:[%s763 + $0x18] sm:$0xf]
        %v810 = vld [vmem:[%s763 + $0x1c] sm:$0xf]
        %v811 = vld [vmem:[%s763 + $0x20] sm:$0xf]
        %v812 = vld [vmem:[%s763 + $0x24] sm:$0xf]
        %v813 = vld [vmem:[%s763 + $0x28] sm:$0xf]
        %v814 = vld [vmem:[%s763 + $0x2c] sm:$0xf]
        %v815 = vld [vmem:[%s763 + $0x30] sm:$0xf]
        %v816 = vld [vmem:[%s763 + $0x34] sm:$0xf]
        %v817 = vld [vmem:[%s763 + $0x38] sm:$0xf]
        %v818 = vld [vmem:[%s763 + $0x3c] sm:$0xf]
        %v819 = vunpack.c.l.bf16 %v803
        %v820 = vunpack.c.l.bf16 %v804
        %v821 = vunpack.c.l.bf16 %v805
        %v822 = vunpack.c.l.bf16 %v806
        %v823 = vunpack.c.l.bf16 %v807
        %v824 = vunpack.c.l.bf16 %v808
        %v825 = vunpack.c.l.bf16 %v809
        %v826 = vunpack.c.l.bf16 %v810
        %v827 = vunpack.c.l.bf16 %v811
        %v828 = vunpack.c.l.bf16 %v812
        %v829 = vunpack.c.l.bf16 %v813
        %v830 = vunpack.c.l.bf16 %v814
        %v831 = vunpack.c.l.bf16 %v815
        %v832 = vunpack.c.l.bf16 %v816
        %v833 = vunpack.c.l.bf16 %v817
        %v834 = vunpack.c.l.bf16 %v818
        %v835 = vadd.f32 %v787, %v819
        %v836 = vadd.f32 %v788, %v820
        %v837 = vadd.f32 %v789, %v821
        %v838 = vadd.f32 %v790, %v822
        %v839 = vadd.f32 %v791, %v823
        %v840 = vadd.f32 %v792, %v824
        %v841 = vadd.f32 %v793, %v825
        %v842 = vadd.f32 %v794, %v826
        %v843 = vadd.f32 %v795, %v827
        %v844 = vadd.f32 %v796, %v828
        %v845 = vadd.f32 %v797, %v829
        %v846 = vadd.f32 %v798, %v830
        %v847 = vadd.f32 %v799, %v831
        %v848 = vadd.f32 %v800, %v832
        %v849 = vadd.f32 %v801, %v833
        %v850 = vadd.f32 %v802, %v834
        %vm851 = vcmask 261120
        %852 = vst.msk [vmem:[#allocation2] sm:$0xff] %vm851, %v835
        %853 = vst.msk [vmem:[#allocation2 + $0x8] sm:$0xff] %vm851, %v836
        %854 = vst.msk [vmem:[#allocation2 + $0x10] sm:$0xff] %vm851, %v837
        %855 = vst.msk [vmem:[#allocation2 + $0x18] sm:$0xff] %vm851, %v838
        %856 = vst.msk [vmem:[#allocation2 + $0x20] sm:$0xff] %vm851, %v839
        %857 = vst.msk [vmem:[#allocation2 + $0x28] sm:$0xff] %vm851, %v840
        %858 = vst.msk [vmem:[#allocation2 + $0x30] sm:$0xff] %vm851, %v841
        %859 = vst.msk [vmem:[#allocation2 + $0x38] sm:$0xff] %vm851, %v842
        %860 = vst.msk [vmem:[#allocation2 + $0x40] sm:$0xff] %vm851, %v843
        %861 = vst.msk [vmem:[#allocation2 + $0x48] sm:$0xff] %vm851, %v844
        %862 = vst.msk [vmem:[#allocation2 + $0x50] sm:$0xff] %vm851, %v845
        %863 = vst.msk [vmem:[#allocation2 + $0x58] sm:$0xff] %vm851, %v846
        %864 = vst.msk [vmem:[#allocation2 + $0x60] sm:$0xff] %vm851, %v847
        %865 = vst.msk [vmem:[#allocation2 + $0x68] sm:$0xff] %vm851, %v848
        %866 = vst.msk [vmem:[#allocation2 + $0x70] sm:$0xff] %vm851, %v849
        %867 = vst.msk [vmem:[#allocation2 + $0x78] sm:$0xff] %vm851, %v850
        %p868 = scmp.eq.s32.totalorder %s50, 3
        // Predicated region
        $region137: #{adapter_classification_forward.1} parent=107 // pred_check
          %p869 = pneg %p868
        $region138: #{adapter_classification_forward.1} parent=107 // pred_check_branch
          %871 = sbr.rel (%p869) target = $region140
        $region139: #{adapter_classification_forward.1} parent=107 // pred_region
          %v872 = vld [vmem:[#allocation2] sm:$0xff]
          %v873 = vld [vmem:[#allocation2 + $0x8] sm:$0xff]
          %v874 = vld [vmem:[#allocation2 + $0x10] sm:$0xff]
          %v875 = vld [vmem:[#allocation2 + $0x18] sm:$0xff]
          %v876 = vld [vmem:[#allocation2 + $0x20] sm:$0xff]
          %v877 = vld [vmem:[#allocation2 + $0x28] sm:$0xff]
          %v878 = vld [vmem:[#allocation2 + $0x30] sm:$0xff]
          %v879 = vld [vmem:[#allocation2 + $0x38] sm:$0xff]
          %v880 = vld [vmem:[#allocation2 + $0x40] sm:$0xff]
          %v881 = vld [vmem:[#allocation2 + $0x48] sm:$0xff]
          %v882 = vld [vmem:[#allocation2 + $0x50] sm:$0xff]
          %v883 = vld [vmem:[#allocation2 + $0x58] sm:$0xff]
          %v884 = vld [vmem:[#allocation2 + $0x60] sm:$0xff]
          %v885 = vld [vmem:[#allocation2 + $0x68] sm:$0xff]
          %v886 = vld [vmem:[#allocation2 + $0x70] sm:$0xff]
          %v887 = vld [vmem:[#allocation2 + $0x78] sm:$0xff]
          %v888 = vpack.c.bf16 %v873, %v872
          %v889 = vpack.c.bf16 %v875, %v874
          %v890 = vpack.c.bf16 %v877, %v876
          %v891 = vpack.c.bf16 %v879, %v878
          %v892 = vpack.c.bf16 %v881, %v880
          %v893 = vpack.c.bf16 %v883, %v882
          %v894 = vpack.c.bf16 %v885, %v884
          %v895 = vpack.c.bf16 %v887, %v886
          %v896 = vld [vmem:[%s2] sm:$0xff]
          %v897 = vld [vmem:[%s2 + $0x8] sm:$0xff]
          %v898 = vld [vmem:[%s2 + $0x10] sm:$0xff]
          %v899 = vld [vmem:[%s2 + $0x18] sm:$0xff]
          %v900 = vld [vmem:[%s3] sm:$0x3]
          %v902 = vlaneseq
          %v903 = vshrl.u32 %v902, 7
          %v904 = vsub.s32 0, %v903
          %v905 = vrot.slane %v900, %v904
          %v906 = vlaneseq
          %v907 = vshrl.u32 %v906, 7
          %v908 = vsub.s32 1, %v907
          %v909 = vrot.slane %v900, %v908
          %v916 = vunpack.c.l.b16 %v896
          %v917 = vunpack.c.h.b16 %v896
          %v918 = vunpack.c.l.b16 %v897
          %v919 = vunpack.c.h.b16 %v897
          %v920 = vunpack.c.l.b16 %v898
          %v921 = vunpack.c.h.b16 %v898
          %v922 = vunpack.c.l.b16 %v899
          %v923 = vunpack.c.h.b16 %v899
          %v924 = vpack.c.b16 %v918, %v916
          %v925 = vpack.c.b16 %v919, %v917
          %v926 = vpack.c.b16 %v922, %v920
          %v927 = vpack.c.b16 %v923, %v921
          %v933 = vsel %vm851, %v888, 0
          %v936 = vsel %vm851, %v889, 0
          %v939 = vsel %vm851, %v890, 0
          %v942 = vsel %vm851, %v891, 0
          %v945 = vsel %vm851, %v892, 0
          %v948 = vsel %vm851, %v893, 0
          %v951 = vsel %vm851, %v894, 0
          %v954 = vsel %vm851, %v895, 0
          %956 = vmatprep.subr.bf16.mxu0 %v925
          %957 = vmatpush1.bf16.msra.mxu0 %v924
          %958 = vmatprep.subr.bf16.mxu0 %v927
          %959 = vmatpush1.bf16.msra.mxu0 %v926
          %960 = vmatprep.subr.bf16.mxu0 0
          %961 = vmatpush1.bf16.msra.mxu0 0
          %962 = vmatprep.subr.bf16.mxu0 0
          %963 = vmatpush1.bf16.msra.mxu0 0
          %964 = vmatprep.subr.bf16.mxu0 0
          %965 = vmatpush1.bf16.msra.mxu0 0
          %966 = vmatprep.subr.bf16.mxu0 0
          %967 = vmatpush1.bf16.msra.mxu0 0
          %968 = vmatprep.subr.bf16.mxu0 0
          %969 = vmatpush1.bf16.msra.mxu0 0
          %970 = vmatprep.subr.bf16.mxu0 0
          %971 = vmatpush1.bf16.msra.mxu0 0
          %972 = vmatprep.subr.bf16.mxu0 0
          %973 = vmatpush1.bf16.msra.mxu0 0
          %974 = vmatprep.subr.bf16.mxu0 0
          %975 = vmatpush1.bf16.msra.mxu0 0
          %976 = vmatprep.subr.bf16.mxu0 0
          %977 = vmatpush1.bf16.msra.mxu0 0
          %978 = vmatprep.subr.bf16.mxu0 0
          %979 = vmatpush1.bf16.msra.mxu0 0
          %980 = vmatprep.subr.bf16.mxu0 0
          %981 = vmatpush1.bf16.msra.mxu0 0
          %982 = vmatprep.subr.bf16.mxu0 0
          %983 = vmatpush1.bf16.msra.mxu0 0
          %984 = vmatprep.subr.bf16.mxu0 0
          %985 = vmatpush1.bf16.msra.mxu0 0
          %986 = vmatprep.subr.bf16.mxu0 0
          %987 = vmatpush1.bf16.msra.mxu0 0
          %988 = vmatprep.mubr.bf16.mxu0 0
          %989 = vmatmul.mubr.bf16.gmra.mrb[0].mxu0 %v933
          %v990 = vpop.f32.mrb[0].mxu0
          %v991 = vadd.f32 %v905, %v990
          %v992 = vpop.f32.mrb[0].mxu0
          %v993 = vadd.f32 %v909, %v992
          %v994 = vpop.f32.mrb[0].mxu0
          %v995 = vadd.f32 %v905, %v994
          %v996 = vpop.f32.mrb[0].mxu0
          %v997 = vadd.f32 %v909, %v996
          %998 = vmatprep.mubr.bf16.mxu0 0
          %999 = vmatmul.mubr.bf16.gmra.mrb[0].mxu0 %v936
          %v1000 = vpop.f32.mrb[0].mxu0
          %v1001 = vadd.f32 %v905, %v1000
          %v1002 = vpop.f32.mrb[0].mxu0
          %v1003 = vadd.f32 %v909, %v1002
          %v1004 = vpop.f32.mrb[0].mxu0
          %v1005 = vadd.f32 %v905, %v1004
          %v1006 = vpop.f32.mrb[0].mxu0
          %v1007 = vadd.f32 %v909, %v1006
          %1008 = vmatprep.mubr.bf16.mxu0 0
          %1009 = vmatmul.mubr.bf16.gmra.mrb[0].mxu0 %v939
          %v1010 = vpop.f32.mrb[0].mxu0
          %v1011 = vadd.f32 %v905, %v1010
          %v1012 = vpop.f32.mrb[0].mxu0
          %v1013 = vadd.f32 %v909, %v1012
          %v1014 = vpop.f32.mrb[0].mxu0
          %v1015 = vadd.f32 %v905, %v1014
          %v1016 = vpop.f32.mrb[0].mxu0
          %v1017 = vadd.f32 %v909, %v1016
          %1018 = vmatprep.mubr.bf16.mxu0 0
          %1019 = vmatmul.mubr.bf16.gmra.mrb[0].mxu0 %v942
          %v1020 = vpop.f32.mrb[0].mxu0
          %v1021 = vadd.f32 %v905, %v1020
          %v1022 = vpop.f32.mrb[0].mxu0
          %v1023 = vadd.f32 %v909, %v1022
          %v1024 = vpop.f32.mrb[0].mxu0
          %v1025 = vadd.f32 %v905, %v1024
          %v1026 = vpop.f32.mrb[0].mxu0
          %v1027 = vadd.f32 %v909, %v1026
          %1028 = vmatprep.mubr.bf16.mxu0 0
          %1029 = vmatmul.mubr.bf16.gmra.mrb[0].mxu0 %v945
          %v1030 = vpop.f32.mrb[0].mxu0
          %v1031 = vadd.f32 %v905, %v1030
          %v1032 = vpop.f32.mrb[0].mxu0
          %v1033 = vadd.f32 %v909, %v1032
          %v1034 = vpop.f32.mrb[0].mxu0
          %v1035 = vadd.f32 %v905, %v1034
          %v1036 = vpop.f32.mrb[0].mxu0
          %v1037 = vadd.f32 %v909, %v1036
          %1038 = vmatprep.mubr.bf16.mxu0 0
          %1039 = vmatmul.mubr.bf16.gmra.mrb[0].mxu0 %v948
          %v1040 = vpop.f32.mrb[0].mxu0
          %v1041 = vadd.f32 %v905, %v1040
          %v1042 = vpop.f32.mrb[0].mxu0
          %v1043 = vadd.f32 %v909, %v1042
          %v1044 = vpop.f32.mrb[0].mxu0
          %v1045 = vadd.f32 %v905, %v1044
          %v1046 = vpop.f32.mrb[0].mxu0
          %v1047 = vadd.f32 %v909, %v1046
          %1048 = vmatprep.mubr.bf16.mxu0 0
          %1049 = vmatmul.mubr.bf16.gmra.mrb[0].mxu0 %v951
          %v1050 = vpop.f32.mrb[0].mxu0
          %v1051 = vadd.f32 %v905, %v1050
          %v1052 = vpop.f32.mrb[0].mxu0
          %v1053 = vadd.f32 %v909, %v1052
          %v1054 = vpop.f32.mrb[0].mxu0
          %v1055 = vadd.f32 %v905, %v1054
          %v1056 = vpop.f32.mrb[0].mxu0
          %v1057 = vadd.f32 %v909, %v1056
          %1058 = vmatprep.mubr.bf16.mxu0 0
          %1059 = vmatmul.mubr.bf16.gmra.mrb[0].mxu0 %v954
          %v1060 = vpop.f32.mrb[0].mxu0
          %v1061 = vadd.f32 %v905, %v1060
          %v1062 = vpop.f32.mrb[0].mxu0
          %v1063 = vadd.f32 %v909, %v1062
          %v1064 = vpop.f32.mrb[0].mxu0
          %v1065 = vadd.f32 %v905, %v1064
          %v1066 = vpop.f32.mrb[0].mxu0
          %v1067 = vadd.f32 %v909, %v1066
          %1068 = vdwg.mxu0
          %v1069 = vtanh.pop %v991
          %v1070 = vtanh.pop %v993
          %v1071 = vtanh.pop %v995
          %v1072 = vtanh.pop %v997
          %v1073 = vtanh.pop %v1001
          %v1074 = vtanh.pop %v1003
          %v1075 = vtanh.pop %v1005
          %v1076 = vtanh.pop %v1007
          %v1077 = vtanh.pop %v1011
          %v1078 = vtanh.pop %v1013
          %v1079 = vtanh.pop %v1015
          %v1080 = vtanh.pop %v1017
          %v1081 = vtanh.pop %v1021
          %v1082 = vtanh.pop %v1023
          %v1083 = vtanh.pop %v1025
          %v1084 = vtanh.pop %v1027
          %v1085 = vtanh.pop %v1031
          %v1086 = vtanh.pop %v1033
          %v1087 = vtanh.pop %v1035
          %v1088 = vtanh.pop %v1037
          %v1089 = vtanh.pop %v1041
          %v1090 = vtanh.pop %v1043
          %v1091 = vtanh.pop %v1045
          %v1092 = vtanh.pop %v1047
          %v1093 = vtanh.pop %v1051
          %v1094 = vtanh.pop %v1053
          %v1095 = vtanh.pop %v1055
          %v1096 = vtanh.pop %v1057
          %v1097 = vtanh.pop %v1061
          %v1098 = vtanh.pop %v1063
          %v1099 = vtanh.pop %v1065
          %v1100 = vtanh.pop %v1067
          %v1101 = vld [vmem:[%s4] sm:$0xff]
          %v1102 = vpack.c.bf16 %v1071, %v1069
          %v1103 = vpack.c.bf16 %v1072, %v1070
          %v1104 = vpack.c.bf16 %v1075, %v1073
          %v1105 = vpack.c.bf16 %v1076, %v1074
          %v1106 = vpack.c.bf16 %v1079, %v1077
          %v1107 = vpack.c.bf16 %v1080, %v1078
          %v1108 = vpack.c.bf16 %v1083, %v1081
          %v1109 = vpack.c.bf16 %v1084, %v1082
          %v1110 = vpack.c.bf16 %v1087, %v1085
          %v1111 = vpack.c.bf16 %v1088, %v1086
          %v1112 = vpack.c.bf16 %v1091, %v1089
          %v1113 = vpack.c.bf16 %v1092, %v1090
          %v1114 = vpack.c.bf16 %v1095, %v1093
          %v1115 = vpack.c.bf16 %v1096, %v1094
          %v1116 = vpack.c.bf16 %v1099, %v1097
          %v1117 = vpack.c.bf16 %v1100, %v1098
          %v1119 = vunpack.c.l.b16 %v1101
          %v1120 = vunpack.c.h.b16 %v1101
          %v1121 = vpack.c.b16 %v1119, %v1119
          %v1122 = vpack.c.b16 %v1120, %v1120
          %1125 = vmatprep.subr.bf16.mxu0 %v1103
          %1126 = vmatpush1.bf16.xpose.msra.mxu0 %v1102
          %1127 = vmatprep.subr.bf16.mxu0 %v1105
          %1128 = vmatpush1.bf16.xpose.msra.mxu0 %v1104
          %1129 = vmatprep.subr.bf16.mxu0 %v1107
          %1130 = vmatpush1.bf16.xpose.msra.mxu0 %v1106
          %1131 = vmatprep.subr.bf16.mxu0 %v1109
          %1132 = vmatpush1.bf16.xpose.msra.mxu0 %v1108
          %1133 = vmatprep.subr.bf16.mxu0 %v1111
          %1134 = vmatpush1.bf16.xpose.msra.mxu0 %v1110
          %1135 = vmatprep.subr.bf16.mxu0 %v1113
          %1136 = vmatpush1.bf16.xpose.msra.mxu0 %v1112
          %1137 = vmatprep.subr.bf16.mxu0 %v1115
          %1138 = vmatpush1.bf16.xpose.msra.mxu0 %v1114
          %1139 = vmatprep.subr.bf16.mxu0 %v1117
          %1140 = vmatpush1.bf16.xpose.msra.mxu0 %v1116
          %1141 = vmatprep.subr.bf16.mxu0 0
          %1142 = vmatpush1.bf16.xpose.msra.mxu0 0
          %1143 = vmatprep.subr.bf16.mxu0 0
          %1144 = vmatpush1.bf16.xpose.msra.mxu0 0
          %1145 = vmatprep.subr.bf16.mxu0 0
          %1146 = vmatpush1.bf16.xpose.msra.mxu0 0
          %1147 = vmatprep.subr.bf16.mxu0 0
          %1148 = vmatpush1.bf16.xpose.msra.mxu0 0
          %1149 = vmatprep.subr.bf16.mxu0 0
          %1150 = vmatpush1.bf16.xpose.msra.mxu0 0
          %1151 = vmatprep.subr.bf16.mxu0 0
          %1152 = vmatpush1.bf16.xpose.msra.mxu0 0
          %1153 = vmatprep.subr.bf16.mxu0 0
          %1154 = vmatpush1.bf16.xpose.msra.mxu0 0
          %1155 = vmatprep.subr.bf16.mxu0 0
          %1156 = vmatpush1.bf16.xpose.msra.mxu0 0
          %1157 = vmatprep.mubr.bf16.mxu0 %v1122
          %1158 = vmatmul.mubr.bf16.gmra.mrb[0].mxu0 %v1121
          %v1159 = vpop.f32.mrb[0].mxu0
          %v1160 = vadd.f32 0.0, %v1159
          %v1161 = vpop.f32.mrb[0].mxu0
          %v1162 = vpop.f32.mrb[0].mxu0
          %v1163 = vpop.f32.mrb[0].mxu0
          %1164 = vdwg.mxu0
          %v1165 = vlaneseq
          %v1166 = vshrl.u32 %v1165, 7
          %v1167 = vlaneseq
          %v1168 = vand.u32 %v1167, 127
          %v1169 = vmul.u32 %v1166, 16
          %vm1170 = vcmp.ge.s32.totalorder %v1168, %v1169
          %v1171 = vadd.s32 %v1166, 1
          %v1172 = vmul.u32 %v1171, 16
          %vm1173 = vcmp.lt.s32.totalorder %v1168, %v1172
          %vm1174 = vmand %vm1170, %vm1173
          %v1175 = vmul.f32 %v1160, 0.3
          %v1176 = vsel %vm1174, %v1175, -1e+30
          %1177 = vmax.xlane.f32.xlu0 %v1176
          %v1178 = vpop.xlane.xlu0 %1177
          %v1179 = vsub.f32 %v1176, %v1178
          %v1180 = vmul.f32 %v1179, 1.442695
          %v1181 = vpow.pop %v1180
          %1182 = vadd.xlane.f32.xlu0 %v1181
          %v1183 = vpop.xlane.xlu0 %1182
          %v1184 = vrcp.pop %v1183
          %v1185 = vmul.f32 %v1181, %v1184
          %v1186 = vpack.c.bf16 %v1185, %v1185
          %1187 = vmatprep.subr.bf16.mxu0 0
          %1188 = vmatpush1.bf16.msra.mxu0 %v888
          %1189 = vmatprep.subr.bf16.mxu0 0
          %1190 = vmatpush1.bf16.msra.mxu0 %v889
          %1191 = vmatprep.subr.bf16.mxu0 0
          %1192 = vmatpush1.bf16.msra.mxu0 %v890
          %1193 = vmatprep.subr.bf16.mxu0 0
          %1194 = vmatpush1.bf16.msra.mxu0 %v891
          %1195 = vmatprep.subr.bf16.mxu0 0
          %1196 = vmatpush1.bf16.msra.mxu0 %v892
          %1197 = vmatprep.subr.bf16.mxu0 0
          %1198 = vmatpush1.bf16.msra.mxu0 %v893
          %1199 = vmatprep.subr.bf16.mxu0 0
          %1200 = vmatpush1.bf16.msra.mxu0 %v894
          %1201 = vmatprep.subr.bf16.mxu0 0
          %1202 = vmatpush1.bf16.msra.mxu0 %v895
          %1203 = vmatprep.subr.bf16.mxu0 0
          %1204 = vmatpush1.bf16.msra.mxu0 0
          %1205 = vmatprep.subr.bf16.mxu0 0
          %1206 = vmatpush1.bf16.msra.mxu0 0
          %1207 = vmatprep.subr.bf16.mxu0 0
          %1208 = vmatpush1.bf16.msra.mxu0 0
          %1209 = vmatprep.subr.bf16.mxu0 0
          %1210 = vmatpush1.bf16.msra.mxu0 0
          %1211 = vmatprep.subr.bf16.mxu0 0
          %1212 = vmatpush1.bf16.msra.mxu0 0
          %1213 = vmatprep.subr.bf16.mxu0 0
          %1214 = vmatpush1.bf16.msra.mxu0 0
          %1215 = vmatprep.subr.bf16.mxu0 0
          %1216 = vmatpush1.bf16.msra.mxu0 0
          %1217 = vmatprep.subr.bf16.mxu0 0
          %1218 = vmatpush1.bf16.msra.mxu0 0
          %1219 = vmatprep.mubr.bf16.mxu0 0
          %1220 = vmatmul.mubr.bf16.gmra.mrb[0].mxu0 %v1186
          %v1221 = vpop.f32.mrb[0].mxu0
          %v1222 = vadd.f32 0.0, %v1221
          %v1223 = vpop.f32.mrb[0].mxu0
          %v1224 = vpop.f32.mrb[0].mxu0
          %v1225 = vpop.f32.mrb[0].mxu0
          %1226 = vdwg.mxu0
          %v1227 = vpack.c.bf16 %v1222, %v1222
          %v1228 = vld [vmem:[%s5] sm:$0xff]
          %v1229 = vld [vmem:[%s5 + $0x8] sm:$0xff]
          %v1230 = vld [vmem:[%s5 + $0x10] sm:$0xff]
          %v1231 = vld [vmem:[%s5 + $0x18] sm:$0xff]
          %v1232 = vld [vmem:[%s5 + $0x20] sm:$0xff]
          %v1233 = vld [vmem:[%s5 + $0x28] sm:$0xff]
          %v1234 = vld [vmem:[%s5 + $0x30] sm:$0xff]
          %v1235 = vld [vmem:[%s5 + $0x38] sm:$0xff]
          %v1236 = vld [vmem:[%s5 + $0x40] sm:$0xff]
          %v1237 = vld [vmem:[%s5 + $0x48] sm:$0xff]
          %v1238 = vld [vmem:[%s5 + $0x50] sm:$0xff]
          %v1239 = vld [vmem:[%s5 + $0x58] sm:$0xff]
          %v1240 = vld [vmem:[#allocation8] sm:$0x3f]
          %v1242 = vlaneseq
          %v1243 = vshrl.u32 %v1242, 7
          %v1244 = vsub.s32 0, %v1243
          %v1245 = vrot.slane %v1240, %v1244
          %v1246 = vlaneseq
          %v1247 = vshrl.u32 %v1246, 7
          %v1248 = vsub.s32 1, %v1247
          %v1249 = vrot.slane %v1240, %v1248
          %v1250 = vlaneseq
          %v1251 = vshrl.u32 %v1250, 7
          %v1252 = vsub.s32 2, %v1251
          %v1253 = vrot.slane %v1240, %v1252
          %v1254 = vlaneseq
          %v1255 = vshrl.u32 %v1254, 7
          %v1256 = vsub.s32 3, %v1255
          %v1257 = vrot.slane %v1240, %v1256
          %v1258 = vlaneseq
          %v1259 = vshrl.u32 %v1258, 7
          %v1260 = vsub.s32 4, %v1259
          %v1261 = vrot.slane %v1240, %v1260
          %v1262 = vlaneseq
          %v1263 = vshrl.u32 %v1262, 7
          %v1264 = vsub.s32 5, %v1263
          %v1265 = vrot.slane %v1240, %v1264
          %v1284 = vunpack.c.l.b16 %v1228
          %v1285 = vunpack.c.h.b16 %v1228
          %v1286 = vunpack.c.l.b16 %v1229
          %v1287 = vunpack.c.h.b16 %v1229
          %v1288 = vunpack.c.l.b16 %v1230
          %v1289 = vunpack.c.h.b16 %v1230
          %v1290 = vunpack.c.l.b16 %v1231
          %v1291 = vunpack.c.h.b16 %v1231
          %v1292 = vunpack.c.l.b16 %v1232
          %v1293 = vunpack.c.h.b16 %v1232
          %v1294 = vunpack.c.l.b16 %v1233
          %v1295 = vunpack.c.h.b16 %v1233
          %v1296 = vunpack.c.l.b16 %v1234
          %v1297 = vunpack.c.h.b16 %v1234
          %v1298 = vunpack.c.l.b16 %v1235
          %v1299 = vunpack.c.h.b16 %v1235
          %v1300 = vunpack.c.l.b16 %v1236
          %v1301 = vunpack.c.h.b16 %v1236
          %v1302 = vunpack.c.l.b16 %v1237
          %v1303 = vunpack.c.h.b16 %v1237
          %v1304 = vunpack.c.l.b16 %v1238
          %v1305 = vunpack.c.h.b16 %v1238
          %v1306 = vunpack.c.l.b16 %v1239
          %v1307 = vunpack.c.h.b16 %v1239
          %v1308 = vpack.c.b16 %v1290, %v1284
          %v1309 = vpack.c.b16 %v1291, %v1285
          %v1310 = vpack.c.b16 %v1292, %v1286
          %v1311 = vpack.c.b16 %v1293, %v1287
          %v1312 = vpack.c.b16 %v1294, %v1288
          %v1313 = vpack.c.b16 %v1295, %v1289
          %v1314 = vpack.c.b16 %v1302, %v1296
          %v1315 = vpack.c.b16 %v1303, %v1297
          %v1316 = vpack.c.b16 %v1304, %v1298
          %v1317 = vpack.c.b16 %v1305, %v1299
          %v1318 = vpack.c.b16 %v1306, %v1300
          %v1319 = vpack.c.b16 %v1307, %v1301
          %v1333 = vsel %vm851, %v1227, 0
          %1335 = vmatprep.subr.bf16.mxu0 %v1309
          %1336 = vmatpush1.bf16.msra.mxu0 %v1308
          %1337 = vmatprep.subr.bf16.mxu0 %v1315
          %1338 = vmatpush1.bf16.msra.mxu0 %v1314
          %1339 = vmatprep.subr.bf16.mxu0 0
          %1340 = vmatpush1.bf16.msra.mxu0 0
          %1341 = vmatprep.subr.bf16.mxu0 0
          %1342 = vmatpush1.bf16.msra.mxu0 0
          %1343 = vmatprep.subr.bf16.mxu0 0
          %1344 = vmatpush1.bf16.msra.mxu0 0
          %1345 = vmatprep.subr.bf16.mxu0 0
          %1346 = vmatpush1.bf16.msra.mxu0 0
          %1347 = vmatprep.subr.bf16.mxu0 0
          %1348 = vmatpush1.bf16.msra.mxu0 0
          %1349 = vmatprep.subr.bf16.mxu0 0
          %1350 = vmatpush1.bf16.msra.mxu0 0
          %1351 = vmatprep.subr.bf16.mxu0 0
          %1352 = vmatpush1.bf16.msra.mxu0 0
          %1353 = vmatprep.subr.bf16.mxu0 0
          %1354 = vmatpush1.bf16.msra.mxu0 0
          %1355 = vmatprep.subr.bf16.mxu0 0
          %1356 = vmatpush1.bf16.msra.mxu0 0
          %1357 = vmatprep.subr.bf16.mxu0 0
          %1358 = vmatpush1.bf16.msra.mxu0 0
          %1359 = vmatprep.subr.bf16.mxu0 0
          %1360 = vmatpush1.bf16.msra.mxu0 0
          %1361 = vmatprep.subr.bf16.mxu0 0
          %1362 = vmatpush1.bf16.msra.mxu0 0
          %1363 = vmatprep.subr.bf16.mxu0 0
          %1364 = vmatpush1.bf16.msra.mxu0 0
          %1365 = vmatprep.subr.bf16.mxu0 0
          %1366 = vmatpush1.bf16.msra.mxu0 0
          %1367 = vmatprep.mubr.bf16.mxu0 0
          %1368 = vmatmul.mubr.bf16.gmra.mrb[0].mxu0 %v1333
          %v1369 = vpop.f32.mrb[0].mxu0
          %v1370 = vadd.f32 %v1245, %v1369
          %v1371 = vpop.f32.mrb[0].mxu0
          %v1372 = vadd.f32 %v1249, %v1371
          %v1373 = vpop.f32.mrb[0].mxu0
          %v1374 = vpop.f32.mrb[0].mxu0
          %1375 = vdwg.mxu0
          %1376 = vmatprep.subr.bf16.mxu0 %v1311
          %1377 = vmatpush1.bf16.msra.mxu0 %v1310
          %1378 = vmatprep.subr.bf16.mxu0 %v1317
          %1379 = vmatpush1.bf16.msra.mxu0 %v1316
          %1380 = vmatprep.subr.bf16.mxu0 0
          %1381 = vmatpush1.bf16.msra.mxu0 0
          %1382 = vmatprep.subr.bf16.mxu0 0
          %1383 = vmatpush1.bf16.msra.mxu0 0
          %1384 = vmatprep.subr.bf16.mxu0 0
          %1385 = vmatpush1.bf16.msra.mxu0 0
          %1386 = vmatprep.subr.bf16.mxu0 0
          %1387 = vmatpush1.bf16.msra.mxu0 0
          %1388 = vmatprep.subr.bf16.mxu0 0
          %1389 = vmatpush1.bf16.msra.mxu0 0
          %1390 = vmatprep.subr.bf16.mxu0 0
          %1391 = vmatpush1.bf16.msra.mxu0 0
          %1392 = vmatprep.subr.bf16.mxu0 0
          %1393 = vmatpush1.bf16.msra.mxu0 0
          %1394 = vmatprep.subr.bf16.mxu0 0
          %1395 = vmatpush1.bf16.msra.mxu0 0
          %1396 = vmatprep.subr.bf16.mxu0 0
          %1397 = vmatpush1.bf16.msra.mxu0 0
          %1398 = vmatprep.subr.bf16.mxu0 0
          %1399 = vmatpush1.bf16.msra.mxu0 0
          %1400 = vmatprep.subr.bf16.mxu0 0
          %1401 = vmatpush1.bf16.msra.mxu0 0
          %1402 = vmatprep.subr.bf16.mxu0 0
          %1403 = vmatpush1.bf16.msra.mxu0 0
          %1404 = vmatprep.subr.bf16.mxu0 0
          %1405 = vmatpush1.bf16.msra.mxu0 0
          %1406 = vmatprep.subr.bf16.mxu0 0
          %1407 = vmatpush1.bf16.msra.mxu0 0
          %1408 = vmatprep.mubr.bf16.mxu0 0
          %1409 = vmatmul.mubr.bf16.gmra.mrb[0].mxu0 %v1333
          %v1410 = vpop.f32.mrb[0].mxu0
          %v1411 = vadd.f32 %v1253, %v1410
          %v1412 = vpop.f32.mrb[0].mxu0
          %v1413 = vadd.f32 %v1257, %v1412
          %v1414 = vpop.f32.mrb[0].mxu0
          %v1415 = vpop.f32.mrb[0].mxu0
          %1416 = vdwg.mxu0
          %1417 = vmatprep.subr.bf16.mxu0 %v1313
          %1418 = vmatpush1.bf16.msra.mxu0 %v1312
          %1419 = vmatprep.subr.bf16.mxu0 %v1319
          %1420 = vmatpush1.bf16.msra.mxu0 %v1318
          %1421 = vmatprep.subr.bf16.mxu0 0
          %1422 = vmatpush1.bf16.msra.mxu0 0
          %1423 = vmatprep.subr.bf16.mxu0 0
          %1424 = vmatpush1.bf16.msra.mxu0 0
          %1425 = vmatprep.subr.bf16.mxu0 0
          %1426 = vmatpush1.bf16.msra.mxu0 0
          %1427 = vmatprep.subr.bf16.mxu0 0
          %1428 = vmatpush1.bf16.msra.mxu0 0
          %1429 = vmatprep.subr.bf16.mxu0 0
          %1430 = vmatpush1.bf16.msra.mxu0 0
          %1431 = vmatprep.subr.bf16.mxu0 0
          %1432 = vmatpush1.bf16.msra.mxu0 0
          %1433 = vmatprep.subr.bf16.mxu0 0
          %1434 = vmatpush1.bf16.msra.mxu0 0
          %1435 = vmatprep.subr.bf16.mxu0 0
          %1436 = vmatpush1.bf16.msra.mxu0 0
          %1437 = vmatprep.subr.bf16.mxu0 0
          %1438 = vmatpush1.bf16.msra.mxu0 0
          %1439 = vmatprep.subr.bf16.mxu0 0
          %1440 = vmatpush1.bf16.msra.mxu0 0
          %1441 = vmatprep.subr.bf16.mxu0 0
          %1442 = vmatpush1.bf16.msra.mxu0 0
          %1443 = vmatprep.subr.bf16.mxu0 0
          %1444 = vmatpush1.bf16.msra.mxu0 0
          %1445 = vmatprep.subr.bf16.mxu0 0
          %1446 = vmatpush1.bf16.msra.mxu0 0
          %1447 = vmatprep.subr.bf16.mxu0 0
          %1448 = vmatpush1.bf16.msra.mxu0 0
          %1449 = vmatprep.mubr.bf16.mxu0 0
          %1450 = vmatmul.mubr.bf16.gmra.mrb[0].mxu0 %v1333
          %v1451 = vpop.f32.mrb[0].mxu0
          %v1452 = vadd.f32 %v1261, %v1451
          %v1453 = vpop.f32.mrb[0].mxu0
          %v1454 = vadd.f32 %v1265, %v1453
          %v1455 = vpop.f32.mrb[0].mxu0
          %v1456 = vpop.f32.mrb[0].mxu0
          %1457 = vdwg.mxu0
          %v1458 = vmax.f32 %v1370, 0.0
          %v1459 = vmax.f32 %v1372, 0.0
          %v1460 = vmax.f32 %v1411, 0.0
          %v1461 = vmax.f32 %v1413, 0.0
          %v1462 = vmax.f32 %v1452, 0.0
          %v1463 = vmax.f32 %v1454, 0.0
          %v1464 = vpack.c.bf16 %v1458, %v1458
          %v1465 = vpack.c.bf16 %v1459, %v1459
          %v1466 = vpack.c.bf16 %v1460, %v1460
          %v1467 = vpack.c.bf16 %v1461, %v1461
          %v1468 = vpack.c.bf16 %v1462, %v1462
          %v1469 = vpack.c.bf16 %v1463, %v1463
          %v1470 = vld [vmem:[%s7] sm:$0xff]
          %v1471 = vld [vmem:[%s7 + $0x8] sm:$0xf]
          %v1472 = vld [vmem:[%s7 + $0xc] sm:$0xff]
          %v1473 = vld [vmem:[%s7 + $0x14] sm:$0xf]
          %v1474 = vld [vmem:[%s7 + $0x18] sm:$0xff]
          %v1475 = vld [vmem:[%s7 + $0x20] sm:$0xf]
          %v1476 = vld [vmem:[%s7 + $0x24] sm:$0xff]
          %v1477 = vld [vmem:[%s7 + $0x2c] sm:$0xf]
          %v1478 = vld [vmem:[%s7 + $0x30] sm:$0xff]
          %v1479 = vld [vmem:[%s7 + $0x38] sm:$0xf]
          %v1480 = vld [vmem:[%s7 + $0x3c] sm:$0xff]
          %v1481 = vld [vmem:[%s7 + $0x44] sm:$0xf]
          %v1482 = vld [vmem:[%s7 + $0x48] sm:$0xff]
          %v1483 = vld [vmem:[%s7 + $0x50] sm:$0xf]
          %v1484 = vld [vmem:[%s7 + $0x54] sm:$0xff]
          %v1485 = vld [vmem:[%s7 + $0x5c] sm:$0xf]
          %v1486 = vld [vmem:[%s7 + $0x60] sm:$0xff]
          %v1487 = vld [vmem:[%s7 + $0x68] sm:$0xf]
          %v1488 = vld [vmem:[%s7 + $0x6c] sm:$0xff]
          %v1489 = vld [vmem:[%s7 + $0x74] sm:$0xf]
          %v1490 = vld [vmem:[%s7 + $0x78] sm:$0xff]
          %v1491 = vld [vmem:[%s7 + $0x80] sm:$0xf]
          %v1492 = vld [vmem:[%s7 + $0x84] sm:$0xff]
          %v1493 = vld [vmem:[%s7 + $0x8c] sm:$0xf]
          %v1494 = vld [vmem:[%s7 + $0x90] sm:$0xff]
          %v1495 = vld [vmem:[%s7 + $0x98] sm:$0xf]
          %v1496 = vld [vmem:[%s7 + $0x9c] sm:$0xff]
          %v1497 = vld [vmem:[%s7 + $0xa4] sm:$0xf]
          %v1498 = vld [vmem:[%s7 + $0xa8] sm:$0xff]
          %v1499 = vld [vmem:[%s7 + $0xb0] sm:$0xf]
          %v1500 = vld [vmem:[%s7 + $0xb4] sm:$0xff]
          %v1501 = vld [vmem:[%s7 + $0xbc] sm:$0xf]
          %v1502 = vld [vmem:[%s7 + $0xc0] sm:$0xff]
          %v1503 = vld [vmem:[%s7 + $0xc8] sm:$0xf]
          %v1504 = vld [vmem:[%s7 + $0xcc] sm:$0xff]
          %v1505 = vld [vmem:[%s7 + $0xd4] sm:$0xf]
          %v1506 = vld [vmem:[%s7 + $0xd8] sm:$0xff]
          %v1507 = vld [vmem:[%s7 + $0xe0] sm:$0xf]
          %v1508 = vld [vmem:[%s7 + $0xe4] sm:$0xff]
          %v1509 = vld [vmem:[%s7 + $0xec] sm:$0xf]
          %v1510 = vld [vmem:[%s7 + $0xf0] sm:$0xff]
          %v1511 = vld [vmem:[%s7 + $0xf8] sm:$0xf]
          %v1512 = vld [vmem:[%s7 + $0xfc] sm:$0xff]
          %v1513 = vld [vmem:[%s7 + $0x104] sm:$0xf]
          %v1514 = vld [vmem:[%s7 + $0x108] sm:$0xff]
          %v1515 = vld [vmem:[%s7 + $0x110] sm:$0xf]
          %v1516 = vld [vmem:[%s7 + $0x114] sm:$0xff]
          %v1517 = vld [vmem:[%s7 + $0x11c] sm:$0xf]
          %v1518 = vld [vmem:[%s7 + $0x120] sm:$0xff]
          %v1519 = vld [vmem:[%s7 + $0x128] sm:$0xf]
          %v1520 = vld [vmem:[%s7 + $0x12c] sm:$0xff]
          %v1521 = vld [vmem:[%s7 + $0x134] sm:$0xf]
          %v1522 = vld [vmem:[%s7 + $0x138] sm:$0xff]
          %v1523 = vld [vmem:[%s7 + $0x140] sm:$0xf]
          %v1524 = vld [vmem:[%s7 + $0x144] sm:$0xff]
          %v1525 = vld [vmem:[%s7 + $0x14c] sm:$0xf]
          %v1526 = vld [vmem:[%s7 + $0x150] sm:$0xff]
          %v1527 = vld [vmem:[%s7 + $0x158] sm:$0xf]
          %v1528 = vld [vmem:[%s7 + $0x15c] sm:$0xff]
          %v1529 = vld [vmem:[%s7 + $0x164] sm:$0xf]
          %v1530 = vld [vmem:[%s7 + $0x168] sm:$0xff]
          %v1531 = vld [vmem:[%s7 + $0x170] sm:$0xf]
          %v1532 = vld [vmem:[%s7 + $0x174] sm:$0xff]
          %v1533 = vld [vmem:[%s7 + $0x17c] sm:$0xf]
          %v1534 = vld [vmem:[%s7 + $0x180] sm:$0xff]
          %v1535 = vld [vmem:[%s7 + $0x188] sm:$0xf]
          %v1536 = vld [vmem:[%s7 + $0x18c] sm:$0xff]
          %v1537 = vld [vmem:[%s7 + $0x194] sm:$0xf]
          %v1538 = vld [vmem:[%s7 + $0x198] sm:$0xff]
          %v1539 = vld [vmem:[%s7 + $0x1a0] sm:$0xf]
          %v1540 = vld [vmem:[%s7 + $0x1a4] sm:$0xff]
          %v1541 = vld [vmem:[%s7 + $0x1ac] sm:$0xf]
          %v1542 = vld [vmem:[%s7 + $0x1b0] sm:$0xff]
          %v1543 = vld [vmem:[%s7 + $0x1b8] sm:$0xf]
          %v1544 = vld [vmem:[%s7 + $0x1bc] sm:$0xff]
          %v1545 = vld [vmem:[%s7 + $0x1c4] sm:$0xf]
          %v1546 = vld [vmem:[%s7 + $0x1c8] sm:$0xff]
          %v1547 = vld [vmem:[%s7 + $0x1d0] sm:$0xf]
          %v1548 = vld [vmem:[%s7 + $0x1d4] sm:$0xff]
          %v1549 = vld [vmem:[%s7 + $0x1dc] sm:$0xf]
          %v1550 = vld [vmem:[%s7 + $0x1e0] sm:$0xff]
          %v1551 = vld [vmem:[%s7 + $0x1e8] sm:$0xf]
          %v1552 = vld [vmem:[%s7 + $0x1ec] sm:$0xff]
          %v1553 = vld [vmem:[%s7 + $0x1f4] sm:$0xf]
          %v1554 = vld [vmem:[%s7 + $0x1f8] sm:$0xff]
          %v1555 = vld [vmem:[%s7 + $0x200] sm:$0xf]
          %v1556 = vld [vmem:[%s7 + $0x204] sm:$0xff]
          %v1557 = vld [vmem:[%s7 + $0x20c] sm:$0xf]
          %v1558 = vld [vmem:[%s7 + $0x210] sm:$0xff]
          %v1559 = vld [vmem:[%s7 + $0x218] sm:$0xf]
          %v1560 = vld [vmem:[%s7 + $0x21c] sm:$0xff]
          %v1561 = vld [vmem:[%s7 + $0x224] sm:$0xf]
          %v1562 = vld [vmem:[%s7 + $0x228] sm:$0xff]
          %v1563 = vld [vmem:[%s7 + $0x230] sm:$0xf]
          %v1564 = vld [vmem:[%s7 + $0x234] sm:$0xff]
          %v1565 = vld [vmem:[%s7 + $0x23c] sm:$0xf]
          %v1566 = vld [vmem:[%s7 + $0x240] sm:$0xff]
          %v1567 = vld [vmem:[%s7 + $0x248] sm:$0xf]
          %v1568 = vld [vmem:[%s7 + $0x24c] sm:$0xff]
          %v1569 = vld [vmem:[%s7 + $0x254] sm:$0xf]
          %v1570 = vld [vmem:[%s7 + $0x258] sm:$0xff]
          %v1571 = vld [vmem:[%s7 + $0x260] sm:$0xf]
          %v1572 = vld [vmem:[%s7 + $0x264] sm:$0xff]
          %v1573 = vld [vmem:[%s7 + $0x26c] sm:$0xf]
          %v1574 = vld [vmem:[%s7 + $0x270] sm:$0xff]
          %v1575 = vld [vmem:[%s7 + $0x278] sm:$0xf]
          %v1576 = vld [vmem:[%s7 + $0x27c] sm:$0xff]
          %v1577 = vld [vmem:[%s7 + $0x284] sm:$0xf]
          %v1578 = vld [vmem:[%s7 + $0x288] sm:$0xff]
          %v1579 = vld [vmem:[%s7 + $0x290] sm:$0xf]
          %v1580 = vld [vmem:[%s7 + $0x294] sm:$0xff]
          %v1581 = vld [vmem:[%s7 + $0x29c] sm:$0xf]
          %v1582 = vld [vmem:[%s7 + $0x2a0] sm:$0xff]
          %v1583 = vld [vmem:[%s7 + $0x2a8] sm:$0xf]
          %v1584 = vld [vmem:[%s7 + $0x2ac] sm:$0xff]
          %v1585 = vld [vmem:[%s7 + $0x2b4] sm:$0xf]
          %v1586 = vld [vmem:[%s7 + $0x2b8] sm:$0xff]
          %v1587 = vld [vmem:[%s7 + $0x2c0] sm:$0xf]
          %v1588 = vld [vmem:[%s7 + $0x2c4] sm:$0xff]
          %v1589 = vld [vmem:[%s7 + $0x2cc] sm:$0xf]
          %v1590 = vld [vmem:[%s7 + $0x2d0] sm:$0xff]
          %v1591 = vld [vmem:[%s7 + $0x2d8] sm:$0xf]
          %v1592 = vld [vmem:[%s7 + $0x2dc] sm:$0xff]
          %v1593 = vld [vmem:[%s7 + $0x2e4] sm:$0xf]
          %v1594 = vld [vmem:[%s7 + $0x2e8] sm:$0xff]
          %v1595 = vld [vmem:[%s7 + $0x2f0] sm:$0xf]
          %v1596 = vld [vmem:[%s7 + $0x2f4] sm:$0xff]
          %v1597 = vld [vmem:[%s7 + $0x2fc] sm:$0xf]
          %v1598 = vld [vmem:[%s7 + $0x300] sm:$0xff]
          %v1599 = vld [vmem:[%s7 + $0x308] sm:$0xf]
          %v1600 = vld [vmem:[%s7 + $0x30c] sm:$0xff]
          %v1601 = vld [vmem:[%s7 + $0x314] sm:$0xf]
          %v1602 = vld [vmem:[%s7 + $0x318] sm:$0xff]
          %v1603 = vld [vmem:[%s7 + $0x320] sm:$0xf]
          %v1604 = vld [vmem:[%s7 + $0x324] sm:$0xff]
          %v1605 = vld [vmem:[%s7 + $0x32c] sm:$0xf]
          %v1606 = vld [vmem:[%s7 + $0x330] sm:$0xff]
          %v1607 = vld [vmem:[%s7 + $0x338] sm:$0xf]
          %v1608 = vld [vmem:[%s7 + $0x33c] sm:$0xff]
          %v1609 = vld [vmem:[%s7 + $0x344] sm:$0xf]
          %v1610 = vld [vmem:[%s7 + $0x348] sm:$0xff]
          %v1611 = vld [vmem:[%s7 + $0x350] sm:$0xf]
          %v1612 = vld [vmem:[%s7 + $0x354] sm:$0xff]
          %v1613 = vld [vmem:[%s7 + $0x35c] sm:$0xf]
          %v1614 = vld [vmem:[%s7 + $0x360] sm:$0xff]
          %v1615 = vld [vmem:[%s7 + $0x368] sm:$0xf]
          %v1616 = vld [vmem:[%s7 + $0x36c] sm:$0xff]
          %v1617 = vld [vmem:[%s7 + $0x374] sm:$0xf]
          %v1618 = vld [vmem:[%s7 + $0x378] sm:$0xff]
          %v1619 = vld [vmem:[%s7 + $0x380] sm:$0xf]
          %v1620 = vld [vmem:[%s7 + $0x384] sm:$0xff]
          %v1621 = vld [vmem:[%s7 + $0x38c] sm:$0xf]
          %v1622 = vld [vmem:[%s7 + $0x390] sm:$0xff]
          %v1623 = vld [vmem:[%s7 + $0x398] sm:$0xf]
          %v1624 = vld [vmem:[%s7 + $0x39c] sm:$0xff]
          %v1625 = vld [vmem:[%s7 + $0x3a4] sm:$0xf]
          %v1626 = vld [vmem:[%s7 + $0x3a8] sm:$0xff]
          %v1627 = vld [vmem:[%s7 + $0x3b0] sm:$0xf]
          %v1628 = vld [vmem:[%s7 + $0x3b4] sm:$0xff]
          %v1629 = vld [vmem:[%s7 + $0x3bc] sm:$0xf]
          %v1630 = vld [vmem:[%s7 + $0x3c0] sm:$0xff]
          %v1631 = vld [vmem:[%s7 + $0x3c8] sm:$0xf]
          %v1632 = vld [vmem:[%s7 + $0x3cc] sm:$0xff]
          %v1633 = vld [vmem:[%s7 + $0x3d4] sm:$0xf]
          %v1634 = vld [vmem:[%s7 + $0x3d8] sm:$0xff]
          %v1635 = vld [vmem:[%s7 + $0x3e0] sm:$0xf]
          %v1636 = vld [vmem:[%s7 + $0x3e4] sm:$0xff]
          %v1637 = vld [vmem:[%s7 + $0x3ec] sm:$0xf]
          %v1638 = vld [vmem:[%s7 + $0x3f0] sm:$0xff]
          %v1639 = vld [vmem:[%s7 + $0x3f8] sm:$0xf]
          %v1640 = vld [vmem:[%s7 + $0x3fc] sm:$0xff]
          %v1641 = vld [vmem:[%s7 + $0x404] sm:$0xf]
          %v1642 = vld [vmem:[%s7 + $0x408] sm:$0xff]
          %v1643 = vld [vmem:[%s7 + $0x410] sm:$0xf]
          %v1644 = vld [vmem:[%s7 + $0x414] sm:$0xff]
          %v1645 = vld [vmem:[%s7 + $0x41c] sm:$0xf]
          %v1646 = vld [vmem:[%s7 + $0x420] sm:$0xff]
          %v1647 = vld [vmem:[%s7 + $0x428] sm:$0xf]
          %v1648 = vld [vmem:[%s7 + $0x42c] sm:$0xff]
          %v1649 = vld [vmem:[%s7 + $0x434] sm:$0xf]
          %v1650 = vld [vmem:[%s7 + $0x438] sm:$0xff]
          %v1651 = vld [vmem:[%s7 + $0x440] sm:$0xf]
          %v1652 = vld [vmem:[%s7 + $0x444] sm:$0xff]
          %v1653 = vld [vmem:[%s7 + $0x44c] sm:$0xf]
          %v1654 = vld [vmem:[%s7 + $0x450] sm:$0xff]
          %v1655 = vld [vmem:[%s7 + $0x458] sm:$0xf]
          %v1656 = vld [vmem:[%s7 + $0x45c] sm:$0xff]
          %v1657 = vld [vmem:[%s7 + $0x464] sm:$0xf]
          %v1658 = vld [vmem:[%s7 + $0x468] sm:$0xff]
          %v1659 = vld [vmem:[%s7 + $0x470] sm:$0xf]
          %v1660 = vld [vmem:[%s7 + $0x474] sm:$0xff]
          %v1661 = vld [vmem:[%s7 + $0x47c] sm:$0xf]
          %v1662 = vld [vmem:[#allocation10] sm:$0x7]
          %v1664 = vlaneseq
          %v1665 = vshrl.u32 %v1664, 7
          %v1666 = vsub.s32 0, %v1665
          %v1667 = vrot.slane %v1662, %v1666
          %v1668 = vlaneseq
          %v1669 = vshrl.u32 %v1668, 7
          %v1670 = vsub.s32 1, %v1669
          %v1671 = vrot.slane %v1662, %v1670
          %v1672 = vlaneseq
          %v1673 = vshrl.u32 %v1672, 7
          %v1674 = vsub.s32 2, %v1673
          %v1675 = vrot.slane %v1662, %v1674
          %v1871 = vunpack.c.l.b16 %v1470
          %v1872 = vunpack.c.h.b16 %v1470
          %v1873 = vunpack.c.l.b16 %v1471
          %v1874 = vunpack.c.l.b16 %v1472
          %v1875 = vunpack.c.h.b16 %v1472
          %v1876 = vunpack.c.l.b16 %v1473
          %v1877 = vunpack.c.l.b16 %v1474
          %v1878 = vunpack.c.h.b16 %v1474
          %v1879 = vunpack.c.l.b16 %v1475
          %v1880 = vunpack.c.l.b16 %v1476
          %v1881 = vunpack.c.h.b16 %v1476
          %v1882 = vunpack.c.l.b16 %v1477
          %v1883 = vunpack.c.l.b16 %v1478
          %v1884 = vunpack.c.h.b16 %v1478
          %v1885 = vunpack.c.l.b16 %v1479
          %v1886 = vunpack.c.l.b16 %v1480
          %v1887 = vunpack.c.h.b16 %v1480
          %v1888 = vunpack.c.l.b16 %v1481
          %v1889 = vunpack.c.l.b16 %v1482
          %v1890 = vunpack.c.h.b16 %v1482
          %v1891 = vunpack.c.l.b16 %v1483
          %v1892 = vunpack.c.l.b16 %v1484
          %v1893 = vunpack.c.h.b16 %v1484
          %v1894 = vunpack.c.l.b16 %v1485
          %v1895 = vunpack.c.l.b16 %v1486
          %v1896 = vunpack.c.h.b16 %v1486
          %v1897 = vunpack.c.l.b16 %v1487
          %v1898 = vunpack.c.l.b16 %v1488
          %v1899 = vunpack.c.h.b16 %v1488
          %v1900 = vunpack.c.l.b16 %v1489
          %v1901 = vunpack.c.l.b16 %v1490
          %v1902 = vunpack.c.h.b16 %v1490
          %v1903 = vunpack.c.l.b16 %v1491
          %v1904 = vunpack.c.l.b16 %v1492
          %v1905 = vunpack.c.h.b16 %v1492
          %v1906 = vunpack.c.l.b16 %v1493
          %v1907 = vunpack.c.l.b16 %v1494
          %v1908 = vunpack.c.h.b16 %v1494
          %v1909 = vunpack.c.l.b16 %v1495
          %v1910 = vunpack.c.l.b16 %v1496
          %v1911 = vunpack.c.h.b16 %v1496
          %v1912 = vunpack.c.l.b16 %v1497
          %v1913 = vunpack.c.l.b16 %v1498
          %v1914 = vunpack.c.h.b16 %v1498
          %v1915 = vunpack.c.l.b16 %v1499
          %v1916 = vunpack.c.l.b16 %v1500
          %v1917 = vunpack.c.h.b16 %v1500
          %v1918 = vunpack.c.l.b16 %v1501
          %v1919 = vunpack.c.l.b16 %v1502
          %v1920 = vunpack.c.h.b16 %v1502
          %v1921 = vunpack.c.l.b16 %v1503
          %v1922 = vunpack.c.l.b16 %v1504
          %v1923 = vunpack.c.h.b16 %v1504
          %v1924 = vunpack.c.l.b16 %v1505
          %v1925 = vunpack.c.l.b16 %v1506
          %v1926 = vunpack.c.h.b16 %v1506
          %v1927 = vunpack.c.l.b16 %v1507
          %v1928 = vunpack.c.l.b16 %v1508
          %v1929 = vunpack.c.h.b16 %v1508
          %v1930 = vunpack.c.l.b16 %v1509
          %v1931 = vunpack.c.l.b16 %v1510
          %v1932 = vunpack.c.h.b16 %v1510
          %v1933 = vunpack.c.l.b16 %v1511
          %v1934 = vunpack.c.l.b16 %v1512
          %v1935 = vunpack.c.h.b16 %v1512
          %v1936 = vunpack.c.l.b16 %v1513
          %v1937 = vunpack.c.l.b16 %v1514
          %v1938 = vunpack.c.h.b16 %v1514
          %v1939 = vunpack.c.l.b16 %v1515
          %v1940 = vunpack.c.l.b16 %v1516
          %v1941 = vunpack.c.h.b16 %v1516
          %v1942 = vunpack.c.l.b16 %v1517
          %v1943 = vunpack.c.l.b16 %v1518
          %v1944 = vunpack.c.h.b16 %v1518
          %v1945 = vunpack.c.l.b16 %v1519
          %v1946 = vunpack.c.l.b16 %v1520
          %v1947 = vunpack.c.h.b16 %v1520
          %v1948 = vunpack.c.l.b16 %v1521
          %v1949 = vunpack.c.l.b16 %v1522
          %v1950 = vunpack.c.h.b16 %v1522
          %v1951 = vunpack.c.l.b16 %v1523
          %v1952 = vunpack.c.l.b16 %v1524
          %v1953 = vunpack.c.h.b16 %v1524
          %v1954 = vunpack.c.l.b16 %v1525
          %v1955 = vunpack.c.l.b16 %v1526
          %v1956 = vunpack.c.h.b16 %v1526
          %v1957 = vunpack.c.l.b16 %v1527
          %v1958 = vunpack.c.l.b16 %v1528
          %v1959 = vunpack.c.h.b16 %v1528
          %v1960 = vunpack.c.l.b16 %v1529
          %v1961 = vunpack.c.l.b16 %v1530
          %v1962 = vunpack.c.h.b16 %v1530
          %v1963 = vunpack.c.l.b16 %v1531
          %v1964 = vunpack.c.l.b16 %v1532
          %v1965 = vunpack.c.h.b16 %v1532
          %v1966 = vunpack.c.l.b16 %v1533
          %v1967 = vunpack.c.l.b16 %v1534
          %v1968 = vunpack.c.h.b16 %v1534
          %v1969 = vunpack.c.l.b16 %v1535
          %v1970 = vunpack.c.l.b16 %v1536
          %v1971 = vunpack.c.h.b16 %v1536
          %v1972 = vunpack.c.l.b16 %v1537
          %v1973 = vunpack.c.l.b16 %v1538
          %v1974 = vunpack.c.h.b16 %v1538
          %v1975 = vunpack.c.l.b16 %v1539
          %v1976 = vunpack.c.l.b16 %v1540
          %v1977 = vunpack.c.h.b16 %v1540
          %v1978 = vunpack.c.l.b16 %v1541
          %v1979 = vunpack.c.l.b16 %v1542
          %v1980 = vunpack.c.h.b16 %v1542
          %v1981 = vunpack.c.l.b16 %v1543
          %v1982 = vunpack.c.l.b16 %v1544
          %v1983 = vunpack.c.h.b16 %v1544
          %v1984 = vunpack.c.l.b16 %v1545
          %v1985 = vunpack.c.l.b16 %v1546
          %v1986 = vunpack.c.h.b16 %v1546
          %v1987 = vunpack.c.l.b16 %v1547
          %v1988 = vunpack.c.l.b16 %v1548
          %v1989 = vunpack.c.h.b16 %v1548
          %v1990 = vunpack.c.l.b16 %v1549
          %v1991 = vunpack.c.l.b16 %v1550
          %v1992 = vunpack.c.h.b16 %v1550
          %v1993 = vunpack.c.l.b16 %v1551
          %v1994 = vunpack.c.l.b16 %v1552
          %v1995 = vunpack.c.h.b16 %v1552
          %v1996 = vunpack.c.l.b16 %v1553
          %v1997 = vunpack.c.l.b16 %v1554
          %v1998 = vunpack.c.h.b16 %v1554
          %v1999 = vunpack.c.l.b16 %v1555
          %v2000 = vunpack.c.l.b16 %v1556
          %v2001 = vunpack.c.h.b16 %v1556
          %v2002 = vunpack.c.l.b16 %v1557
          %v2003 = vunpack.c.l.b16 %v1558
          %v2004 = vunpack.c.h.b16 %v1558
          %v2005 = vunpack.c.l.b16 %v1559
          %v2006 = vunpack.c.l.b16 %v1560
          %v2007 = vunpack.c.h.b16 %v1560
          %v2008 = vunpack.c.l.b16 %v1561
          %v2009 = vunpack.c.l.b16 %v1562
          %v2010 = vunpack.c.h.b16 %v1562
          %v2011 = vunpack.c.l.b16 %v1563
          %v2012 = vunpack.c.l.b16 %v1564
          %v2013 = vunpack.c.h.b16 %v1564
          %v2014 = vunpack.c.l.b16 %v1565
          %v2015 = vunpack.c.l.b16 %v1566
          %v2016 = vunpack.c.h.b16 %v1566
          %v2017 = vunpack.c.l.b16 %v1567
          %v2018 = vunpack.c.l.b16 %v1568
          %v2019 = vunpack.c.h.b16 %v1568
          %v2020 = vunpack.c.l.b16 %v1569
          %v2021 = vunpack.c.l.b16 %v1570
          %v2022 = vunpack.c.h.b16 %v1570
          %v2023 = vunpack.c.l.b16 %v1571
          %v2024 = vunpack.c.l.b16 %v1572
          %v2025 = vunpack.c.h.b16 %v1572
          %v2026 = vunpack.c.l.b16 %v1573
          %v2027 = vunpack.c.l.b16 %v1574
          %v2028 = vunpack.c.h.b16 %v1574
          %v2029 = vunpack.c.l.b16 %v1575
          %v2030 = vunpack.c.l.b16 %v1576
          %v2031 = vunpack.c.h.b16 %v1576
          %v2032 = vunpack.c.l.b16 %v1577
          %v2033 = vunpack.c.l.b16 %v1578
          %v2034 = vunpack.c.h.b16 %v1578
          %v2035 = vunpack.c.l.b16 %v1579
          %v2036 = vunpack.c.l.b16 %v1580
          %v2037 = vunpack.c.h.b16 %v1580
          %v2038 = vunpack.c.l.b16 %v1581
          %v2039 = vunpack.c.l.b16 %v1582
          %v2040 = vunpack.c.h.b16 %v1582
          %v2041 = vunpack.c.l.b16 %v1583
          %v2042 = vunpack.c.l.b16 %v1584
          %v2043 = vunpack.c.h.b16 %v1584
          %v2044 = vunpack.c.l.b16 %v1585
          %v2045 = vunpack.c.l.b16 %v1586
          %v2046 = vunpack.c.h.b16 %v1586
          %v2047 = vunpack.c.l.b16 %v1587
          %v2048 = vunpack.c.l.b16 %v1588
          %v2049 = vunpack.c.h.b16 %v1588
          %v2050 = vunpack.c.l.b16 %v1589
          %v2051 = vunpack.c.l.b16 %v1590
          %v2052 = vunpack.c.h.b16 %v1590
          %v2053 = vunpack.c.l.b16 %v1591
          %v2054 = vunpack.c.l.b16 %v1592
          %v2055 = vunpack.c.h.b16 %v1592
          %v2056 = vunpack.c.l.b16 %v1593
          %v2057 = vunpack.c.l.b16 %v1594
          %v2058 = vunpack.c.h.b16 %v1594
          %v2059 = vunpack.c.l.b16 %v1595
          %v2060 = vunpack.c.l.b16 %v1596
          %v2061 = vunpack.c.h.b16 %v1596
          %v2062 = vunpack.c.l.b16 %v1597
          %v2063 = vunpack.c.l.b16 %v1598
          %v2064 = vunpack.c.h.b16 %v1598
          %v2065 = vunpack.c.l.b16 %v1599
          %v2066 = vunpack.c.l.b16 %v1600
          %v2067 = vunpack.c.h.b16 %v1600
          %v2068 = vunpack.c.l.b16 %v1601
          %v2069 = vunpack.c.l.b16 %v1602
          %v2070 = vunpack.c.h.b16 %v1602
          %v2071 = vunpack.c.l.b16 %v1603
          %v2072 = vunpack.c.l.b16 %v1604
          %v2073 = vunpack.c.h.b16 %v1604
          %v2074 = vunpack.c.l.b16 %v1605
          %v2075 = vunpack.c.l.b16 %v1606
          %v2076 = vunpack.c.h.b16 %v1606
          %v2077 = vunpack.c.l.b16 %v1607
          %v2078 = vunpack.c.l.b16 %v1608
          %v2079 = vunpack.c.h.b16 %v1608
          %v2080 = vunpack.c.l.b16 %v1609
          %v2081 = vunpack.c.l.b16 %v1610
          %v2082 = vunpack.c.h.b16 %v1610
          %v2083 = vunpack.c.l.b16 %v1611
          %v2084 = vunpack.c.l.b16 %v1612
          %v2085 = vunpack.c.h.b16 %v1612
          %v2086 = vunpack.c.l.b16 %v1613
          %v2087 = vunpack.c.l.b16 %v1614
          %v2088 = vunpack.c.h.b16 %v1614
          %v2089 = vunpack.c.l.b16 %v1615
          %v2090 = vunpack.c.l.b16 %v1616
          %v2091 = vunpack.c.h.b16 %v1616
          %v2092 = vunpack.c.l.b16 %v1617
          %v2093 = vunpack.c.l.b16 %v1618
          %v2094 = vunpack.c.h.b16 %v1618
          %v2095 = vunpack.c.l.b16 %v1619
          %v2096 = vunpack.c.l.b16 %v1620
          %v2097 = vunpack.c.h.b16 %v1620
          %v2098 = vunpack.c.l.b16 %v1621
          %v2099 = vunpack.c.l.b16 %v1622
          %v2100 = vunpack.c.h.b16 %v1622
          %v2101 = vunpack.c.l.b16 %v1623
          %v2102 = vunpack.c.l.b16 %v1624
          %v2103 = vunpack.c.h.b16 %v1624
          %v2104 = vunpack.c.l.b16 %v1625
          %v2105 = vunpack.c.l.b16 %v1626
          %v2106 = vunpack.c.h.b16 %v1626
          %v2107 = vunpack.c.l.b16 %v1627
          %v2108 = vunpack.c.l.b16 %v1628
          %v2109 = vunpack.c.h.b16 %v1628
          %v2110 = vunpack.c.l.b16 %v1629
          %v2111 = vunpack.c.l.b16 %v1630
          %v2112 = vunpack.c.h.b16 %v1630
          %v2113 = vunpack.c.l.b16 %v1631
          %v2114 = vunpack.c.l.b16 %v1632
          %v2115 = vunpack.c.h.b16 %v1632
          %v2116 = vunpack.c.l.b16 %v1633
          %v2117 = vunpack.c.l.b16 %v1634
          %v2118 = vunpack.c.h.b16 %v1634
          %v2119 = vunpack.c.l.b16 %v1635
          %v2120 = vunpack.c.l.b16 %v1636
          %v2121 = vunpack.c.h.b16 %v1636
          %v2122 = vunpack.c.l.b16 %v1637
          %v2123 = vunpack.c.l.b16 %v1638
          %v2124 = vunpack.c.h.b16 %v1638
          %v2125 = vunpack.c.l.b16 %v1639
          %v2126 = vunpack.c.l.b16 %v1640
          %v2127 = vunpack.c.h.b16 %v1640
          %v2128 = vunpack.c.l.b16 %v1641
          %v2129 = vunpack.c.l.b16 %v1642
          %v2130 = vunpack.c.h.b16 %v1642
          %v2131 = vunpack.c.l.b16 %v1643
          %v2132 = vunpack.c.l.b16 %v1644
          %v2133 = vunpack.c.h.b16 %v1644
          %v2134 = vunpack.c.l.b16 %v1645
          %v2135 = vunpack.c.l.b16 %v1646
          %v2136 = vunpack.c.h.b16 %v1646
          %v2137 = vunpack.c.l.b16 %v1647
          %v2138 = vunpack.c.l.b16 %v1648
          %v2139 = vunpack.c.h.b16 %v1648
          %v2140 = vunpack.c.l.b16 %v1649
          %v2141 = vunpack.c.l.b16 %v1650
          %v2142 = vunpack.c.h.b16 %v1650
          %v2143 = vunpack.c.l.b16 %v1651
          %v2144 = vunpack.c.l.b16 %v1652
          %v2145 = vunpack.c.h.b16 %v1652
          %v2146 = vunpack.c.l.b16 %v1653
          %v2147 = vunpack.c.l.b16 %v1654
          %v2148 = vunpack.c.h.b16 %v1654
          %v2149 = vunpack.c.l.b16 %v1655
          %v2150 = vunpack.c.l.b16 %v1656
          %v2151 = vunpack.c.h.b16 %v1656
          %v2152 = vunpack.c.l.b16 %v1657
          %v2153 = vunpack.c.l.b16 %v1658
          %v2154 = vunpack.c.h.b16 %v1658
          %v2155 = vunpack.c.l.b16 %v1659
          %v2156 = vunpack.c.l.b16 %v1660
          %v2157 = vunpack.c.h.b16 %v1660
          %v2158 = vunpack.c.l.b16 %v1661
          %v2159 = vpack.c.b16 %v1874, %v1871
          %v2160 = vpack.c.b16 %v1875, %v1872
          %v2161 = vpack.c.b16 %v1876, %v1873
          %v2162 = vpack.c.b16 %v1880, %v1877
          %v2163 = vpack.c.b16 %v1881, %v1878
          %v2164 = vpack.c.b16 %v1882, %v1879
          %v2165 = vpack.c.b16 %v1886, %v1883
          %v2166 = vpack.c.b16 %v1887, %v1884
          %v2167 = vpack.c.b16 %v1888, %v1885
          %v2168 = vpack.c.b16 %v1892, %v1889
          %v2169 = vpack.c.b16 %v1893, %v1890
          %v2170 = vpack.c.b16 %v1894, %v1891
          %v2171 = vpack.c.b16 %v1898, %v1895
          %v2172 = vpack.c.b16 %v1899, %v1896
          %v2173 = vpack.c.b16 %v1900, %v1897
          %v2174 = vpack.c.b16 %v1904, %v1901
          %v2175 = vpack.c.b16 %v1905, %v1902
          %v2176 = vpack.c.b16 %v1906, %v1903
          %v2177 = vpack.c.b16 %v1910, %v1907
          %v2178 = vpack.c.b16 %v1911, %v1908
          %v2179 = vpack.c.b16 %v1912, %v1909
          %v2180 = vpack.c.b16 %v1916, %v1913
          %v2181 = vpack.c.b16 %v1917, %v1914
          %v2182 = vpack.c.b16 %v1918, %v1915
          %v2183 = vpack.c.b16 %v1922, %v1919
          %v2184 = vpack.c.b16 %v1923, %v1920
          %v2185 = vpack.c.b16 %v1924, %v1921
          %v2186 = vpack.c.b16 %v1928, %v1925
          %v2187 = vpack.c.b16 %v1929, %v1926
          %v2188 = vpack.c.b16 %v1930, %v1927
          %v2189 = vpack.c.b16 %v1934, %v1931
          %v2190 = vpack.c.b16 %v1935, %v1932
          %v2191 = vpack.c.b16 %v1936, %v1933
          %v2192 = vpack.c.b16 %v1940, %v1937
          %v2193 = vpack.c.b16 %v1941, %v1938
          %v2194 = vpack.c.b16 %v1942, %v1939
          %v2195 = vpack.c.b16 %v1946, %v1943
          %v2196 = vpack.c.b16 %v1947, %v1944
          %v2197 = vpack.c.b16 %v1948, %v1945
          %v2198 = vpack.c.b16 %v1952, %v1949
          %v2199 = vpack.c.b16 %v1953, %v1950
          %v2200 = vpack.c.b16 %v1954, %v1951
          %v2201 = vpack.c.b16 %v1958, %v1955
          %v2202 = vpack.c.b16 %v1959, %v1956
          %v2203 = vpack.c.b16 %v1960, %v1957
          %v2204 = vpack.c.b16 %v1964, %v1961
          %v2205 = vpack.c.b16 %v1965, %v1962
          %v2206 = vpack.c.b16 %v1966, %v1963
          %v2207 = vpack.c.b16 %v1970, %v1967
          %v2208 = vpack.c.b16 %v1971, %v1968
          %v2209 = vpack.c.b16 %v1972, %v1969
          %v2210 = vpack.c.b16 %v1976, %v1973
          %v2211 = vpack.c.b16 %v1977, %v1974
          %v2212 = vpack.c.b16 %v1978, %v1975
          %v2213 = vpack.c.b16 %v1982, %v1979
          %v2214 = vpack.c.b16 %v1983, %v1980
          %v2215 = vpack.c.b16 %v1984, %v1981
          %v2216 = vpack.c.b16 %v1988, %v1985
          %v2217 = vpack.c.b16 %v1989, %v1986
          %v2218 = vpack.c.b16 %v1990, %v1987
          %v2219 = vpack.c.b16 %v1994, %v1991
          %v2220 = vpack.c.b16 %v1995, %v1992
          %v2221 = vpack.c.b16 %v1996, %v1993
          %v2222 = vpack.c.b16 %v2000, %v1997
          %v2223 = vpack.c.b16 %v2001, %v1998
          %v2224 = vpack.c.b16 %v2002, %v1999
          %v2225 = vpack.c.b16 %v2006, %v2003
          %v2226 = vpack.c.b16 %v2007, %v2004
          %v2227 = vpack.c.b16 %v2008, %v2005
          %v2228 = vpack.c.b16 %v2012, %v2009
          %v2229 = vpack.c.b16 %v2013, %v2010
          %v2230 = vpack.c.b16 %v2014, %v2011
          %v2231 = vpack.c.b16 %v2018, %v2015
          %v2232 = vpack.c.b16 %v2019, %v2016
          %v2233 = vpack.c.b16 %v2020, %v2017
          %v2234 = vpack.c.b16 %v2024, %v2021
          %v2235 = vpack.c.b16 %v2025, %v2022
          %v2236 = vpack.c.b16 %v2026, %v2023
          %v2237 = vpack.c.b16 %v2030, %v2027
          %v2238 = vpack.c.b16 %v2031, %v2028
          %v2239 = vpack.c.b16 %v2032, %v2029
          %v2240 = vpack.c.b16 %v2036, %v2033
          %v2241 = vpack.c.b16 %v2037, %v2034
          %v2242 = vpack.c.b16 %v2038, %v2035
          %v2243 = vpack.c.b16 %v2042, %v2039
          %v2244 = vpack.c.b16 %v2043, %v2040
          %v2245 = vpack.c.b16 %v2044, %v2041
          %v2246 = vpack.c.b16 %v2048, %v2045
          %v2247 = vpack.c.b16 %v2049, %v2046
          %v2248 = vpack.c.b16 %v2050, %v2047
          %v2249 = vpack.c.b16 %v2054, %v2051
          %v2250 = vpack.c.b16 %v2055, %v2052
          %v2251 = vpack.c.b16 %v2056, %v2053
          %v2252 = vpack.c.b16 %v2060, %v2057
          %v2253 = vpack.c.b16 %v2061, %v2058
          %v2254 = vpack.c.b16 %v2062, %v2059
          %v2255 = vpack.c.b16 %v2066, %v2063
          %v2256 = vpack.c.b16 %v2067, %v2064
          %v2257 = vpack.c.b16 %v2068, %v2065
          %v2258 = vpack.c.b16 %v2072, %v2069
          %v2259 = vpack.c.b16 %v2073, %v2070
          %v2260 = vpack.c.b16 %v2074, %v2071
          %v2261 = vpack.c.b16 %v2078, %v2075
          %v2262 = vpack.c.b16 %v2079, %v2076
          %v2263 = vpack.c.b16 %v2080, %v2077
          %v2264 = vpack.c.b16 %v2084, %v2081
          %v2265 = vpack.c.b16 %v2085, %v2082
          %v2266 = vpack.c.b16 %v2086, %v2083
          %v2267 = vpack.c.b16 %v2090, %v2087
          %v2268 = vpack.c.b16 %v2091, %v2088
          %v2269 = vpack.c.b16 %v2092, %v2089
          %v2270 = vpack.c.b16 %v2096, %v2093
          %v2271 = vpack.c.b16 %v2097, %v2094
          %v2272 = vpack.c.b16 %v2098, %v2095
          %v2273 = vpack.c.b16 %v2102, %v2099
          %v2274 = vpack.c.b16 %v2103, %v2100
          %v2275 = vpack.c.b16 %v2104, %v2101
          %v2276 = vpack.c.b16 %v2108, %v2105
          %v2277 = vpack.c.b16 %v2109, %v2106
          %v2278 = vpack.c.b16 %v2110, %v2107
          %v2279 = vpack.c.b16 %v2114, %v2111
          %v2280 = vpack.c.b16 %v2115, %v2112
          %v2281 = vpack.c.b16 %v2116, %v2113
          %v2282 = vpack.c.b16 %v2120, %v2117
          %v2283 = vpack.c.b16 %v2121, %v2118
          %v2284 = vpack.c.b16 %v2122, %v2119
          %v2285 = vpack.c.b16 %v2126, %v2123
          %v2286 = vpack.c.b16 %v2127, %v2124
          %v2287 = vpack.c.b16 %v2128, %v2125
          %v2288 = vpack.c.b16 %v2132, %v2129
          %v2289 = vpack.c.b16 %v2133, %v2130
          %v2290 = vpack.c.b16 %v2134, %v2131
          %v2291 = vpack.c.b16 %v2138, %v2135
          %v2292 = vpack.c.b16 %v2139, %v2136
          %v2293 = vpack.c.b16 %v2140, %v2137
          %v2294 = vpack.c.b16 %v2144, %v2141
          %v2295 = vpack.c.b16 %v2145, %v2142
          %v2296 = vpack.c.b16 %v2146, %v2143
          %v2297 = vpack.c.b16 %v2150, %v2147
          %v2298 = vpack.c.b16 %v2151, %v2148
          %v2299 = vpack.c.b16 %v2152, %v2149
          %v2300 = vpack.c.b16 %v2156, %v2153
          %v2301 = vpack.c.b16 %v2157, %v2154
          %v2302 = vpack.c.b16 %v2158, %v2155
          %2447 = vmatprep.subr.bf16.mxu0 %v2160
          %2448 = vmatpush1.bf16.msra.mxu0 %v2159
          %2449 = vmatprep.subr.bf16.mxu0 %v2163
          %2450 = vmatpush1.bf16.msra.mxu0 %v2162
          %2451 = vmatprep.subr.bf16.mxu0 %v2166
          %2452 = vmatpush1.bf16.msra.mxu0 %v2165
          %2453 = vmatprep.subr.bf16.mxu0 %v2169
          %2454 = vmatpush1.bf16.msra.mxu0 %v2168
          %2455 = vmatprep.subr.bf16.mxu0 %v2172
          %2456 = vmatpush1.bf16.msra.mxu0 %v2171
          %2457 = vmatprep.subr.bf16.mxu0 %v2175
          %2458 = vmatpush1.bf16.msra.mxu0 %v2174
          %2459 = vmatprep.subr.bf16.mxu0 %v2178
          %2460 = vmatpush1.bf16.msra.mxu0 %v2177
          %2461 = vmatprep.subr.bf16.mxu0 %v2181
          %2462 = vmatpush1.bf16.msra.mxu0 %v2180
          %2463 = vmatprep.subr.bf16.mxu0 %v2184
          %2464 = vmatpush1.bf16.msra.mxu0 %v2183
          %2465 = vmatprep.subr.bf16.mxu0 %v2187
          %2466 = vmatpush1.bf16.msra.mxu0 %v2186
          %2467 = vmatprep.subr.bf16.mxu0 %v2190
          %2468 = vmatpush1.bf16.msra.mxu0 %v2189
          %2469 = vmatprep.subr.bf16.mxu0 %v2193
          %2470 = vmatpush1.bf16.msra.mxu0 %v2192
          %2471 = vmatprep.subr.bf16.mxu0 %v2196
          %2472 = vmatpush1.bf16.msra.mxu0 %v2195
          %2473 = vmatprep.subr.bf16.mxu0 %v2199
          %2474 = vmatpush1.bf16.msra.mxu0 %v2198
          %2475 = vmatprep.subr.bf16.mxu0 %v2202
          %2476 = vmatpush1.bf16.msra.mxu0 %v2201
          %2477 = vmatprep.subr.bf16.mxu0 %v2205
          %2478 = vmatpush1.bf16.msra.mxu0 %v2204
          %2479 = vmatprep.mubr.bf16.mxu0 %v1465
          %2480 = vmatmul.mubr.bf16.gmra.mrb[0].mxu0 %v1464
          %v2481 = vpop.f32.mrb[0].mxu0
          %v2482 = vadd.f32 %v1667, %v2481
          %v2483 = vpop.f32.mrb[0].mxu0
          %v2484 = vadd.f32 %v1671, %v2483
          %v2485 = vpop.f32.mrb[0].mxu0
          %v2486 = vpop.f32.mrb[0].mxu0
          %2487 = vdwg.mxu0
          %2488 = vmatprep.subr.bf16.mxu0 %v2208
          %2489 = vmatpush1.bf16.msra.mxu0 %v2207
          %2490 = vmatprep.subr.bf16.mxu0 %v2211
          %2491 = vmatpush1.bf16.msra.mxu0 %v2210
          %2492 = vmatprep.subr.bf16.mxu0 %v2214
          %2493 = vmatpush1.bf16.msra.mxu0 %v2213
          %2494 = vmatprep.subr.bf16.mxu0 %v2217
          %2495 = vmatpush1.bf16.msra.mxu0 %v2216
          %2496 = vmatprep.subr.bf16.mxu0 %v2220
          %2497 = vmatpush1.bf16.msra.mxu0 %v2219
          %2498 = vmatprep.subr.bf16.mxu0 %v2223
          %2499 = vmatpush1.bf16.msra.mxu0 %v2222
          %2500 = vmatprep.subr.bf16.mxu0 %v2226
          %2501 = vmatpush1.bf16.msra.mxu0 %v2225
          %2502 = vmatprep.subr.bf16.mxu0 %v2229
          %2503 = vmatpush1.bf16.msra.mxu0 %v2228
          %2504 = vmatprep.subr.bf16.mxu0 %v2232
          %2505 = vmatpush1.bf16.msra.mxu0 %v2231
          %2506 = vmatprep.subr.bf16.mxu0 %v2235
          %2507 = vmatpush1.bf16.msra.mxu0 %v2234
          %2508 = vmatprep.subr.bf16.mxu0 %v2238
          %2509 = vmatpush1.bf16.msra.mxu0 %v2237
          %2510 = vmatprep.subr.bf16.mxu0 %v2241
          %2511 = vmatpush1.bf16.msra.mxu0 %v2240
          %2512 = vmatprep.subr.bf16.mxu0 %v2244
          %2513 = vmatpush1.bf16.msra.mxu0 %v2243
          %2514 = vmatprep.subr.bf16.mxu0 %v2247
          %2515 = vmatpush1.bf16.msra.mxu0 %v2246
          %2516 = vmatprep.subr.bf16.mxu0 %v2250
          %2517 = vmatpush1.bf16.msra.mxu0 %v2249
          %2518 = vmatprep.subr.bf16.mxu0 %v2253
          %2519 = vmatpush1.bf16.msra.mxu0 %v2252
          %2520 = vmatprep.mubr.bf16.mxu0 %v1467
          %2521 = vmatmul.mubr.bf16.gmra.mrb[0].mxu0 %v1466
          %v2522 = vpop.f32.mrb[0].mxu0
          %v2523 = vadd.f32 %v2482, %v2522
          %v2524 = vpop.f32.mrb[0].mxu0
          %v2525 = vadd.f32 %v2484, %v2524
          %v2526 = vpop.f32.mrb[0].mxu0
          %v2527 = vpop.f32.mrb[0].mxu0
          %2528 = vdwg.mxu0
          %2529 = vmatprep.subr.bf16.mxu0 %v2256
          %2530 = vmatpush1.bf16.msra.mxu0 %v2255
          %2531 = vmatprep.subr.bf16.mxu0 %v2259
          %2532 = vmatpush1.bf16.msra.mxu0 %v2258
          %2533 = vmatprep.subr.bf16.mxu0 %v2262
          %2534 = vmatpush1.bf16.msra.mxu0 %v2261
          %2535 = vmatprep.subr.bf16.mxu0 %v2265
          %2536 = vmatpush1.bf16.msra.mxu0 %v2264
          %2537 = vmatprep.subr.bf16.mxu0 %v2268
          %2538 = vmatpush1.bf16.msra.mxu0 %v2267
          %2539 = vmatprep.subr.bf16.mxu0 %v2271
          %2540 = vmatpush1.bf16.msra.mxu0 %v2270
          %2541 = vmatprep.subr.bf16.mxu0 %v2274
          %2542 = vmatpush1.bf16.msra.mxu0 %v2273
          %2543 = vmatprep.subr.bf16.mxu0 %v2277
          %2544 = vmatpush1.bf16.msra.mxu0 %v2276
          %2545 = vmatprep.subr.bf16.mxu0 %v2280
          %2546 = vmatpush1.bf16.msra.mxu0 %v2279
          %2547 = vmatprep.subr.bf16.mxu0 %v2283
          %2548 = vmatpush1.bf16.msra.mxu0 %v2282
          %2549 = vmatprep.subr.bf16.mxu0 %v2286
          %2550 = vmatpush1.bf16.msra.mxu0 %v2285
          %2551 = vmatprep.subr.bf16.mxu0 %v2289
          %2552 = vmatpush1.bf16.msra.mxu0 %v2288
          %2553 = vmatprep.subr.bf16.mxu0 %v2292
          %2554 = vmatpush1.bf16.msra.mxu0 %v2291
          %2555 = vmatprep.subr.bf16.mxu0 %v2295
          %2556 = vmatpush1.bf16.msra.mxu0 %v2294
          %2557 = vmatprep.subr.bf16.mxu0 %v2298
          %2558 = vmatpush1.bf16.msra.mxu0 %v2297
          %2559 = vmatprep.subr.bf16.mxu0 %v2301
          %2560 = vmatpush1.bf16.msra.mxu0 %v2300
          %2561 = vmatprep.mubr.bf16.mxu0 %v1469
          %2562 = vmatmul.mubr.bf16.gmra.mrb[0].mxu0 %v1468
          %v2563 = vpop.f32.mrb[0].mxu0
          %v2564 = vadd.f32 %v2523, %v2563
          %v2565 = vpop.f32.mrb[0].mxu0
          %v2566 = vadd.f32 %v2525, %v2565
          %v2567 = vpop.f32.mrb[0].mxu0
          %v2568 = vpop.f32.mrb[0].mxu0
          %2569 = vdwg.mxu0
          %2570 = vmatprep.subr.bf16.mxu0 0
          %2571 = vmatpush1.bf16.msra.mxu0 %v2161
          %2572 = vmatprep.subr.bf16.mxu0 0
          %2573 = vmatpush1.bf16.msra.mxu0 %v2164
          %2574 = vmatprep.subr.bf16.mxu0 0
          %2575 = vmatpush1.bf16.msra.mxu0 %v2167
          %2576 = vmatprep.subr.bf16.mxu0 0
          %2577 = vmatpush1.bf16.msra.mxu0 %v2170
          %2578 = vmatprep.subr.bf16.mxu0 0
          %2579 = vmatpush1.bf16.msra.mxu0 %v2173
          %2580 = vmatprep.subr.bf16.mxu0 0
          %2581 = vmatpush1.bf16.msra.mxu0 %v2176
          %2582 = vmatprep.subr.bf16.mxu0 0
          %2583 = vmatpush1.bf16.msra.mxu0 %v2179
          %2584 = vmatprep.subr.bf16.mxu0 0
          %2585 = vmatpush1.bf16.msra.mxu0 %v2182
          %2586 = vmatprep.subr.bf16.mxu0 0
          %2587 = vmatpush1.bf16.msra.mxu0 %v2185
          %2588 = vmatprep.subr.bf16.mxu0 0
          %2589 = vmatpush1.bf16.msra.mxu0 %v2188
          %2590 = vmatprep.subr.bf16.mxu0 0
          %2591 = vmatpush1.bf16.msra.mxu0 %v2191
          %2592 = vmatprep.subr.bf16.mxu0 0
          %2593 = vmatpush1.bf16.msra.mxu0 %v2194
          %2594 = vmatprep.subr.bf16.mxu0 0
          %2595 = vmatpush1.bf16.msra.mxu0 %v2197
          %2596 = vmatprep.subr.bf16.mxu0 0
          %2597 = vmatpush1.bf16.msra.mxu0 %v2200
          %2598 = vmatprep.subr.bf16.mxu0 0
          %2599 = vmatpush1.bf16.msra.mxu0 %v2203
          %2600 = vmatprep.subr.bf16.mxu0 0
          %2601 = vmatpush1.bf16.msra.mxu0 %v2206
          %2602 = vmatprep.mubr.bf16.mxu0 %v1465
          %2603 = vmatmul.mubr.bf16.gmra.mrb[0].mxu0 %v1464
          %v2604 = vpop.f32.mrb[0].mxu0
          %v2605 = vadd.f32 %v1675, %v2604
          %v2606 = vpop.f32.mrb[0].mxu0
          %v2607 = vpop.f32.mrb[0].mxu0
          %v2608 = vpop.f32.mrb[0].mxu0
          %2609 = vdwg.mxu0
          %2610 = vmatprep.subr.bf16.mxu0 0
          %2611 = vmatpush1.bf16.msra.mxu0 %v2209
          %2612 = vmatprep.subr.bf16.mxu0 0
          %2613 = vmatpush1.bf16.msra.mxu0 %v2212
          %2614 = vmatprep.subr.bf16.mxu0 0
          %2615 = vmatpush1.bf16.msra.mxu0 %v2215
          %2616 = vmatprep.subr.bf16.mxu0 0
          %2617 = vmatpush1.bf16.msra.mxu0 %v2218
          %2618 = vmatprep.subr.bf16.mxu0 0
          %2619 = vmatpush1.bf16.msra.mxu0 %v2221
          %2620 = vmatprep.subr.bf16.mxu0 0
          %2621 = vmatpush1.bf16.msra.mxu0 %v2224
          %2622 = vmatprep.subr.bf16.mxu0 0
          %2623 = vmatpush1.bf16.msra.mxu0 %v2227
          %2624 = vmatprep.subr.bf16.mxu0 0
          %2625 = vmatpush1.bf16.msra.mxu0 %v2230
          %2626 = vmatprep.subr.bf16.mxu0 0
          %2627 = vmatpush1.bf16.msra.mxu0 %v2233
          %2628 = vmatprep.subr.bf16.mxu0 0
          %2629 = vmatpush1.bf16.msra.mxu0 %v2236
          %2630 = vmatprep.subr.bf16.mxu0 0
          %2631 = vmatpush1.bf16.msra.mxu0 %v2239
          %2632 = vmatprep.subr.bf16.mxu0 0
          %2633 = vmatpush1.bf16.msra.mxu0 %v2242
          %2634 = vmatprep.subr.bf16.mxu0 0
          %2635 = vmatpush1.bf16.msra.mxu0 %v2245
          %2636 = vmatprep.subr.bf16.mxu0 0
          %2637 = vmatpush1.bf16.msra.mxu0 %v2248
          %2638 = vmatprep.subr.bf16.mxu0 0
          %2639 = vmatpush1.bf16.msra.mxu0 %v2251
          %2640 = vmatprep.subr.bf16.mxu0 0
          %2641 = vmatpush1.bf16.msra.mxu0 %v2254
          %2642 = vmatprep.mubr.bf16.mxu0 %v1467
          %2643 = vmatmul.mubr.bf16.gmra.mrb[0].mxu0 %v1466
          %v2644 = vpop.f32.mrb[0].mxu0
          %v2645 = vadd.f32 %v2605, %v2644
          %v2646 = vpop.f32.mrb[0].mxu0
          %v2647 = vpop.f32.mrb[0].mxu0
          %v2648 = vpop.f32.mrb[0].mxu0
          %2649 = vdwg.mxu0
          %2650 = vmatprep.subr.bf16.mxu0 0
          %2651 = vmatpush1.bf16.msra.mxu0 %v2257
          %2652 = vmatprep.subr.bf16.mxu0 0
          %2653 = vmatpush1.bf16.msra.mxu0 %v2260
          %2654 = vmatprep.subr.bf16.mxu0 0
          %2655 = vmatpush1.bf16.msra.mxu0 %v2263
          %2656 = vmatprep.subr.bf16.mxu0 0
          %2657 = vmatpush1.bf16.msra.mxu0 %v2266
          %2658 = vmatprep.subr.bf16.mxu0 0
          %2659 = vmatpush1.bf16.msra.mxu0 %v2269
          %2660 = vmatprep.subr.bf16.mxu0 0
          %2661 = vmatpush1.bf16.msra.mxu0 %v2272
          %2662 = vmatprep.subr.bf16.mxu0 0
          %2663 = vmatpush1.bf16.msra.mxu0 %v2275
          %2664 = vmatprep.subr.bf16.mxu0 0
          %2665 = vmatpush1.bf16.msra.mxu0 %v2278
          %2666 = vmatprep.subr.bf16.mxu0 0
          %2667 = vmatpush1.bf16.msra.mxu0 %v2281
          %2668 = vmatprep.subr.bf16.mxu0 0
          %2669 = vmatpush1.bf16.msra.mxu0 %v2284
          %2670 = vmatprep.subr.bf16.mxu0 0
          %2671 = vmatpush1.bf16.msra.mxu0 %v2287
          %2672 = vmatprep.subr.bf16.mxu0 0
          %2673 = vmatpush1.bf16.msra.mxu0 %v2290
          %2674 = vmatprep.subr.bf16.mxu0 0
          %2675 = vmatpush1.bf16.msra.mxu0 %v2293
          %2676 = vmatprep.subr.bf16.mxu0 0
          %2677 = vmatpush1.bf16.msra.mxu0 %v2296
          %2678 = vmatprep.subr.bf16.mxu0 0
          %2679 = vmatpush1.bf16.msra.mxu0 %v2299
          %2680 = vmatprep.subr.bf16.mxu0 0
          %2681 = vmatpush1.bf16.msra.mxu0 %v2302
          %2682 = vmatprep.mubr.bf16.mxu0 %v1469
          %2683 = vmatmul.mubr.bf16.gmra.mrb[0].mxu0 %v1468
          %v2684 = vpop.f32.mrb[0].mxu0
          %v2685 = vadd.f32 %v2645, %v2684
          %v2686 = vpop.f32.mrb[0].mxu0
          %v2687 = vpop.f32.mrb[0].mxu0
          %v2688 = vpop.f32.mrb[0].mxu0
          %2689 = vdwg.mxu0
          %v2690 = vmax.f32 %v2564, 0.0
          %v2691 = vmax.f32 %v2566, 0.0
          %v2692 = vmax.f32 %v2685, 0.0
          %v2693 = vpack.c.bf16 %v2690, %v2690
          %v2694 = vpack.c.bf16 %v2691, %v2691
          %v2695 = vpack.c.bf16 %v2692, %v2692
          %v2696 = vld [vmem:[%s9] sm:$0xff]
          %v2697 = vld [vmem:[%s9 + $0x8] sm:$0xff]
          %v2698 = vld [vmem:[%s9 + $0x10] sm:$0xff]
          %v2699 = vld [vmem:[%s9 + $0x18] sm:$0xff]
          %v2700 = vld [vmem:[%s9 + $0x20] sm:$0xff]
          %v2701 = vld [vmem:[%s9 + $0x28] sm:$0xff]
          %v2702 = vld [vmem:[%s9 + $0x30] sm:$0xff]
          %v2703 = vld [vmem:[%s9 + $0x38] sm:$0xff]
          %v2704 = vld [vmem:[%s9 + $0x40] sm:$0xff]
          %v2705 = vld [vmem:[%s9 + $0x48] sm:$0xff]
          %v2706 = vld [vmem:[%s9 + $0x50] sm:$0xff]
          %v2707 = vld [vmem:[%s9 + $0x58] sm:$0xff]
          %v2708 = vld [vmem:[%s9 + $0x60] sm:$0xff]
          %v2709 = vld [vmem:[%s9 + $0x68] sm:$0xff]
          %v2710 = vld [vmem:[%s9 + $0x70] sm:$0xff]
          %v2711 = vld [vmem:[%s9 + $0x78] sm:$0xff]
          %v2712 = vld [vmem:[%s9 + $0x80] sm:$0xff]
          %v2713 = vld [vmem:[%s9 + $0x88] sm:$0xff]
          %v2714 = vld [vmem:[%s9 + $0x90] sm:$0xff]
          %v2715 = vld [vmem:[%s9 + $0x98] sm:$0xff]
          %v2716 = vld [vmem:[%s9 + $0xa0] sm:$0xff]
          %v2717 = vld [vmem:[%s9 + $0xa8] sm:$0xff]
          %v2718 = vld [vmem:[%s9 + $0xb0] sm:$0xff]
          %v2719 = vld [vmem:[%s9 + $0xb8] sm:$0xff]
          %v2720 = vld [vmem:[%s9 + $0xc0] sm:$0xff]
          %v2721 = vld [vmem:[%s9 + $0xc8] sm:$0xff]
          %v2722 = vld [vmem:[%s9 + $0xd0] sm:$0xff]
          %v2723 = vld [vmem:[%s9 + $0xd8] sm:$0xff]
          %v2724 = vld [vmem:[%s9 + $0xe0] sm:$0xff]
          %v2725 = vld [vmem:[%s9 + $0xe8] sm:$0xff]
          %v2726 = vld [vmem:[%s9 + $0xf0] sm:$0xff]
          %v2727 = vld [vmem:[%s9 + $0xf8] sm:$0xff]
          %v2728 = vld [vmem:[%s9 + $0x100] sm:$0xff]
          %v2729 = vld [vmem:[%s9 + $0x108] sm:$0xff]
          %v2730 = vld [vmem:[%s9 + $0x110] sm:$0xff]
          %v2731 = vld [vmem:[%s9 + $0x118] sm:$0xff]
          %v2732 = vld [vmem:[%s9 + $0x120] sm:$0xff]
          %v2733 = vld [vmem:[%s9 + $0x128] sm:$0xff]
          %v2734 = vld [vmem:[%s9 + $0x130] sm:$0xff]
          %v2735 = vld [vmem:[%s9 + $0x138] sm:$0xff]
          %v2736 = vld [vmem:[%s9 + $0x140] sm:$0xff]
          %v2737 = vld [vmem:[%s9 + $0x148] sm:$0xff]
          %v2738 = vld [vmem:[%s9 + $0x150] sm:$0xff]
          %v2739 = vld [vmem:[%s9 + $0x158] sm:$0xff]
          %v2740 = vld [vmem:[%s9 + $0x160] sm:$0xff]
          %v2741 = vld [vmem:[%s9 + $0x168] sm:$0xff]
          %v2742 = vld [vmem:[%s9 + $0x170] sm:$0xff]
          %v2743 = vld [vmem:[%s9 + $0x178] sm:$0xff]
          %v2744 = vld [vmem:[#allocation12] sm:$0x3]
          %v2746 = vlaneseq
          %v2747 = vshrl.u32 %v2746, 7
          %v2748 = vsub.s32 0, %v2747
          %v2749 = vrot.slane %v2744, %v2748
          %v2750 = vlaneseq
          %v2751 = vshrl.u32 %v2750, 7
          %v2752 = vsub.s32 1, %v2751
          %v2753 = vrot.slane %v2744, %v2752
          %v2804 = vunpack.c.l.b16 %v2696
          %v2805 = vunpack.c.h.b16 %v2696
          %v2806 = vunpack.c.l.b16 %v2697
          %v2807 = vunpack.c.h.b16 %v2697
          %v2808 = vunpack.c.l.b16 %v2698
          %v2809 = vunpack.c.h.b16 %v2698
          %v2810 = vunpack.c.l.b16 %v2699
          %v2811 = vunpack.c.h.b16 %v2699
          %v2812 = vunpack.c.l.b16 %v2700
          %v2813 = vunpack.c.h.b16 %v2700
          %v2814 = vunpack.c.l.b16 %v2701
          %v2815 = vunpack.c.h.b16 %v2701
          %v2816 = vunpack.c.l.b16 %v2702
          %v2817 = vunpack.c.h.b16 %v2702
          %v2818 = vunpack.c.l.b16 %v2703
          %v2819 = vunpack.c.h.b16 %v2703
          %v2820 = vunpack.c.l.b16 %v2704
          %v2821 = vunpack.c.h.b16 %v2704
          %v2822 = vunpack.c.l.b16 %v2705
          %v2823 = vunpack.c.h.b16 %v2705
          %v2824 = vunpack.c.l.b16 %v2706
          %v2825 = vunpack.c.h.b16 %v2706
          %v2826 = vunpack.c.l.b16 %v2707
          %v2827 = vunpack.c.h.b16 %v2707
          %v2828 = vunpack.c.l.b16 %v2708
          %v2829 = vunpack.c.h.b16 %v2708
          %v2830 = vunpack.c.l.b16 %v2709
          %v2831 = vunpack.c.h.b16 %v2709
          %v2832 = vunpack.c.l.b16 %v2710
          %v2833 = vunpack.c.h.b16 %v2710
          %v2834 = vunpack.c.l.b16 %v2711
          %v2835 = vunpack.c.h.b16 %v2711
          %v2836 = vunpack.c.l.b16 %v2712
          %v2837 = vunpack.c.h.b16 %v2712
          %v2838 = vunpack.c.l.b16 %v2713
          %v2839 = vunpack.c.h.b16 %v2713
          %v2840 = vunpack.c.l.b16 %v2714
          %v2841 = vunpack.c.h.b16 %v2714
          %v2842 = vunpack.c.l.b16 %v2715
          %v2843 = vunpack.c.h.b16 %v2715
          %v2844 = vunpack.c.l.b16 %v2716
          %v2845 = vunpack.c.h.b16 %v2716
          %v2846 = vunpack.c.l.b16 %v2717
          %v2847 = vunpack.c.h.b16 %v2717
          %v2848 = vunpack.c.l.b16 %v2718
          %v2849 = vunpack.c.h.b16 %v2718
          %v2850 = vunpack.c.l.b16 %v2719
          %v2851 = vunpack.c.h.b16 %v2719
          %v2852 = vunpack.c.l.b16 %v2720
          %v2853 = vunpack.c.h.b16 %v2720
          %v2854 = vunpack.c.l.b16 %v2721
          %v2855 = vunpack.c.h.b16 %v2721
          %v2856 = vunpack.c.l.b16 %v2722
          %v2857 = vunpack.c.h.b16 %v2722
          %v2858 = vunpack.c.l.b16 %v2723
          %v2859 = vunpack.c.h.b16 %v2723
          %v2860 = vunpack.c.l.b16 %v2724
          %v2861 = vunpack.c.h.b16 %v2724
          %v2862 = vunpack.c.l.b16 %v2725
          %v2863 = vunpack.c.h.b16 %v2725
          %v2864 = vunpack.c.l.b16 %v2726
          %v2865 = vunpack.c.h.b16 %v2726
          %v2866 = vunpack.c.l.b16 %v2727
          %v2867 = vunpack.c.h.b16 %v2727
          %v2868 = vunpack.c.l.b16 %v2728
          %v2869 = vunpack.c.h.b16 %v2728
          %v2870 = vunpack.c.l.b16 %v2729
          %v2871 = vunpack.c.h.b16 %v2729
          %v2872 = vunpack.c.l.b16 %v2730
          %v2873 = vunpack.c.h.b16 %v2730
          %v2874 = vunpack.c.l.b16 %v2731
          %v2875 = vunpack.c.h.b16 %v2731
          %v2876 = vunpack.c.l.b16 %v2732
          %v2877 = vunpack.c.h.b16 %v2732
          %v2878 = vunpack.c.l.b16 %v2733
          %v2879 = vunpack.c.h.b16 %v2733
          %v2880 = vunpack.c.l.b16 %v2734
          %v2881 = vunpack.c.h.b16 %v2734
          %v2882 = vunpack.c.l.b16 %v2735
          %v2883 = vunpack.c.h.b16 %v2735
          %v2884 = vunpack.c.l.b16 %v2736
          %v2885 = vunpack.c.h.b16 %v2736
          %v2886 = vunpack.c.l.b16 %v2737
          %v2887 = vunpack.c.h.b16 %v2737
          %v2888 = vunpack.c.l.b16 %v2738
          %v2889 = vunpack.c.h.b16 %v2738
          %v2890 = vunpack.c.l.b16 %v2739
          %v2891 = vunpack.c.h.b16 %v2739
          %v2892 = vunpack.c.l.b16 %v2740
          %v2893 = vunpack.c.h.b16 %v2740
          %v2894 = vunpack.c.l.b16 %v2741
          %v2895 = vunpack.c.h.b16 %v2741
          %v2896 = vunpack.c.l.b16 %v2742
          %v2897 = vunpack.c.h.b16 %v2742
          %v2898 = vunpack.c.l.b16 %v2743
          %v2899 = vunpack.c.h.b16 %v2743
          %v2900 = vpack.c.b16 %v2806, %v2804
          %v2901 = vpack.c.b16 %v2807, %v2805
          %v2902 = vpack.c.b16 %v2810, %v2808
          %v2903 = vpack.c.b16 %v2811, %v2809
          %v2904 = vpack.c.b16 %v2814, %v2812
          %v2905 = vpack.c.b16 %v2815, %v2813
          %v2906 = vpack.c.b16 %v2818, %v2816
          %v2907 = vpack.c.b16 %v2819, %v2817
          %v2908 = vpack.c.b16 %v2822, %v2820
          %v2909 = vpack.c.b16 %v2823, %v2821
          %v2910 = vpack.c.b16 %v2826, %v2824
          %v2911 = vpack.c.b16 %v2827, %v2825
          %v2912 = vpack.c.b16 %v2830, %v2828
          %v2913 = vpack.c.b16 %v2831, %v2829
          %v2914 = vpack.c.b16 %v2834, %v2832
          %v2915 = vpack.c.b16 %v2835, %v2833
          %v2916 = vpack.c.b16 %v2838, %v2836
          %v2917 = vpack.c.b16 %v2839, %v2837
          %v2918 = vpack.c.b16 %v2842, %v2840
          %v2919 = vpack.c.b16 %v2843, %v2841
          %v2920 = vpack.c.b16 %v2846, %v2844
          %v2921 = vpack.c.b16 %v2847, %v2845
          %v2922 = vpack.c.b16 %v2850, %v2848
          %v2923 = vpack.c.b16 %v2851, %v2849
          %v2924 = vpack.c.b16 %v2854, %v2852
          %v2925 = vpack.c.b16 %v2855, %v2853
          %v2926 = vpack.c.b16 %v2858, %v2856
          %v2927 = vpack.c.b16 %v2859, %v2857
          %v2928 = vpack.c.b16 %v2862, %v2860
          %v2929 = vpack.c.b16 %v2863, %v2861
          %v2930 = vpack.c.b16 %v2866, %v2864
          %v2931 = vpack.c.b16 %v2867, %v2865
          %v2932 = vpack.c.b16 %v2870, %v2868
          %v2933 = vpack.c.b16 %v2871, %v2869
          %v2934 = vpack.c.b16 %v2874, %v2872
          %v2935 = vpack.c.b16 %v2875, %v2873
          %v2936 = vpack.c.b16 %v2878, %v2876
          %v2937 = vpack.c.b16 %v2879, %v2877
          %v2938 = vpack.c.b16 %v2882, %v2880
          %v2939 = vpack.c.b16 %v2883, %v2881
          %v2940 = vpack.c.b16 %v2886, %v2884
          %v2941 = vpack.c.b16 %v2887, %v2885
          %v2942 = vpack.c.b16 %v2890, %v2888
          %v2943 = vpack.c.b16 %v2891, %v2889
          %v2944 = vpack.c.b16 %v2894, %v2892
          %v2945 = vpack.c.b16 %v2895, %v2893
          %v2946 = vpack.c.b16 %v2898, %v2896
          %v2947 = vpack.c.b16 %v2899, %v2897
          %2996 = vmatprep.subr.bf16.mxu0 %v2901
          %2997 = vmatpush1.bf16.msra.mxu0 %v2900
          %2998 = vmatprep.subr.bf16.mxu0 %v2903
          %2999 = vmatpush1.bf16.msra.mxu0 %v2902
          %3000 = vmatprep.subr.bf16.mxu0 %v2905
          %3001 = vmatpush1.bf16.msra.mxu0 %v2904
          %3002 = vmatprep.subr.bf16.mxu0 %v2907
          %3003 = vmatpush1.bf16.msra.mxu0 %v2906
          %3004 = vmatprep.subr.bf16.mxu0 %v2909
          %3005 = vmatpush1.bf16.msra.mxu0 %v2908
          %3006 = vmatprep.subr.bf16.mxu0 %v2911
          %3007 = vmatpush1.bf16.msra.mxu0 %v2910
          %3008 = vmatprep.subr.bf16.mxu0 %v2913
          %3009 = vmatpush1.bf16.msra.mxu0 %v2912
          %3010 = vmatprep.subr.bf16.mxu0 %v2915
          %3011 = vmatpush1.bf16.msra.mxu0 %v2914
          %3012 = vmatprep.subr.bf16.mxu0 %v2917
          %3013 = vmatpush1.bf16.msra.mxu0 %v2916
          %3014 = vmatprep.subr.bf16.mxu0 %v2919
          %3015 = vmatpush1.bf16.msra.mxu0 %v2918
          %3016 = vmatprep.subr.bf16.mxu0 %v2921
          %3017 = vmatpush1.bf16.msra.mxu0 %v2920
          %3018 = vmatprep.subr.bf16.mxu0 %v2923
          %3019 = vmatpush1.bf16.msra.mxu0 %v2922
          %3020 = vmatprep.subr.bf16.mxu0 %v2925
          %3021 = vmatpush1.bf16.msra.mxu0 %v2924
          %3022 = vmatprep.subr.bf16.mxu0 %v2927
          %3023 = vmatpush1.bf16.msra.mxu0 %v2926
          %3024 = vmatprep.subr.bf16.mxu0 %v2929
          %3025 = vmatpush1.bf16.msra.mxu0 %v2928
          %3026 = vmatprep.subr.bf16.mxu0 %v2931
          %3027 = vmatpush1.bf16.msra.mxu0 %v2930
          %3028 = vmatprep.mubr.bf16.mxu0 %v2694
          %3029 = vmatmul.mubr.bf16.gmra.mrb[0].mxu0 %v2693
          %v3030 = vpop.f32.mrb[0].mxu0
          %v3031 = vadd.f32 %v2749, %v3030
          %v3032 = vpop.f32.mrb[0].mxu0
          %v3033 = vadd.f32 %v2753, %v3032
          %v3034 = vpop.f32.mrb[0].mxu0
          %v3035 = vpop.f32.mrb[0].mxu0
          %3036 = vdwg.mxu0
          %3037 = vmatprep.subr.bf16.mxu0 %v2933
          %3038 = vmatpush1.bf16.msra.mxu0 %v2932
          %3039 = vmatprep.subr.bf16.mxu0 %v2935
          %3040 = vmatpush1.bf16.msra.mxu0 %v2934
          %3041 = vmatprep.subr.bf16.mxu0 %v2937
          %3042 = vmatpush1.bf16.msra.mxu0 %v2936
          %3043 = vmatprep.subr.bf16.mxu0 %v2939
          %3044 = vmatpush1.bf16.msra.mxu0 %v2938
          %3045 = vmatprep.subr.bf16.mxu0 %v2941
          %3046 = vmatpush1.bf16.msra.mxu0 %v2940
          %3047 = vmatprep.subr.bf16.mxu0 %v2943
          %3048 = vmatpush1.bf16.msra.mxu0 %v2942
          %3049 = vmatprep.subr.bf16.mxu0 %v2945
          %3050 = vmatpush1.bf16.msra.mxu0 %v2944
          %3051 = vmatprep.subr.bf16.mxu0 %v2947
          %3052 = vmatpush1.bf16.msra.mxu0 %v2946
          %3053 = vmatprep.subr.bf16.mxu0 0
          %3054 = vmatpush1.bf16.msra.mxu0 0
          %3055 = vmatprep.subr.bf16.mxu0 0
          %3056 = vmatpush1.bf16.msra.mxu0 0
          %3057 = vmatprep.subr.bf16.mxu0 0
          %3058 = vmatpush1.bf16.msra.mxu0 0
          %3059 = vmatprep.subr.bf16.mxu0 0
          %3060 = vmatpush1.bf16.msra.mxu0 0
          %3061 = vmatprep.subr.bf16.mxu0 0
          %3062 = vmatpush1.bf16.msra.mxu0 0
          %3063 = vmatprep.subr.bf16.mxu0 0
          %3064 = vmatpush1.bf16.msra.mxu0 0
          %3065 = vmatprep.subr.bf16.mxu0 0
          %3066 = vmatpush1.bf16.msra.mxu0 0
          %3067 = vmatprep.subr.bf16.mxu0 0
          %3068 = vmatpush1.bf16.msra.mxu0 0
          %3069 = vmatprep.mubr.bf16.mxu0 0
          %3070 = vmatmul.mubr.bf16.gmra.mrb[0].mxu0 %v2695
          %v3071 = vpop.f32.mrb[0].mxu0
          %v3072 = vadd.f32 %v3031, %v3071
          %v3073 = vpop.f32.mrb[0].mxu0
          %v3074 = vadd.f32 %v3033, %v3073
          %v3075 = vpop.f32.mrb[0].mxu0
          %v3076 = vpop.f32.mrb[0].mxu0
          %3077 = vdwg.mxu0
          %v3078 = vmax.f32 %v3072, 0.0
          %v3079 = vmax.f32 %v3074, 0.0
          %v3080 = vpack.c.bf16 %v3078, %v3078
          %v3081 = vpack.c.bf16 %v3079, %v3079
          %v3082 = vld [vmem:[%s11] sm:$0xf]
          %v3083 = vld [vmem:[%s11 + $0x4] sm:$0xf]
          %v3084 = vld [vmem:[%s11 + $0x8] sm:$0xf]
          %v3085 = vld [vmem:[%s11 + $0xc] sm:$0xf]
          %v3086 = vld [vmem:[%s11 + $0x10] sm:$0xf]
          %v3087 = vld [vmem:[%s11 + $0x14] sm:$0xf]
          %v3088 = vld [vmem:[%s11 + $0x18] sm:$0xf]
          %v3089 = vld [vmem:[%s11 + $0x1c] sm:$0xf]
          %v3090 = vld [vmem:[%s11 + $0x20] sm:$0xf]
          %v3091 = vld [vmem:[%s11 + $0x24] sm:$0xf]
          %v3092 = vld [vmem:[%s11 + $0x28] sm:$0xf]
          %v3093 = vld [vmem:[%s11 + $0x2c] sm:$0xf]
          %v3094 = vld [vmem:[%s11 + $0x30] sm:$0xf]
          %v3095 = vld [vmem:[%s11 + $0x34] sm:$0xf]
          %v3096 = vld [vmem:[%s11 + $0x38] sm:$0xf]
          %v3097 = vld [vmem:[%s11 + $0x3c] sm:$0xf]
          %v3098 = vld [vmem:[%s11 + $0x40] sm:$0xf]
          %v3099 = vld [vmem:[%s11 + $0x44] sm:$0xf]
          %v3100 = vld [vmem:[%s11 + $0x48] sm:$0xf]
          %v3101 = vld [vmem:[%s11 + $0x4c] sm:$0xf]
          %v3102 = vld [vmem:[%s11 + $0x50] sm:$0xf]
          %v3103 = vld [vmem:[%s11 + $0x54] sm:$0xf]
          %v3104 = vld [vmem:[%s11 + $0x58] sm:$0xf]
          %v3105 = vld [vmem:[%s11 + $0x5c] sm:$0xf]
          %v3106 = vld [vmem:[%s11 + $0x60] sm:$0xf]
          %v3107 = vld [vmem:[%s11 + $0x64] sm:$0xf]
          %v3108 = vld [vmem:[%s11 + $0x68] sm:$0xf]
          %v3109 = vld [vmem:[%s11 + $0x6c] sm:$0xf]
          %v3110 = vld [vmem:[%s11 + $0x70] sm:$0xf]
          %v3111 = vld [vmem:[%s11 + $0x74] sm:$0xf]
          %v3112 = vld [vmem:[%s11 + $0x78] sm:$0xf]
          %v3113 = vld [vmem:[%s11 + $0x7c] sm:$0xf]
          %v3114 = vld [vmem:[#allocation13] sm:$0x1]
          %v3116 = vlaneseq
          %v3117 = vshrl.u32 %v3116, 7
          %v3118 = vsub.s32 0, %v3117
          %v3119 = vrot.slane %v3114, %v3118
          %v3153 = vunpack.c.l.b16 %v3082
          %v3154 = vunpack.c.l.b16 %v3083
          %v3155 = vunpack.c.l.b16 %v3084
          %v3156 = vunpack.c.l.b16 %v3085
          %v3157 = vunpack.c.l.b16 %v3086
          %v3158 = vunpack.c.l.b16 %v3087
          %v3159 = vunpack.c.l.b16 %v3088
          %v3160 = vunpack.c.l.b16 %v3089
          %v3161 = vunpack.c.l.b16 %v3090
          %v3162 = vunpack.c.l.b16 %v3091
          %v3163 = vunpack.c.l.b16 %v3092
          %v3164 = vunpack.c.l.b16 %v3093
          %v3165 = vunpack.c.l.b16 %v3094
          %v3166 = vunpack.c.l.b16 %v3095
          %v3167 = vunpack.c.l.b16 %v3096
          %v3168 = vunpack.c.l.b16 %v3097
          %v3169 = vunpack.c.l.b16 %v3098
          %v3170 = vunpack.c.l.b16 %v3099
          %v3171 = vunpack.c.l.b16 %v3100
          %v3172 = vunpack.c.l.b16 %v3101
          %v3173 = vunpack.c.l.b16 %v3102
          %v3174 = vunpack.c.l.b16 %v3103
          %v3175 = vunpack.c.l.b16 %v3104
          %v3176 = vunpack.c.l.b16 %v3105
          %v3177 = vunpack.c.l.b16 %v3106
          %v3178 = vunpack.c.l.b16 %v3107
          %v3179 = vunpack.c.l.b16 %v3108
          %v3180 = vunpack.c.l.b16 %v3109
          %v3181 = vunpack.c.l.b16 %v3110
          %v3182 = vunpack.c.l.b16 %v3111
          %v3183 = vunpack.c.l.b16 %v3112
          %v3184 = vunpack.c.l.b16 %v3113
          %v3185 = vpack.c.b16 %v3154, %v3153
          %v3186 = vpack.c.b16 %v3156, %v3155
          %v3187 = vpack.c.b16 %v3158, %v3157
          %v3188 = vpack.c.b16 %v3160, %v3159
          %v3189 = vpack.c.b16 %v3162, %v3161
          %v3190 = vpack.c.b16 %v3164, %v3163
          %v3191 = vpack.c.b16 %v3166, %v3165
          %v3192 = vpack.c.b16 %v3168, %v3167
          %v3193 = vpack.c.b16 %v3170, %v3169
          %v3194 = vpack.c.b16 %v3172, %v3171
          %v3195 = vpack.c.b16 %v3174, %v3173
          %v3196 = vpack.c.b16 %v3176, %v3175
          %v3197 = vpack.c.b16 %v3178, %v3177
          %v3198 = vpack.c.b16 %v3180, %v3179
          %v3199 = vpack.c.b16 %v3182, %v3181
          %v3200 = vpack.c.b16 %v3184, %v3183
          %3217 = vmatprep.subr.bf16.mxu0 0
          %3218 = vmatpush1.bf16.msra.mxu0 %v3185
          %3219 = vmatprep.subr.bf16.mxu0 0
          %3220 = vmatpush1.bf16.msra.mxu0 %v3186
          %3221 = vmatprep.subr.bf16.mxu0 0
          %3222 = vmatpush1.bf16.msra.mxu0 %v3187
          %3223 = vmatprep.subr.bf16.mxu0 0
          %3224 = vmatpush1.bf16.msra.mxu0 %v3188
          %3225 = vmatprep.subr.bf16.mxu0 0
          %3226 = vmatpush1.bf16.msra.mxu0 %v3189
          %3227 = vmatprep.subr.bf16.mxu0 0
          %3228 = vmatpush1.bf16.msra.mxu0 %v3190
          %3229 = vmatprep.subr.bf16.mxu0 0
          %3230 = vmatpush1.bf16.msra.mxu0 %v3191
          %3231 = vmatprep.subr.bf16.mxu0 0
          %3232 = vmatpush1.bf16.msra.mxu0 %v3192
          %3233 = vmatprep.subr.bf16.mxu0 0
          %3234 = vmatpush1.bf16.msra.mxu0 %v3193
          %3235 = vmatprep.subr.bf16.mxu0 0
          %3236 = vmatpush1.bf16.msra.mxu0 %v3194
          %3237 = vmatprep.subr.bf16.mxu0 0
          %3238 = vmatpush1.bf16.msra.mxu0 %v3195
          %3239 = vmatprep.subr.bf16.mxu0 0
          %3240 = vmatpush1.bf16.msra.mxu0 %v3196
          %3241 = vmatprep.subr.bf16.mxu0 0
          %3242 = vmatpush1.bf16.msra.mxu0 %v3197
          %3243 = vmatprep.subr.bf16.mxu0 0
          %3244 = vmatpush1.bf16.msra.mxu0 %v3198
          %3245 = vmatprep.subr.bf16.mxu0 0
          %3246 = vmatpush1.bf16.msra.mxu0 %v3199
          %3247 = vmatprep.subr.bf16.mxu0 0
          %3248 = vmatpush1.bf16.msra.mxu0 %v3200
          %3249 = vmatprep.mubr.bf16.mxu0 %v3081
          %3250 = vmatmul.mubr.bf16.gmra.mrb[0].mxu0 %v3080
          %v3251 = vpop.f32.mrb[0].mxu0
          %v3252 = vadd.f32 %v3119, %v3251
          %v3253 = vpop.f32.mrb[0].mxu0
          %v3254 = vpop.f32.mrb[0].mxu0
          %v3255 = vpop.f32.mrb[0].mxu0
          %3256 = vdwg.mxu0
          %v3257 = vmax.f32 %v3252, 0.0
          %v3258 = vld [vmem:[%s13] sm:$0xff]
          %v3259 = vld [vmem:[%s13 + $0x8] sm:$0xff]
          %v3260 = vld [vmem:[%s13 + $0x10] sm:$0xff]
          %v3261 = vld [vmem:[%s13 + $0x18] sm:$0xff]
          %v3262 = vld [vmem:[%s13 + $0x20] sm:$0xff]
          %v3263 = vld [vmem:[%s13 + $0x28] sm:$0xff]
          %v3264 = vld [vmem:[%s13 + $0x30] sm:$0xff]
          %v3265 = vld [vmem:[%s13 + $0x38] sm:$0xff]
          %v3266 = vld [vmem:[%s13 + $0x40] sm:$0xff]
          %v3267 = vld [vmem:[%s13 + $0x48] sm:$0xff]
          %v3268 = vld [vmem:[%s13 + $0x50] sm:$0xff]
          %v3269 = vld [vmem:[%s13 + $0x58] sm:$0xff]
          %v3270 = vld [vmem:[%s13 + $0x60] sm:$0xff]
          %v3271 = vld [vmem:[%s13 + $0x68] sm:$0xff]
          %v3272 = vld [vmem:[%s13 + $0x70] sm:$0xff]
          %v3273 = vld [vmem:[%s13 + $0x78] sm:$0xff]
          %v3274 = vld [vmem:[#allocation15] sm:$0x1]
          %v3276 = vlaneseq
          %v3277 = vshrl.u32 %v3276, 7
          %v3278 = vsub.s32 0, %v3277
          %v3279 = vrot.slane %v3274, %v3278
          %3281 = vmatprep.subr.mxu0 0.0
          %3282 = vmatpush1.msra.mxu0 %v3258
          %3283 = vmatprep.subr.mxu0 0.0
          %3284 = vmatpush1.msra.mxu0 %v3259
          %3285 = vmatprep.subr.mxu0 0.0
          %3286 = vmatpush1.msra.mxu0 %v3260
          %3287 = vmatprep.subr.mxu0 0.0
          %3288 = vmatpush1.msra.mxu0 %v3261
          %3289 = vmatprep.subr.mxu0 0.0
          %3290 = vmatpush1.msra.mxu0 %v3262
          %3291 = vmatprep.subr.mxu0 0.0
          %3292 = vmatpush1.msra.mxu0 %v3263
          %3293 = vmatprep.subr.mxu0 0.0
          %3294 = vmatpush1.msra.mxu0 %v3264
          %3295 = vmatprep.subr.mxu0 0.0
          %3296 = vmatpush1.msra.mxu0 %v3265
          %3297 = vmatprep.subr.mxu0 0.0
          %3298 = vmatpush1.msra.mxu0 %v3266
          %3299 = vmatprep.subr.mxu0 0.0
          %3300 = vmatpush1.msra.mxu0 %v3267
          %3301 = vmatprep.subr.mxu0 0.0
          %3302 = vmatpush1.msra.mxu0 %v3268
          %3303 = vmatprep.subr.mxu0 0.0
          %3304 = vmatpush1.msra.mxu0 %v3269
          %3305 = vmatprep.subr.mxu0 0.0
          %3306 = vmatpush1.msra.mxu0 %v3270
          %3307 = vmatprep.subr.mxu0 0.0
          %3308 = vmatpush1.msra.mxu0 %v3271
          %3309 = vmatprep.subr.mxu0 0.0
          %3310 = vmatpush1.msra.mxu0 %v3272
          %3311 = vmatprep.subr.mxu0 0.0
          %3312 = vmatpush1.msra.mxu0 %v3273
          %3313 = vmatprep.subr.mxu0 0.0
          %3314 = vmatpush1.msra.mxu0 0.0
          %3315 = vmatprep.subr.mxu0 0.0
          %3316 = vmatpush1.msra.mxu0 0.0
          %3317 = vmatprep.subr.mxu0 0.0
          %3318 = vmatpush1.msra.mxu0 0.0
          %3319 = vmatprep.subr.mxu0 0.0
          %3320 = vmatpush1.msra.mxu0 0.0
          %3321 = vmatprep.subr.mxu0 0.0
          %3322 = vmatpush1.msra.mxu0 0.0
          %3323 = vmatprep.subr.mxu0 0.0
          %3324 = vmatpush1.msra.mxu0 0.0
          %3325 = vmatprep.subr.mxu0 0.0
          %3326 = vmatpush1.msra.mxu0 0.0
          %3327 = vmatprep.subr.mxu0 0.0
          %3328 = vmatpush1.msra.mxu0 0.0
          %3329 = vmatprep.subr.mxu0 0.0
          %3330 = vmatpush1.msra.mxu0 0.0
          %3331 = vmatprep.subr.mxu0 0.0
          %3332 = vmatpush1.msra.mxu0 0.0
          %3333 = vmatprep.subr.mxu0 0.0
          %3334 = vmatpush1.msra.mxu0 0.0
          %3335 = vmatprep.subr.mxu0 0.0
          %3336 = vmatpush1.msra.mxu0 0.0
          %3337 = vmatprep.subr.mxu0 0.0
          %3338 = vmatpush1.msra.mxu0 0.0
          %3339 = vmatprep.subr.mxu0 0.0
          %3340 = vmatpush1.msra.mxu0 0.0
          %3341 = vmatprep.subr.mxu0 0.0
          %3342 = vmatpush1.msra.mxu0 0.0
          %3343 = vmatprep.subr.mxu0 0.0
          %3344 = vmatpush1.msra.mxu0 0.0
          %3345 = vmatprep.mubr.f32.mxu0 0.0
          %3346 = vmatmul.mubr.f32.gmra.mrb[0].mxu0 %v3257
          %v3347 = vpop.f32.mrb[0].mxu0
          %v3348 = vadd.f32 %v3279, %v3347
          %v3349 = vpop.f32.mrb[0].mxu0
          %3350 = vdwg.mxu0
          %3352 = vset.pattern.permute.xlu0 0
          %3353 = vperm.xlu0 %3352, %v3348
          %v3354 = vpop.permute.xlu0 %3353
          %v3356 = vmul.f32 %v2690, %v3354
          %3357 = vset.pattern.permute.xlu0 1
          %3358 = vperm.xlu0 %3357, %v3348
          %v3359 = vpop.permute.xlu0 %3358
          %v3361 = vmul.f32 %v2691, %v3359
          %v3362 = vadd.f32 %v3356, %v3361
          %3363 = vset.pattern.permute.xlu0 2
          %3364 = vperm.xlu0 %3363, %v3348
          %v3365 = vpop.permute.xlu0 %3364
          %v3367 = vmul.f32 %v2692, %v3365
          %v3368 = vadd.f32 %v3362, %v3367
          %v3369 = vld [vmem:[%s15] sm:$0xff]
          %v3370 = vld [vmem:[%s15 + $0x8] sm:$0xff]
          %v3371 = vld [vmem:[%s15 + $0x10] sm:$0xff]
          %v3372 = vld [vmem:[%s15 + $0x18] sm:$0xff]
          %v3373 = vld [vmem:[%s15 + $0x20] sm:$0xff]
          %v3374 = vld [vmem:[%s15 + $0x28] sm:$0xff]
          %v3375 = vld [vmem:[%s15 + $0x30] sm:$0xff]
          %v3376 = vld [vmem:[%s15 + $0x38] sm:$0xff]
          %v3377 = vld [vmem:[%s15 + $0x40] sm:$0xff]
          %v3378 = vld [vmem:[%s15 + $0x48] sm:$0xff]
          %v3379 = vld [vmem:[%s15 + $0x50] sm:$0xff]
          %v3380 = vld [vmem:[%s15 + $0x58] sm:$0xff]
          %v3381 = vld [vmem:[%s15 + $0x60] sm:$0xff]
          %v3382 = vld [vmem:[%s15 + $0x68] sm:$0xff]
          %v3383 = vld [vmem:[%s15 + $0x70] sm:$0xff]
          %v3384 = vld [vmem:[%s15 + $0x78] sm:$0xff]
          %v3385 = vld [vmem:[#allocation16] sm:$0x1]
          %v3387 = vlaneseq
          %v3388 = vshrl.u32 %v3387, 7
          %v3389 = vsub.s32 0, %v3388
          %v3390 = vrot.slane %v3385, %v3389
          %3392 = vmatprep.subr.mxu0 0.0
          %3393 = vmatpush1.msra.mxu0 %v3369
          %3394 = vmatprep.subr.mxu0 0.0
          %3395 = vmatpush1.msra.mxu0 %v3370
          %3396 = vmatprep.subr.mxu0 0.0
          %3397 = vmatpush1.msra.mxu0 %v3371
          %3398 = vmatprep.subr.mxu0 0.0
          %3399 = vmatpush1.msra.mxu0 %v3372
          %3400 = vmatprep.subr.mxu0 0.0
          %3401 = vmatpush1.msra.mxu0 %v3373
          %3402 = vmatprep.subr.mxu0 0.0
          %3403 = vmatpush1.msra.mxu0 %v3374
          %3404 = vmatprep.subr.mxu0 0.0
          %3405 = vmatpush1.msra.mxu0 %v3375
          %3406 = vmatprep.subr.mxu0 0.0
          %3407 = vmatpush1.msra.mxu0 %v3376
          %3408 = vmatprep.subr.mxu0 0.0
          %3409 = vmatpush1.msra.mxu0 %v3377
          %3410 = vmatprep.subr.mxu0 0.0
          %3411 = vmatpush1.msra.mxu0 %v3378
          %3412 = vmatprep.subr.mxu0 0.0
          %3413 = vmatpush1.msra.mxu0 %v3379
          %3414 = vmatprep.subr.mxu0 0.0
          %3415 = vmatpush1.msra.mxu0 %v3380
          %3416 = vmatprep.subr.mxu0 0.0
          %3417 = vmatpush1.msra.mxu0 %v3381
          %3418 = vmatprep.subr.mxu0 0.0
          %3419 = vmatpush1.msra.mxu0 %v3382
          %3420 = vmatprep.subr.mxu0 0.0
          %3421 = vmatpush1.msra.mxu0 %v3383
          %3422 = vmatprep.subr.mxu0 0.0
          %3423 = vmatpush1.msra.mxu0 %v3384
          %3424 = vmatprep.subr.mxu0 0.0
          %3425 = vmatpush1.msra.mxu0 0.0
          %3426 = vmatprep.subr.mxu0 0.0
          %3427 = vmatpush1.msra.mxu0 0.0
          %3428 = vmatprep.subr.mxu0 0.0
          %3429 = vmatpush1.msra.mxu0 0.0
          %3430 = vmatprep.subr.mxu0 0.0
          %3431 = vmatpush1.msra.mxu0 0.0
          %3432 = vmatprep.subr.mxu0 0.0
          %3433 = vmatpush1.msra.mxu0 0.0
          %3434 = vmatprep.subr.mxu0 0.0
          %3435 = vmatpush1.msra.mxu0 0.0
          %3436 = vmatprep.subr.mxu0 0.0
          %3437 = vmatpush1.msra.mxu0 0.0
          %3438 = vmatprep.subr.mxu0 0.0
          %3439 = vmatpush1.msra.mxu0 0.0
          %3440 = vmatprep.subr.mxu0 0.0
          %3441 = vmatpush1.msra.mxu0 0.0
          %3442 = vmatprep.subr.mxu0 0.0
          %3443 = vmatpush1.msra.mxu0 0.0
          %3444 = vmatprep.subr.mxu0 0.0
          %3445 = vmatpush1.msra.mxu0 0.0
          %3446 = vmatprep.subr.mxu0 0.0
          %3447 = vmatpush1.msra.mxu0 0.0
          %3448 = vmatprep.subr.mxu0 0.0
          %3449 = vmatpush1.msra.mxu0 0.0
          %3450 = vmatprep.subr.mxu0 0.0
          %3451 = vmatpush1.msra.mxu0 0.0
          %3452 = vmatprep.subr.mxu0 0.0
          %3453 = vmatpush1.msra.mxu0 0.0
          %3454 = vmatprep.subr.mxu0 0.0
          %3455 = vmatpush1.msra.mxu0 0.0
          %3456 = vmatprep.mubr.f32.mxu0 0.0
          %3457 = vmatmul.mubr.f32.gmra.mrb[0].mxu0 %v3368
          %v3458 = vpop.f32.mrb[0].mxu0
          %v3459 = vadd.f32 %v3390, %v3458
          %v3460 = vpop.f32.mrb[0].mxu0
          %3461 = vdwg.mxu0
          %v3462 = vld [vmem:[%s19] sm:$0x3f]
          %v3463 = vld [vmem:[#allocation6] sm:$0x1]
          %v3465 = vlaneseq
          %v3466 = vshrl.u32 %v3465, 7
          %v3467 = vsub.s32 0, %v3466
          %v3468 = vrot.slane %v3463, %v3467
          %vm3470 = vcmask 48128
          %v3472 = vsel %vm3470, %v3459, 0
          %vm3474 = vcmask 1045504
          %v3476 = vsel %vm3474, %v3462, 0
          %3478 = vmatprep.subr.mxu0 0.0
          %3479 = vmatpush1.msra.mxu0 %v3476
          %3480 = vmatprep.subr.mxu0 0.0
          %3481 = vmatpush1.msra.mxu0 0.0
          %3482 = vmatprep.subr.mxu0 0.0
          %3483 = vmatpush1.msra.mxu0 0.0
          %3484 = vmatprep.subr.mxu0 0.0
          %3485 = vmatpush1.msra.mxu0 0.0
          %3486 = vmatprep.subr.mxu0 0.0
          %3487 = vmatpush1.msra.mxu0 0.0
          %3488 = vmatprep.subr.mxu0 0.0
          %3489 = vmatpush1.msra.mxu0 0.0
          %3490 = vmatprep.subr.mxu0 0.0
          %3491 = vmatpush1.msra.mxu0 0.0
          %3492 = vmatprep.subr.mxu0 0.0
          %3493 = vmatpush1.msra.mxu0 0.0
          %3494 = vmatprep.subr.mxu0 0.0
          %3495 = vmatpush1.msra.mxu0 0.0
          %3496 = vmatprep.subr.mxu0 0.0
          %3497 = vmatpush1.msra.mxu0 0.0
          %3498 = vmatprep.subr.mxu0 0.0
          %3499 = vmatpush1.msra.mxu0 0.0
          %3500 = vmatprep.subr.mxu0 0.0
          %3501 = vmatpush1.msra.mxu0 0.0
          %3502 = vmatprep.subr.mxu0 0.0
          %3503 = vmatpush1.msra.mxu0 0.0
          %3504 = vmatprep.subr.mxu0 0.0
          %3505 = vmatpush1.msra.mxu0 0.0
          %3506 = vmatprep.subr.mxu0 0.0
          %3507 = vmatpush1.msra.mxu0 0.0
          %3508 = vmatprep.subr.mxu0 0.0
          %3509 = vmatpush1.msra.mxu0 0.0
          %3510 = vmatprep.subr.mxu0 0.0
          %3511 = vmatpush1.msra.mxu0 0.0
          %3512 = vmatprep.subr.mxu0 0.0
          %3513 = vmatpush1.msra.mxu0 0.0
          %3514 = vmatprep.subr.mxu0 0.0
          %3515 = vmatpush1.msra.mxu0 0.0
          %3516 = vmatprep.subr.mxu0 0.0
          %3517 = vmatpush1.msra.mxu0 0.0
          %3518 = vmatprep.subr.mxu0 0.0
          %3519 = vmatpush1.msra.mxu0 0.0
          %3520 = vmatprep.subr.mxu0 0.0
          %3521 = vmatpush1.msra.mxu0 0.0
          %3522 = vmatprep.subr.mxu0 0.0
          %3523 = vmatpush1.msra.mxu0 0.0
          %3524 = vmatprep.subr.mxu0 0.0
          %3525 = vmatpush1.msra.mxu0 0.0
          %3526 = vmatprep.subr.mxu0 0.0
          %3527 = vmatpush1.msra.mxu0 0.0
          %3528 = vmatprep.subr.mxu0 0.0
          %3529 = vmatpush1.msra.mxu0 0.0
          %3530 = vmatprep.subr.mxu0 0.0
          %3531 = vmatpush1.msra.mxu0 0.0
          %3532 = vmatprep.subr.mxu0 0.0
          %3533 = vmatpush1.msra.mxu0 0.0
          %3534 = vmatprep.subr.mxu0 0.0
          %3535 = vmatpush1.msra.mxu0 0.0
          %3536 = vmatprep.subr.mxu0 0.0
          %3537 = vmatpush1.msra.mxu0 0.0
          %3538 = vmatprep.subr.mxu0 0.0
          %3539 = vmatpush1.msra.mxu0 0.0
          %3540 = vmatprep.subr.mxu0 0.0
          %3541 = vmatpush1.msra.mxu0 0.0
          %3542 = vmatprep.mubr.f32.mxu0 0.0
          %3543 = vmatmul.mubr.f32.gmra.mrb[0].mxu0 %v3472
          %v3544 = vpop.f32.mrb[0].mxu0
          %v3545 = vadd.f32 %v3468, %v3544
          %v3546 = vpop.f32.mrb[0].mxu0
          %3547 = vdwg.mxu0
          %v3548 = vtanh.pop %v3545
          %v3549 = vld [vmem:[%s17] sm:$0xff]
          %v3550 = vld [vmem:[%s17 + $0x8] sm:$0xff]
          %v3551 = vld [vmem:[%s17 + $0x10] sm:$0xff]
          %v3552 = vld [vmem:[%s17 + $0x18] sm:$0xff]
          %v3553 = vld [vmem:[%s17 + $0x20] sm:$0xff]
          %v3554 = vld [vmem:[%s17 + $0x28] sm:$0xff]
          %v3555 = vld [vmem:[%s17 + $0x30] sm:$0xff]
          %v3556 = vld [vmem:[%s17 + $0x38] sm:$0xff]
          %v3557 = vld [vmem:[%s17 + $0x40] sm:$0xff]
          %v3558 = vld [vmem:[%s17 + $0x48] sm:$0xff]
          %v3559 = vld [vmem:[%s17 + $0x50] sm:$0xff]
          %v3560 = vld [vmem:[%s17 + $0x58] sm:$0xff]
          %v3561 = vld [vmem:[%s17 + $0x60] sm:$0xff]
          %v3562 = vld [vmem:[%s17 + $0x68] sm:$0xff]
          %v3563 = vld [vmem:[%s17 + $0x70] sm:$0xff]
          %v3564 = vld [vmem:[%s17 + $0x78] sm:$0xff]
          %v3565 = vld [vmem:[#allocation5] sm:$0x1]
          %v3567 = vlaneseq
          %v3568 = vshrl.u32 %v3567, 7
          %v3569 = vsub.s32 0, %v3568
          %v3570 = vrot.slane %v3565, %v3569
          %3572 = vmatprep.subr.mxu0 0.0
          %3573 = vmatpush1.msra.mxu0 %v3549
          %3574 = vmatprep.subr.mxu0 0.0
          %3575 = vmatpush1.msra.mxu0 %v3550
          %3576 = vmatprep.subr.mxu0 0.0
          %3577 = vmatpush1.msra.mxu0 %v3551
          %3578 = vmatprep.subr.mxu0 0.0
          %3579 = vmatpush1.msra.mxu0 %v3552
          %3580 = vmatprep.subr.mxu0 0.0
          %3581 = vmatpush1.msra.mxu0 %v3553
          %3582 = vmatprep.subr.mxu0 0.0
          %3583 = vmatpush1.msra.mxu0 %v3554
          %3584 = vmatprep.subr.mxu0 0.0
          %3585 = vmatpush1.msra.mxu0 %v3555
          %3586 = vmatprep.subr.mxu0 0.0
          %3587 = vmatpush1.msra.mxu0 %v3556
          %3588 = vmatprep.subr.mxu0 0.0
          %3589 = vmatpush1.msra.mxu0 %v3557
          %3590 = vmatprep.subr.mxu0 0.0
          %3591 = vmatpush1.msra.mxu0 %v3558
          %3592 = vmatprep.subr.mxu0 0.0
          %3593 = vmatpush1.msra.mxu0 %v3559
          %3594 = vmatprep.subr.mxu0 0.0
          %3595 = vmatpush1.msra.mxu0 %v3560
          %3596 = vmatprep.subr.mxu0 0.0
          %3597 = vmatpush1.msra.mxu0 %v3561
          %3598 = vmatprep.subr.mxu0 0.0
          %3599 = vmatpush1.msra.mxu0 %v3562
          %3600 = vmatprep.subr.mxu0 0.0
          %3601 = vmatpush1.msra.mxu0 %v3563
          %3602 = vmatprep.subr.mxu0 0.0
          %3603 = vmatpush1.msra.mxu0 %v3564
          %3604 = vmatprep.subr.mxu0 0.0
          %3605 = vmatpush1.msra.mxu0 0.0
          %3606 = vmatprep.subr.mxu0 0.0
          %3607 = vmatpush1.msra.mxu0 0.0
          %3608 = vmatprep.subr.mxu0 0.0
          %3609 = vmatpush1.msra.mxu0 0.0
          %3610 = vmatprep.subr.mxu0 0.0
          %3611 = vmatpush1.msra.mxu0 0.0
          %3612 = vmatprep.subr.mxu0 0.0
          %3613 = vmatpush1.msra.mxu0 0.0
          %3614 = vmatprep.subr.mxu0 0.0
          %3615 = vmatpush1.msra.mxu0 0.0
          %3616 = vmatprep.subr.mxu0 0.0
          %3617 = vmatpush1.msra.mxu0 0.0
          %3618 = vmatprep.subr.mxu0 0.0
          %3619 = vmatpush1.msra.mxu0 0.0
          %3620 = vmatprep.subr.mxu0 0.0
          %3621 = vmatpush1.msra.mxu0 0.0
          %3622 = vmatprep.subr.mxu0 0.0
          %3623 = vmatpush1.msra.mxu0 0.0
          %3624 = vmatprep.subr.mxu0 0.0
          %3625 = vmatpush1.msra.mxu0 0.0
          %3626 = vmatprep.subr.mxu0 0.0
          %3627 = vmatpush1.msra.mxu0 0.0
          %3628 = vmatprep.subr.mxu0 0.0
          %3629 = vmatpush1.msra.mxu0 0.0
          %3630 = vmatprep.subr.mxu0 0.0
          %3631 = vmatpush1.msra.mxu0 0.0
          %3632 = vmatprep.subr.mxu0 0.0
          %3633 = vmatpush1.msra.mxu0 0.0
          %3634 = vmatprep.subr.mxu0 0.0
          %3635 = vmatpush1.msra.mxu0 0.0
          %3636 = vmatprep.mubr.f32.mxu0 0.0
          %3637 = vmatmul.mubr.f32.gmra.mrb[0].mxu0 %v3368
          %v3638 = vpop.f32.mrb[0].mxu0
          %v3639 = vadd.f32 %v3570, %v3638
          %v3640 = vpop.f32.mrb[0].mxu0
          %3641 = vdwg.mxu0
          %3643 = vrot.lane.b32.xlu0 %v3639, 1
          %v3644 = vpop.permute.xlu0 %3643
          %vm3646 = vcmask 7168
          %v3647 = vsel %vm3646, %v3548, %v3644
          %v3648 = vld [vmem:[%s21] sm:$0x3]
          %v3649 = vld [vmem:[#allocation7] sm:$0x1]
          %v3651 = vlaneseq
          %v3652 = vshrl.u32 %v3651, 7
          %v3653 = vsub.s32 0, %v3652
          %v3654 = vrot.slane %v3649, %v3653
          %vm3656 = vcmask 15360
          %v3658 = vsel %vm3656, %v3647, 0
          %vm3660 = vcmask 1041408
          %v3662 = vsel %vm3660, %v3648, 0
          %3664 = vmatprep.subr.mxu0 0.0
          %3665 = vmatpush1.msra.mxu0 %v3662
          %3666 = vmatprep.subr.mxu0 0.0
          %3667 = vmatpush1.msra.mxu0 0.0
          %3668 = vmatprep.subr.mxu0 0.0
          %3669 = vmatpush1.msra.mxu0 0.0
          %3670 = vmatprep.subr.mxu0 0.0
          %3671 = vmatpush1.msra.mxu0 0.0
          %3672 = vmatprep.subr.mxu0 0.0
          %3673 = vmatpush1.msra.mxu0 0.0
          %3674 = vmatprep.subr.mxu0 0.0
          %3675 = vmatpush1.msra.mxu0 0.0
          %3676 = vmatprep.subr.mxu0 0.0
          %3677 = vmatpush1.msra.mxu0 0.0
          %3678 = vmatprep.subr.mxu0 0.0
          %3679 = vmatpush1.msra.mxu0 0.0
          %3680 = vmatprep.subr.mxu0 0.0
          %3681 = vmatpush1.msra.mxu0 0.0
          %3682 = vmatprep.subr.mxu0 0.0
          %3683 = vmatpush1.msra.mxu0 0.0
          %3684 = vmatprep.subr.mxu0 0.0
          %3685 = vmatpush1.msra.mxu0 0.0
          %3686 = vmatprep.subr.mxu0 0.0
          %3687 = vmatpush1.msra.mxu0 0.0
          %3688 = vmatprep.subr.mxu0 0.0
          %3689 = vmatpush1.msra.mxu0 0.0
          %3690 = vmatprep.subr.mxu0 0.0
          %3691 = vmatpush1.msra.mxu0 0.0
          %3692 = vmatprep.subr.mxu0 0.0
          %3693 = vmatpush1.msra.mxu0 0.0
          %3694 = vmatprep.subr.mxu0 0.0
          %3695 = vmatpush1.msra.mxu0 0.0
          %3696 = vmatprep.subr.mxu0 0.0
          %3697 = vmatpush1.msra.mxu0 0.0
          %3698 = vmatprep.subr.mxu0 0.0
          %3699 = vmatpush1.msra.mxu0 0.0
          %3700 = vmatprep.subr.mxu0 0.0
          %3701 = vmatpush1.msra.mxu0 0.0
          %3702 = vmatprep.subr.mxu0 0.0
          %3703 = vmatpush1.msra.mxu0 0.0
          %3704 = vmatprep.subr.mxu0 0.0
          %3705 = vmatpush1.msra.mxu0 0.0
          %3706 = vmatprep.subr.mxu0 0.0
          %3707 = vmatpush1.msra.mxu0 0.0
          %3708 = vmatprep.subr.mxu0 0.0
          %3709 = vmatpush1.msra.mxu0 0.0
          %3710 = vmatprep.subr.mxu0 0.0
          %3711 = vmatpush1.msra.mxu0 0.0
          %3712 = vmatprep.subr.mxu0 0.0
          %3713 = vmatpush1.msra.mxu0 0.0
          %3714 = vmatprep.subr.mxu0 0.0
          %3715 = vmatpush1.msra.mxu0 0.0
          %3716 = vmatprep.subr.mxu0 0.0
          %3717 = vmatpush1.msra.mxu0 0.0
          %3718 = vmatprep.subr.mxu0 0.0
          %3719 = vmatpush1.msra.mxu0 0.0
          %3720 = vmatprep.subr.mxu0 0.0
          %3721 = vmatpush1.msra.mxu0 0.0
          %3722 = vmatprep.subr.mxu0 0.0
          %3723 = vmatpush1.msra.mxu0 0.0
          %3724 = vmatprep.subr.mxu0 0.0
          %3725 = vmatpush1.msra.mxu0 0.0
          %3726 = vmatprep.subr.mxu0 0.0
          %3727 = vmatpush1.msra.mxu0 0.0
          %3728 = vmatprep.mubr.f32.mxu0 0.0
          %3729 = vmatmul.mubr.f32.gmra.mrb[0].mxu0 %v3658
          %v3730 = vpop.f32.mrb[0].mxu0
          %v3731 = vadd.f32 %v3654, %v3730
          %v3732 = vpop.f32.mrb[0].mxu0
          %3733 = vdwg.mxu0
          %3735 = vrot.lane.b32.xlu0 %v3731, 6
          %v3736 = vpop.permute.xlu0 %3735
          %v3738 = vsel %vm3470, %v3459, %v3736
          %vm3739 = vcmask 56320
          %v3740 = vsel %vm3739, %v3738, 0.0
          %3741 = vst [vmem:[%s23] sm:$0xff] %v3368
          %3742 = vst [vmem:[%s23 + $0x8] sm:$0xff] %v3740
        $region140: #{adapter_classification_forward.1} parent=107 // pred_fallthru
          _
        // Predicated region
        $region141: #{adapter_classification_forward.1} parent=107 // pred_check
          %p3743 = pneg %p532
        $region142: #{adapter_classification_forward.1} parent=107 // pred_check_branch
          %3745 = sbr.rel (%p3743) target = $region144
        $region143: #{adapter_classification_forward.1} parent=107 // pred_region
          _
        $region144: #{adapter_classification_forward.1} parent=107 // pred_fallthru
          _
        // Predicated region
        $region145: #{adapter_classification_forward.1} parent=107 // pred_check
          %p3746 = pneg %p532
        $region146: #{adapter_classification_forward.1} parent=107 // pred_check_branch
          %3748 = sbr.rel (%p3746) target = $region148
        $region147: #{adapter_classification_forward.1} parent=107 // pred_region
          _
        $region148: #{adapter_classification_forward.1} parent=107 // pred_fallthru
          _
      $region108: #{adapter_classification_forward.1} parent=5 // pred_fallthru
        _
      %p3749 = scmp.le.s32.totalorder 2, %s45
      // Predicated region
      $region149: #{adapter_classification_forward.1} parent=5 // pred_check
        %p3750 = pneg %p3749
      $region150: #{adapter_classification_forward.1} parent=5 // pred_check_branch
        %3752 = sbr.rel (%p3750) target = $region152
      $region151: #{adapter_classification_forward.1} parent=5 // pred_region
        %s3753 = ssub.s32 %s45, 2
      $region152: #{adapter_classification_forward.1} parent=5 // pred_fallthru
        _
    $region6: #{adapter_classification_forward.1} parent=1 // loop_footer
      %s49 = sadd.s32 1, %s45
    $region7: #{adapter_classification_forward.1} parent=1 // loop_footer_branch
      %44 = sbr.rel target = $region3
    $region8: #{adapter_classification_forward.1} parent=1 // loop_exit
      _
    %3754 = vsyncpa [#allocation9], 1
    %s3755 = scalar_lea.sflag [#allocation9], 1
    %3756 = vsyncpa %s3755, 1
    %3757 = vsyncpa [#allocation11], 1
    %3758 = vsyncpa [#allocation14], 1
    %3759 = vsyncpa [#allocation17], 1

</llo_original>
